<compile_context>
chip_gen: v5e
topology: v5e:2x2
jax: 0.10.0
libtpu: 0.0.40
codegen_flags: <defaults>
</compile_context>

<pallas_src>
import functools
import math

import jax
import jax.numpy as jnp
from jax import lax
from jax.experimental import pallas as pl
from jax.experimental.pallas import tpu as pltpu


# --------------------------------------------------------------------------
# in-kernel helpers
# --------------------------------------------------------------------------
def _layernorm_f32(v, eps):
    """LayerNorm (no affine), statistics in f32."""
    mu = jnp.mean(v, axis=-1, keepdims=True)
    var = jnp.mean((v - mu) ** 2, axis=-1, keepdims=True)
    return (v - mu) * lax.rsqrt(var + eps)


def _matmul(x_f32, w_ref, b_ref):
    """x @ W + b: activation cast to the weight dtype (bf16 weights -> native
    MXU rate), accumulation always f32."""
    w = w_ref[...]
    y = jnp.dot(x_f32.astype(w.dtype), w, preferred_element_type=jnp.float32)
    return y + b_ref[...].astype(jnp.float32)


# --------------------------------------------------------------------------
# Kernel A: adaLN + LN1 + modulate + QKV (head-layout outputs)
# --------------------------------------------------------------------------
def _qkv_kernel(num_heads, eps,
                x_ref, c_ref, wada_ref, bada_ref, wqkv_ref, bqkv_ref,
                q_ref, kt_ref, vt_ref, ada_ref):
    x = x_ref[...].astype(jnp.float32)
    c = c_ref[...].astype(jnp.float32)
    TN, D = x.shape
    H = num_heads
    hd = D // H

    # adaLN: Linear(SiLU(c)) -> (TN, 6D), f32 accumulate.
    c_act = c * jax.nn.sigmoid(c)
    ada = _matmul(c_act, wada_ref, bada_ref)

    shift_msa = ada[:, 0 * D:1 * D]
    scale_msa = ada[:, 1 * D:2 * D]
    # Only the 4 slices kernel B needs cross HBM, in the activation dtype.
    ada_ref[...] = ada[:, 2 * D:6 * D].astype(ada_ref.dtype)

    h = (_layernorm_f32(x, eps) * (1.0 + scale_msa) + shift_msa).astype(wqkv_ref.dtype)

    def head_major(y):                       # (TN, D) -> (H, hd, TN)
        # 2-D transpose + leading-dim split (free when hd % 8 == 0).
        return y.T.reshape(H, hd, TN)

    # Three dots against static column slices of the qkv weight Ref.
    q = jnp.dot(h, wqkv_ref[:, 0 * D:1 * D], preferred_element_type=jnp.float32)
    q = (q + bqkv_ref[:, 0 * D:1 * D].astype(jnp.float32)) * (1.0 / math.sqrt(hd))
    q_ref[...] = jnp.transpose(head_major(q), (0, 2, 1)).astype(q_ref.dtype)   # (H, TN, hd)

    k = jnp.dot(h, wqkv_ref[:, 1 * D:2 * D], preferred_element_type=jnp.float32)
    k = k + bqkv_ref[:, 1 * D:2 * D].astype(jnp.float32)
    kt_ref[...] = head_major(k).astype(kt_ref.dtype)                           # (H, hd, TN)

    v = jnp.dot(h, wqkv_ref[:, 2 * D:3 * D], preferred_element_type=jnp.float32)
    v = v + bqkv_ref[:, 2 * D:3 * D].astype(jnp.float32)
    vt_ref[...] = head_major(v).astype(vt_ref.dtype)                           # (H, hd, TN)


# --------------------------------------------------------------------------
# Kernel B: kv-tiled online-softmax attention + proj + LN2 + MLP + residuals
# --------------------------------------------------------------------------
def _attn_mlp_kernel(num_heads, eps, exp_bf16,
                     x_ref, ada_ref, q_ref, kt_ref, vt_ref,
                     wproj_ref, bproj_ref, wfc1_ref, bfc1_ref, wfc2_ref, bfc2_ref,
                     o_ref, m_sc, l_sc, acc_sc, om_sc):
    j = pl.program_id(1)

    @pl.when(j == 0)
    def _():
        m_sc[...] = jnp.full(m_sc.shape, -jnp.inf, m_sc.dtype)
        l_sc[...] = jnp.zeros(l_sc.shape, l_sc.dtype)
        acc_sc[...] = jnp.zeros(acc_sc.shape, acc_sc.dtype)

    # ---- online-softmax over the current kv tile ----
    qh = q_ref[...]            # (H, TN, hd), already * 1/sqrt(hd)
    kt = kt_ref[...]           # (H, hd, TK)
    s = jnp.einsum("hqd,hdk->hqk", qh, kt, preferred_element_type=jnp.float32)

    m_prev = m_sc[...]
    m_new = jnp.maximum(m_prev, jnp.max(s, axis=-1, keepdims=True))
    alpha = jnp.exp(m_prev - m_new)
    p = jnp.exp((s - m_new).astype(jnp.bfloat16 if exp_bf16 else jnp.float32))
    l_sc[...] = alpha * l_sc[...] + jnp.sum(p.astype(jnp.float32), axis=-1, keepdims=True)
    vt = vt_ref[...]           # (H, hd, TK)
    acc_sc[...] = alpha * acc_sc[...] + jnp.einsum(
        "hqk,hdk->hqd", p.astype(vt.dtype), vt, preferred_element_type=jnp.float32)
    m_sc[...] = m_new

    # ---- last kv tile: finalize attention, proj, LN2/modulate, MLP ----
    @pl.when(j == pl.num_programs(1) - 1)
    def _():
        x = x_ref[...].astype(jnp.float32)      # (TN, D)
        TN, D = x.shape
        H = num_heads
        hd = D // H

        gate_msa = ada_ref[:, 0 * D:1 * D].astype(jnp.float32)
        shift_mlp = ada_ref[:, 1 * D:2 * D].astype(jnp.float32)
        scale_mlp = ada_ref[:, 2 * D:3 * D].astype(jnp.float32)
        gate_mlp = ada_ref[:, 3 * D:4 * D].astype(jnp.float32)

        # Exact softmax normalization + head merge into a (TN, D) scratch,
        # then ONE dense (TN,D)x(D,D) projection (full-depth MXU contraction).
        inv_l = 1.0 / l_sc[...]                 # (H, TN, 1), f32 exact
        for hh in range(H):
            om_sc[:, hh * hd:(hh + 1) * hd] = acc_sc[hh] * inv_l[hh]

        attn = _matmul(om_sc[...], wproj_ref, bproj_ref)
        x = x + gate_msa * attn

        h2 = _layernorm_f32(x, eps) * (1.0 + scale_mlp) + shift_mlp
        z = _matmul(h2, wfc1_ref, bfc1_ref)
        z = 0.5 * z * (1.0 + lax.erf(z * (1.0 / math.sqrt(2.0))))   # exact nn.GELU()
        z = _matmul(z, wfc2_ref, bfc2_ref)
        x = x + gate_mlp * z

        o_ref[...] = x.astype(o_ref.dtype)


# --------------------------------------------------------------------------
# wrapper helpers
# --------------------------------------------------------------------------
_SINGLE_BUFFER_OK = None


def _supports_single_buffered_residents():
    """Feature-probe: can constant-index (resident) blocks be single-buffered
    via pipeline_mode=pl.Buffered(1)?  Falls back to default double buffering."""
    global _SINGLE_BUFFER_OK
    if _SINGLE_BUFFER_OK is not None:
        return _SINGLE_BUFFER_OK
    ok = False
    if hasattr(pl, "Buffered"):
        try:
            def body(w_ref, x_ref, o_ref):
                @pl.when(pl.program_id(1) == pl.num_programs(1) - 1)
                def _():
                    o_ref[...] = x_ref[...] + w_ref[...]

            xp = jnp.arange(16 * 128, dtype=jnp.float32).reshape(16, 128)
            wp = jnp.ones((8, 128), jnp.float32)
            out = pl.pallas_call(
                body,
                grid=(2, 2),
                in_specs=[
                    pl.BlockSpec((8, 128), lambda i, j: (0, 0),
                                 pipeline_mode=pl.Buffered(1)),
                    pl.BlockSpec((8, 128), lambda i, j: (i, 0)),
                ],
                out_specs=pl.BlockSpec((8, 128), lambda i, j: (i, 0)),
                out_shape=jax.ShapeDtypeStruct((16, 128), jnp.float32),
            )(wp, xp)
            ok = bool(jnp.allclose(out, xp + 1.0))
        except Exception:
            ok = False
    _SINGLE_BUFFER_OK = ok
    return ok


def _vmem_cap_bytes():
    """Physical VMEM minus headroom for Mosaic internal scratch/semaphores."""
    try:
        phys = int(pltpu.get_tpu_info().vmem_capacity_bytes)
    except Exception:
        phys = 64 << 20            # conservative: v7x per-TC VMEM
    return phys - (8 << 20)


def _vmem_limit(need, cap):
    # Floor at 32 MiB so v5e's 16 MiB default scoped limit is always raised
    # when needed; never exceed physical-minus-headroom.
    return int(min(max(int(need), 32 << 20), cap))


def _choose_tile(n, want):
    """Largest multiple of 128 that divides n and is <= want; whole n otherwise."""
    if want >= n or n % 128 != 0:
        return n
    t = max(128, (min(want, n) // 128) * 128)
    while t >= 128:
        if n % t == 0:
            return t
        t -= 128
    return n


# --------------------------------------------------------------------------
# wrapper
# --------------------------------------------------------------------------
def dit_block(x, c, params, num_heads, eps=1e-4, tile_n=256, tile_k=512):
    """Forward pass of DiTblock.  x, c: (N, D).  Weights pre-transposed to
    (in_dim, out_dim); biases (1, out_dim).  eps=1e-4 matches
    nn.LayerNorm(..., eps=0.0001)."""
    N, D = x.shape
    H = num_heads
    assert D % H == 0, "feature_dim must be divisible by num_heads"
    hd = D // H
    assert hd % 8 == 0, "head_dim must be a multiple of 8 for the in-kernel head relayout"
    Dh = params["w_fc1"].shape[1]

    a_it = jnp.dtype(x.dtype).itemsize
    w_it = jnp.dtype(params["w_qkv"].dtype).itemsize
    single = _supports_single_buffered_residents()
    wfac = 1 if single else 2
    cap = _vmem_cap_bytes()
    exp_bf16 = bool(x.dtype == jnp.bfloat16)

    # ---- generation-aware tiles: shrink until the VMEM estimate fits ----
    tn = _choose_tile(N, tile_n)
    tk = _choose_tile(N, tile_k)

    def _pad128(v):
        return -(-v // 128) * 128

    def est_b(tn_, tk_):
        weights = (D * D + D + D * Dh + Dh + Dh * D + D) * w_it * wfac
        tiles = 2 * a_it * (tn_ * D + tn_ * 4 * D + tn_ * D + tn_ * D)   # x, ada, q, out
        kv = 2 * a_it * (2 * H * hd * tk_)                               # streamed K^T/V^T
        scratch = 4 * (2 * H * tn_ * 128 + H * tn_ * _pad128(hd) + tn_ * D)
        live = 4 * (H * tn_ * tk_ + tn_ * Dh + 4 * tn_ * D)              # scores + MLP f32
        return weights + tiles + kv + scratch + live + (2 << 20)

    for _ in range(16):
        if est_b(tn, tk) <= cap:
            break
        if tk > 128:
            tk = _choose_tile(N, tk - 128)
        elif tn > 128:
            tn = _choose_tile(N, tn - 128)
        else:
            break
    # TODO(synk): pad ragged N (N % 128 != 0 currently falls back to one whole-N tile).

    def est_a(tn_):
        weights = (9 * D * D + 9 * D) * w_it * wfac
        tiles = 2 * a_it * (2 * tn_ * D)
        outs = 2 * a_it * (3 * tn_ * D + tn_ * 4 * D)
        live = 4 * tn_ * 12 * D
        return weights + tiles + outs + live + (2 << 20)

    def resident(shape, grid_rank):
        zeros = (0,) * len(shape)
        imap = (lambda i: zeros) if grid_rank == 1 else (lambda i, j: zeros)
        if single:
            return pl.BlockSpec(shape, imap, pipeline_mode=pl.Buffered(1))
        return pl.BlockSpec(shape, imap)

    # ---------- kernel A: adaLN + LN1 + modulate + QKV ----------
    grid_a = (N // tn,)
    q, kt, vt, ada4 = pl.pallas_call(
        functools.partial(_qkv_kernel, H, eps),
        grid=grid_a,
        in_specs=[
            pl.BlockSpec((tn, D), lambda i: (i, 0)),            # x
            pl.BlockSpec((tn, D), lambda i: (i, 0)),            # c
            resident((D, 6 * D), 1), resident((1, 6 * D), 1),   # adaLN linear
            resident((D, 3 * D), 1), resident((1, 3 * D), 1),   # qkv linear
        ],
        out_specs=(
            pl.BlockSpec((H, tn, hd), lambda i: (0, i, 0)),     # q heads (scaled)
            pl.BlockSpec((H, hd, tn), lambda i: (0, 0, i)),     # k^T heads
            pl.BlockSpec((H, hd, tn), lambda i: (0, 0, i)),     # v^T heads
            pl.BlockSpec((tn, 4 * D), lambda i: (i, 0)),        # adaLN slices for kernel B
        ),
        out_shape=(
            jax.ShapeDtypeStruct((H, N, hd), x.dtype),
            jax.ShapeDtypeStruct((H, hd, N), x.dtype),
            jax.ShapeDtypeStruct((H, hd, N), x.dtype),
            jax.ShapeDtypeStruct((N, 4 * D), x.dtype),
        ),
        compiler_params=pltpu.CompilerParams(
            dimension_semantics=("parallel",),
            vmem_limit_bytes=_vmem_limit(est_a(tn), cap)),
    )(x, c, params["w_ada"], params["b_ada"], params["w_qkv"], params["b_qkv"])

    # ---------- kernel B: kv-tiled attention + proj + MLP ----------
    grid_b = (N // tn, N // tk)
    out = pl.pallas_call(
        functools.partial(_attn_mlp_kernel, H, eps, exp_bf16),
        grid=grid_b,
        in_specs=[
            pl.BlockSpec((tn, D), lambda i, j: (i, 0)),          # x
            pl.BlockSpec((tn, 4 * D), lambda i, j: (i, 0)),      # adaLN slices
            pl.BlockSpec((H, tn, hd), lambda i, j: (0, i, 0)),   # q heads
            pl.BlockSpec((H, hd, tk), lambda i, j: (0, 0, j)),   # k^T (streamed)
            pl.BlockSpec((H, hd, tk), lambda i, j: (0, 0, j)),   # v^T (streamed)
            resident((D, D), 2), resident((1, D), 2),            # proj
            resident((D, Dh), 2), resident((1, Dh), 2),          # fc1
            resident((Dh, D), 2), resident((1, D), 2),           # fc2
        ],
        out_specs=pl.BlockSpec((tn, D), lambda i, j: (i, 0)),
        out_shape=jax.ShapeDtypeStruct((N, D), x.dtype),
        scratch_shapes=[
            pltpu.VMEM((H, tn, 1), jnp.float32),     # running max
            pltpu.VMEM((H, tn, 1), jnp.float32),     # running sum
            pltpu.VMEM((H, tn, hd), jnp.float32),    # running PV accumulator
            pltpu.VMEM((tn, D), jnp.float32),        # merged heads
        ],
        compiler_params=pltpu.CompilerParams(
            dimension_semantics=("parallel", "arbitrary"),
            vmem_limit_bytes=_vmem_limit(est_b(tn, tk), cap)),
    )(x, ada4, q, kt, vt,
      params["w_proj"], params["b_proj"],
      params["w_fc1"], params["b_fc1"],
      params["w_fc2"], params["b_fc2"])
    return out


# ---------------- pure-JAX reference (for correctness check) ----------------
def dit_block_ref(x, c, params, num_heads, eps=1e-4):
    N, D = x.shape
    H = num_heads
    hd = D // H
    scale = 1.0 / math.sqrt(hd)

    c_act = c * jax.nn.sigmoid(c)
    ada = c_act @ params["w_ada"] + params["b_ada"]
    shift_msa, scale_msa, gate_msa, shift_mlp, scale_mlp, gate_mlp = jnp.split(ada, 6, axis=1)

    def ln(v):
        mu = jnp.mean(v, axis=-1, keepdims=True)
        var = jnp.mean((v - mu) ** 2, axis=-1, keepdims=True)
        return (v - mu) / jnp.sqrt(var + eps)

    h = ln(x) * (1.0 + scale_msa) + shift_msa
    qkv = h @ params["w_qkv"] + params["b_qkv"]
    q, k, v = jnp.split(qkv, 3, axis=1)
    q = q.reshape(N, H, hd).transpose(1, 0, 2)
    k = k.reshape(N, H, hd).transpose(1, 0, 2)
    v = v.reshape(N, H, hd).transpose(1, 0, 2)
    s = jnp.einsum("hnd,hmd->hnm", q, k) * scale
    p = jax.nn.softmax(s, axis=-1)
    o = jnp.einsum("hnm,hmd->hnd", p, v).transpose(1, 0, 2).reshape(N, D)
    o = o @ params["w_proj"] + params["b_proj"]
    x = x + gate_msa * o

    h2 = ln(x) * (1.0 + scale_mlp) + shift_mlp
    z = h2 @ params["w_fc1"] + params["b_fc1"]
    z = 0.5 * z * (1.0 + lax.erf(z / jnp.sqrt(2.0)))
    z = z @ params["w_fc2"] + params["b_fc2"]
    return x + gate_mlp * z


def init_params(key, feature_dim, mlp_ratio=4.0):
    D = feature_dim
    Dh = int(D * mlp_ratio)
    ks = jax.random.split(key, 6)
    s = 0.02
    return {
        # all weights stored (in_dim, out_dim); biases stored (1, out_dim)
        "w_ada": s * jax.random.normal(ks[0], (D, 6 * D), jnp.float32),
        "b_ada": s * jax.random.normal(ks[1], (1, 6 * D), jnp.float32),
        "w_qkv": s * jax.random.normal(ks[2], (D, 3 * D), jnp.float32),
        "b_qkv": s * jax.random.normal(ks[3], (1, 3 * D), jnp.float32),
        "w_proj": s * jax.random.normal(ks[4], (D, D), jnp.float32),
        "b_proj": jnp.zeros((1, D), jnp.float32),
        "w_fc1": s * jax.random.normal(ks[5], (D, Dh), jnp.float32),
        "b_fc1": jnp.zeros((1, Dh), jnp.float32),
        "w_fc2": s * jax.random.normal(jax.random.fold_in(key, 7), (Dh, D), jnp.float32),
        "b_fc2": jnp.zeros((1, D), jnp.float32),
    }


if __name__ == "__main__":
    # Dropout layers in the reference module default to p=0 (identity) and are
    # therefore omitted.

    # ---- test 1: f32, 2 token tiles x 2 kv tiles (exercises online softmax) ----
    N, D, HEADS = 256, 128, 8
    key = jax.random.PRNGKey(0)
    kx, kc, kp = jax.random.split(key, 3)
    x = jax.random.normal(kx, (N, D), jnp.float32)
    c = jax.random.normal(kc, (N, D), jnp.float32)
    params = init_params(kp, D, 4.0)

    out = jax.block_until_ready(dit_block(x, c, params, HEADS, tile_n=128, tile_k=128))
    ref = jax.block_until_ready(dit_block_ref(x, c, params, HEADS))
    assert out.shape == (N, D)
    err = float(jnp.max(jnp.abs(out - ref)))
    assert jnp.allclose(out, ref, rtol=5e-3, atol=5e-3), f"f32 mismatch, max err {err}"

    # ---- test 2: bf16 weights/activations (MXU-native path) ----
    N2, D2, H2 = 256, 256, 8
    kx2, kc2, kp2 = jax.random.split(jax.random.PRNGKey(1), 3)
    x2 = jax.random.normal(kx2, (N2, D2), jnp.float32).astype(jnp.bfloat16)
    c2 = jax.random.normal(kc2, (N2, D2), jnp.float32).astype(jnp.bfloat16)
    p2_bf16 = jax.tree_util.tree_map(lambda a: a.astype(jnp.bfloat16),
                                     init_params(kp2, D2, 4.0))

    out2 = jax.block_until_ready(dit_block(x2, c2, p2_bf16, H2, tile_n=128, tile_k=128))
    ref2 = dit_block_ref(
        x2.astype(jnp.float32), c2.astype(jnp.float32),
        jax.tree_util.tree_map(lambda a: a.astype(jnp.float32), p2_bf16), H2)
    err2 = float(jnp.max(jnp.abs(out2.astype(jnp.float32) - ref2)))
    assert out2.shape == (N2, D2) and err2 < 0.25, f"bf16 mismatch, max err {err2}"

    print("KERNEL_OK")
</pallas_src>

<mosaic_0001>
module attributes {stable_mosaic.version = 11 : i64} {
  func.func @body(%arg0: i32, %arg1: i32, %arg2: memref<8x128xf32, #tpu.memory_space<vmem>>, %arg3: memref<8x128xf32, #tpu.memory_space<vmem>>, %arg4: memref<8x128xf32, #tpu.memory_space<vmem>>) attributes {dimension_semantics = [#tpu.dimension_semantics<arbitrary>, #tpu.dimension_semantics<arbitrary>], iteration_bounds = array<i64: 2, 2>, scalar_prefetch = 0 : i64, scratch_operands = 0 : i64, tpu.core_type = #tpu.core_type<tc>, window_params = [{pipeline_mode = #tpu.pipeline_mode<synchronous>, transform_indices = @transform_0, window_bounds = array<i64: 8, 128>}, {transform_indices = @transform_1, window_bounds = array<i64: 8, 128>}, {transform_indices = @transform_2, window_bounds = array<i64: 8, 128>}]} {
    %c1_i32 = arith.constant 1 : i32
    %0 = arith.cmpi eq, %arg1, %c1_i32 : i32
    %1 = arith.extui %0 : i1 to i32
    %c0_i32 = arith.constant 0 : i32
    %2 = arith.cmpi ne, %1, %c0_i32 : i32
    scf.if %2 {
      %c0 = arith.constant 0 : index
      %c0_0 = arith.constant 0 : index
      %3 = vector.load %arg3[%c0, %c0_0] : memref<8x128xf32, #tpu.memory_space<vmem>>, vector<8x128xf32>
      %c0_1 = arith.constant 0 : index
      %c0_2 = arith.constant 0 : index
      %4 = vector.load %arg2[%c0_1, %c0_2] : memref<8x128xf32, #tpu.memory_space<vmem>>, vector<8x128xf32>
      %5 = arith.addf %3, %4 : vector<8x128xf32>
      %c0_3 = arith.constant 0 : index
      %c0_4 = arith.constant 0 : index
      %6 = vector.load %arg4[%c0_3, %c0_4] : memref<8x128xf32, #tpu.memory_space<vmem>>, vector<8x128xf32>
      tpu.vector_store %arg4[%c0_3, %c0_4], %5 {strides = array<i32>} : memref<8x128xf32, #tpu.memory_space<vmem>>, vector<8x128xf32>,
    } else {
    }
    return
  }
  func.func @transform_0(%arg0: i32, %arg1: i32) -> (i32, i32) {
    %c0_i32 = arith.constant 0 : i32
    %c0_i32_0 = arith.constant 0 : i32
    %c0_i32_1 = arith.constant 0 : i32
    return %c0_i32, %c0_i32_0 : i32, i32
  }
  func.func @transform_1(%arg0: i32, %arg1: i32) -> (i32, i32) {
    %c0_i32 = arith.constant 0 : i32
    %c0_i32_0 = arith.constant 0 : i32
    return %arg0, %c0_i32 : i32, i32
  }
  func.func @transform_2(%arg0: i32, %arg1: i32) -> (i32, i32) {
    %c0_i32 = arith.constant 0 : i32
    %c0_i32_0 = arith.constant 0 : i32
    return %arg0, %c0_i32 : i32, i32
  }
}

module attributes {stable_mosaic.version = 11 : i64} {
  func.func @_qkv_kernel(%arg0: i32, %arg1: memref<128x128xf32, #tpu.memory_space<vmem>>, %arg2: memref<128x128xf32, #tpu.memory_space<vmem>>, %arg3: memref<128x768xf32, #tpu.memory_space<vmem>>, %arg4: memref<1x768xf32, #tpu.memory_space<vmem>>, %arg5: memref<128x384xf32, #tpu.memory_space<vmem>>, %arg6: memref<1x384xf32, #tpu.memory_space<vmem>>, %arg7: memref<8x128x16xf32, #tpu.memory_space<vmem>>, %arg8: memref<8x16x128xf32, #tpu.memory_space<vmem>>, %arg9: memref<8x16x128xf32, #tpu.memory_space<vmem>>, %arg10: memref<128x512xf32, #tpu.memory_space<vmem>>) attributes {dimension_semantics = [#tpu.dimension_semantics<parallel>], iteration_bounds = array<i64: 2>, scalar_prefetch = 0 : i64, scratch_operands = 0 : i64, tpu.core_type = #tpu.core_type<tc>, window_params = [{transform_indices = @transform_0, window_bounds = array<i64: 128, 128>}, {transform_indices = @transform_1, window_bounds = array<i64: 128, 128>}, {pipeline_mode = #tpu.pipeline_mode<synchronous>, transform_indices = @transform_2, window_bounds = array<i64: 128, 768>}, {pipeline_mode = #tpu.pipeline_mode<synchronous>, transform_indices = @transform_3, window_bounds = array<i64: 1, 768>}, {pipeline_mode = #tpu.pipeline_mode<synchronous>, transform_indices = @transform_4, window_bounds = array<i64: 128, 384>}, {pipeline_mode = #tpu.pipeline_mode<synchronous>, transform_indices = @transform_5, window_bounds = array<i64: 1, 384>}, {transform_indices = @transform_6, window_bounds = array<i64: 8, 128, 16>}, {transform_indices = @transform_7, window_bounds = array<i64: 8, 16, 128>}, {transform_indices = @transform_8, window_bounds = array<i64: 8, 16, 128>}, {transform_indices = @transform_9, window_bounds = array<i64: 128, 512>}]} {
    %c0 = arith.constant 0 : index
    %c0_0 = arith.constant 0 : index
    %0 = vector.load %arg1[%c0, %c0_0] : memref<128x128xf32, #tpu.memory_space<vmem>>, vector<128x128xf32>
    %c0_1 = arith.constant 0 : index
    %c0_2 = arith.constant 0 : index
    %1 = vector.load %arg2[%c0_1, %c0_2] : memref<128x128xf32, #tpu.memory_space<vmem>>, vector<128x128xf32>
    %2 = arith.negf %1 : vector<128x128xf32>
    %3 = math.exp %2 : vector<128x128xf32>
    %cst = arith.constant 1.000000e+00 : f32
    %4 = vector.broadcast %cst : f32 to vector<128x128xf32>
    %5 = arith.addf %4, %3 : vector<128x128xf32>
    %6 = arith.divf %4, %5 : vector<128x128xf32>
    %7 = arith.mulf %1, %6 : vector<128x128xf32>
    %c0_3 = arith.constant 0 : index
    %c0_4 = arith.constant 0 : index
    %8 = vector.load %arg3[%c0_3, %c0_4] : memref<128x768xf32, #tpu.memory_space<vmem>>, vector<128x768xf32>
    %cst_5 = arith.constant dense<0.000000e+00> : vector<128x768xf32>
    %9 = tpu.matmul %7, %8, %cst_5 {dimension_numbers = #tpu.dot_dimension_numbers<[1], [0], [0], [1], [0, 0, 1, 1], [], []>} : vector<128x128xf32>, vector<128x768xf32>, vector<128x768xf32> -> vector<128x768xf32>
    %c0_6 = arith.constant 0 : index
    %c0_7 = arith.constant 0 : index
    %10 = vector.load %arg4[%c0_6, %c0_7] : memref<1x768xf32, #tpu.memory_space<vmem>>, vector<1x768xf32>
    %11 = vector.broadcast %10 : vector<1x768xf32> to vector<128x768xf32>
    %12 = arith.addf %9, %11 : vector<128x768xf32>
    %13 = vector.extract_strided_slice %12 {offsets = [0, 0], sizes = [128, 128], strides = [1, 1]} : vector<128x768xf32> to vector<128x128xf32>
    %14 = vector.extract_strided_slice %12 {offsets = [0, 128], sizes = [128, 128], strides = [1, 1]} : vector<128x768xf32> to vector<128x128xf32>
    %15 = vector.extract_strided_slice %12 {offsets = [0, 256], sizes = [128, 512], strides = [1, 1]} : vector<128x768xf32> to vector<128x512xf32>
    %c0_8 = arith.constant 0 : index
    %c0_9 = arith.constant 0 : index
    %16 = vector.load %arg10[%c0_8, %c0_9] : memref<128x512xf32, #tpu.memory_space<vmem>>, vector<128x512xf32>
    tpu.vector_store %arg10[%c0_8, %c0_9], %15 {strides = array<i32>} : memref<128x512xf32, #tpu.memory_space<vmem>>, vector<128x512xf32>,
    %cst_10 = arith.constant dense<0.000000e+00> : vector<128xf32>
    %17 = vector.multi_reduction <add>, %0, %cst_10 [1] : vector<128x128xf32> to vector<128xf32>
    %18 = vector.shape_cast %17 : vector<128xf32> to vector<128x1xf32>
    %cst_11 = arith.constant 1.280000e+02 : f32
    %19 = vector.broadcast %cst_11 : f32 to vector<128x1xf32>
    %20 = arith.divf %18, %19 : vector<128x1xf32>
    %21 = vector.broadcast %20 : vector<128x1xf32> to vector<128x128xf32>
    %22 = arith.subf %0, %21 : vector<128x128xf32>
    %23 = arith.mulf %22, %22 : vector<128x128xf32>
    %cst_12 = arith.constant dense<0.000000e+00> : vector<128xf32>
    %24 = vector.multi_reduction <add>, %23, %cst_12 [1] : vector<128x128xf32> to vector<128xf32>
    %25 = vector.shape_cast %24 : vector<128xf32> to vector<128x1xf32>
    %cst_13 = arith.constant 1.280000e+02 : f32
    %26 = vector.broadcast %cst_13 : f32 to vector<128x1xf32>
    %27 = arith.divf %25, %26 : vector<128x1xf32>
    %28 = vector.broadcast %20 : vector<128x1xf32> to vector<128x128xf32>
    %29 = arith.subf %0, %28 : vector<128x128xf32>
    %cst_14 = arith.constant 9.99999974E-5 : f32
    %30 = vector.broadcast %cst_14 : f32 to vector<128x1xf32>
    %31 = arith.addf %27, %30 : vector<128x1xf32>
    %32 = math.rsqrt %31 : vector<128x1xf32>
    %33 = vector.broadcast %32 : vector<128x1xf32> to vector<128x128xf32>
    %34 = arith.mulf %29, %33 : vector<128x128xf32>
    %cst_15 = arith.constant 1.000000e+00 : f32
    %35 = vector.broadcast %cst_15 : f32 to vector<128x128xf32>
    %36 = arith.addf %35, %14 : vector<128x128xf32>
    %37 = arith.mulf %34, %36 : vector<128x128xf32>
    %38 = arith.addf %37, %13 : vector<128x128xf32>
    %c0_16 = arith.constant 0 : index
    %c0_17 = arith.constant 0 : index
    %39 = vector.load %arg5[%c0_16, %c0_17] : memref<128x384xf32, #tpu.memory_space<vmem>>, vector<128x128xf32>
    %cst_18 = arith.constant dense<0.000000e+00> : vector<128x128xf32>
    %40 = tpu.matmul %38, %39, %cst_18 {dimension_numbers = #tpu.dot_dimension_numbers<[1], [0], [0], [1], [0, 0, 1, 1], [], []>} : vector<128x128xf32>, vector<128x128xf32>, vector<128x128xf32> -> vector<128x128xf32>
    %c0_19 = arith.constant 0 : index
    %c0_20 = arith.constant 0 : index
    %41 = vector.load %arg6[%c0_19, %c0_20] : memref<1x384xf32, #tpu.memory_space<vmem>>, vector<1x128xf32>
    %42 = vector.broadcast %41 : vector<1x128xf32> to vector<128x128xf32>
    %43 = arith.addf %40, %42 : vector<128x128xf32>
    %cst_21 = arith.constant 2.500000e-01 : f32
    %44 = vector.broadcast %cst_21 : f32 to vector<128x128xf32>
    %45 = arith.mulf %43, %44 : vector<128x128xf32>
    %46 = tpu.transpose %45, [1, 0] : vector<128x128xf32> -> vector<128x128xf32>
    %47 = vector.shape_cast %46 : vector<128x128xf32> to vector<8x16x128xf32>
    %48 = tpu.transpose %47, [0, 2, 1] : vector<8x16x128xf32> -> vector<8x128x16xf32>
    %c0_22 = arith.constant 0 : index
    %c0_23 = arith.constant 0 : index
    %c0_24 = arith.constant 0 : index
    %49 = vector.load %arg7[%c0_22, %c0_23, %c0_24] : memref<8x128x16xf32, #tpu.memory_space<vmem>>, vector<8x128x16xf32>
    tpu.vector_store %arg7[%c0_22, %c0_23, %c0_24], %48 {strides = array<i32>} : memref<8x128x16xf32, #tpu.memory_space<vmem>>, vector<8x128x16xf32>,
    %c0_25 = arith.constant 0 : index
    %c128 = arith.constant 128 : index
    %50 = vector.load %arg5[%c0_25, %c128] : memref<128x384xf32, #tpu.memory_space<vmem>>, vector<128x128xf32>
    %cst_26 = arith.constant dense<0.000000e+00> : vector<128x128xf32>
    %51 = tpu.matmul %38, %50, %cst_26 {dimension_numbers = #tpu.dot_dimension_numbers<[1], [0], [0], [1], [0, 0, 1, 1], [], []>} : vector<128x128xf32>, vector<128x128xf32>, vector<128x128xf32> -> vector<128x128xf32>
    %c0_27 = arith.constant 0 : index
    %c128_28 = arith.constant 128 : index
    %52 = vector.load %arg6[%c0_27, %c128_28] : memref<1x384xf32, #tpu.memory_space<vmem>>, vector<1x128xf32>
    %53 = vector.broadcast %52 : vector<1x128xf32> to vector<128x128xf32>
    %54 = arith.addf %51, %53 : vector<128x128xf32>
    %55 = tpu.transpose %54, [1, 0] : vector<128x128xf32> -> vector<128x128xf32>
    %56 = vector.shape_cast %55 : vector<128x128xf32> to vector<8x16x128xf32>
    %c0_29 = arith.constant 0 : index
    %c0_30 = arith.constant 0 : index
    %c0_31 = arith.constant 0 : index
    %57 = vector.load %arg8[%c0_29, %c0_30, %c0_31] : memref<8x16x128xf32, #tpu.memory_space<vmem>>, vector<8x16x128xf32>
    tpu.vector_store %arg8[%c0_29, %c0_30, %c0_31], %56 {strides = array<i32>} : memref<8x16x128xf32, #tpu.memory_space<vmem>>, vector<8x16x128xf32>,
    %c0_32 = arith.constant 0 : index
    %c256 = arith.constant 256 : index
    %58 = vector.load %arg5[%c0_32, %c256] : memref<128x384xf32, #tpu.memory_space<vmem>>, vector<128x128xf32>
    %cst_33 = arith.constant dense<0.000000e+00> : vector<128x128xf32>
    %59 = tpu.matmul %38, %58, %cst_33 {dimension_numbers = #tpu.dot_dimension_numbers<[1], [0], [0], [1], [0, 0, 1, 1], [], []>} : vector<128x128xf32>, vector<128x128xf32>, vector<128x128xf32> -> vector<128x128xf32>
    %c0_34 = arith.constant 0 : index
    %c256_35 = arith.constant 256 : index
    %60 = vector.load %arg6[%c0_34, %c256_35] : memref<1x384xf32, #tpu.memory_space<vmem>>, vector<1x128xf32>
    %61 = vector.broadcast %60 : vector<1x128xf32> to vector<128x128xf32>
    %62 = arith.addf %59, %61 : vector<128x128xf32>
    %63 = tpu.transpose %62, [1, 0] : vector<128x128xf32> -> vector<128x128xf32>
    %64 = vector.shape_cast %63 : vector<128x128xf32> to vector<8x16x128xf32>
    %c0_36 = arith.constant 0 : index
    %c0_37 = arith.constant 0 : index
    %c0_38 = arith.constant 0 : index
    %65 = vector.load %arg9[%c0_36, %c0_37, %c0_38] : memref<8x16x128xf32, #tpu.memory_space<vmem>>, vector<8x16x128xf32>
    tpu.vector_store %arg9[%c0_36, %c0_37, %c0_38], %64 {strides = array<i32>} : memref<8x16x128xf32, #tpu.memory_space<vmem>>, vector<8x16x128xf32>,
    return
  }
  func.func @transform_0(%arg0: i32) -> (i32, i32) {
    %c0_i32 = arith.constant 0 : i32
    %c0_i32_0 = arith.constant 0 : i32
    return %arg0, %c0_i32 : i32, i32
  }
  func.func @transform_1(%arg0: i32) -> (i32, i32) {
    %c0_i32 = arith.constant 0 : i32
    %c0_i32_0 = arith.constant 0 : i32
    return %arg0, %c0_i32 : i32, i32
  }
  func.func @transform_2(%arg0: i32) -> (i32, i32) {
    %c0_i32 = arith.constant 0 : i32
    %c0_i32_0 = arith.constant 0 : i32
    %c0_i32_1 = arith.constant 0 : i32
    return %c0_i32, %c0_i32_0 : i32, i32
  }
  func.func @transform_3(%arg0: i32) -> (i32, i32) {
    %c0_i32 = arith.constant 0 : i32
    %c0_i32_0 = arith.constant 0 : i32
    %c0_i32_1 = arith.constant 0 : i32
    return %c0_i32, %c0_i32_0 : i32, i32
  }
  func.func @transform_4(%arg0: i32) -> (i32, i32) {
    %c0_i32 = arith.constant 0 : i32
    %c0_i32_0 = arith.constant 0 : i32
    %c0_i32_1 = arith.constant 0 : i32
    return %c0_i32, %c0_i32_0 : i32, i32
  }
  func.func @transform_5(%arg0: i32) -> (i32, i32) {
    %c0_i32 = arith.constant 0 : i32
    %c0_i32_0 = arith.constant 0 : i32
    %c0_i32_1 = arith.constant 0 : i32
    return %c0_i32, %c0_i32_0 : i32, i32
  }
  func.func @transform_6(%arg0: i32) -> (i32, i32, i32) {
    %c0_i32 = arith.constant 0 : i32
    %c0_i32_0 = arith.constant 0 : i32
    %c0_i32_1 = arith.constant 0 : i32
    return %c0_i32, %arg0, %c0_i32_0 : i32, i32, i32
  }
  func.func @transform_7(%arg0: i32) -> (i32, i32, i32) {
    %c0_i32 = arith.constant 0 : i32
    %c0_i32_0 = arith.constant 0 : i32
    %c0_i32_1 = arith.constant 0 : i32
    return %c0_i32, %c0_i32_0, %arg0 : i32, i32, i32
  }
  func.func @transform_8(%arg0: i32) -> (i32, i32, i32) {
    %c0_i32 = arith.constant 0 : i32
    %c0_i32_0 = arith.constant 0 : i32
    %c0_i32_1 = arith.constant 0 : i32
    return %c0_i32, %c0_i32_0, %arg0 : i32, i32, i32
  }
  func.func @transform_9(%arg0: i32) -> (i32, i32) {
    %c0_i32 = arith.constant 0 : i32
    %c0_i32_0 = arith.constant 0 : i32
    return %arg0, %c0_i32 : i32, i32
  }
}

</mosaic_0001>

<llo_original>
// kernel: tpu_custom_call.1
$region0: #{tpu_custom_call.1}
  #allocation0 [shape = 'u32[]', space=smem, size = 0x4, offset = 0x4, fixed_abs, tag = 'smem constant byte address 0x4 - core index']
  #allocation1 [shape = 'u32[72,128]{1,0:T(1,128)}', space=vmem, size = 0x9000, scoped, tag = 'internal scratch']
  %s0 = inlined_call_operand.hbm [shape: f32[8,128], index: 0, kind: input, shape index: {}]
  %s1 = inlined_call_operand.hbm [shape: f32[16,128], index: 1, kind: input, shape index: {}]
  %s2 = inlined_call_operand.hbm [shape: f32[16,128], index: 2, kind: output, shape index: {}]
  %s3 = sld [smem:[#allocation0]]
  $region53: #{tpu_custom_call.1} parent=0
    _
  %s5 = ssub.s32 1, %s3
  %s6 = scalar_select 0, %s5, %s3
  $region1: #{tpu_custom_call.1} parent=0
    #allocation2 [shape = 'u8[4096]{0}', space=vmem, size = 0x1000, scoped, tag = 'input window, operand 0, single buffered']
    #allocation3 [shape = 's32[2]{0}', space=sflag, size = 0x8, scoped, tag = 'scoped memory for tpu_custom_call.1']
    #allocation4 [shape = 's32[2]{0}', space=sflag, size = 0x8, scoped, tag = 'scoped memory for tpu_custom_call.1']
    #allocation5 [shape = 'u8[8192]{0}', space=vmem, size = 0x2000, scoped, tag = 'input window, operand 1']
    #allocation6 [shape = 's32[2]{0}', space=sflag, size = 0x8, scoped, tag = 'scoped memory for tpu_custom_call.1']
    #allocation7 [shape = 'u8[8192]{0}', space=vmem, size = 0x2000, scoped, tag = 'output window, operand 0']
    %7 = vsyncpa [#allocation3], 0
    %8 = vsyncpa [#allocation6], 0
    %s9 = scalar_lea.sflag [#allocation6], 1
    %10 = vsyncpa %s9, 0
    %11 = vsyncpa [#allocation4], 0
    %s12 = scalar_lea.sflag [#allocation4], 1
    %13 = vsyncpa %s12, 0
    loop: start=0, step=1, limit=6
    $region2: #{tpu_custom_call.1} parent=1 // loop_pre_header
      _
    $region3: #{tpu_custom_call.1} parent=1 // loop_header
      %s15 = sphi 0, %s19
      %p16 = scmp.ge.s32.totalorder %s15, 6
      %s22 = sphi 0, %s34
      %s23 = sphi 0, %s30
      %s24 = sphi 0, %s22
      %s25 = sphi 0, %s23
      %s26 = sphi 0, %s24
      %s27 = sphi 0, %s25
      %s35 = sphi 0, %s35
      %s37 = sphi 0, %s35
      %s38 = sphi 0, %s37
      %s52 = sphi 0, %s38
      %s58 = sphi 0, %s60
      %s61 = sphi 0, %s58
      %s62 = sphi 0, %s61
      %s78 = sphi 0, %s62
      %s84 = sphi 0, %s86
      %s87 = sphi 0, %s84
      %s88 = sphi 0, %s87
      %s104 = sphi 0, %s88
    $region4: #{tpu_custom_call.1} parent=1 // loop_header_branch
      %18 = sbr.rel (%p16) target = $region8
    $region5: #{tpu_custom_call.1} parent=1 // loop_body
      %s20 = ssub.s32 %s15, 1
      %s21 = ssub.s32 %s15, 2
      %s28 = sadd.s32 1, %s23
      %p29 = scmp.ge.s32.totalorder %s28, 2
      %s30 = scalar_select %p29, 0, %s28
      %s31 = sadd.s32 1, %s22
      %s32 = scalar_select %p29, %s31, %s22
      %p33 = scmp.ge.s32.totalorder %s32, 2
      %s34 = scalar_select %p33, 0, %s32
      %s36 = sadd.s32 %s35, 1
      %p39 = scmp.eq.s32.totalorder %s15, 3
      %p40 = scmp.ne.s32.totalorder %s35, %s37
      %p41 = scmp.eq.s32.totalorder %s15, 0
      %p42 = por %p40, %p41
      %p43 = scmp.ne.s32.totalorder %s35, %s37
      %p44 = scmp.eq.s32.totalorder %s20, 3
      %p45 = por %p43, %p44
      %p46 = scmp.ne.s32.totalorder %s37, %s38
      %p47 = scmp.eq.s32.totalorder %s20, 0
      %p48 = por %p46, %p47
      %p49 = scmp.ne.s32.totalorder %s37, %s38
      %p50 = scmp.eq.s32.totalorder %s21, 3
      %p51 = por %p49, %p50
      %p53 = scmp.ne.s32.totalorder %s38, %s52
      %p54 = scmp.eq.s32.totalorder %s21, 0
      %p55 = por %p53, %p54
      %s56 = ssub.s32 %s22, %s34
      %p57 = scmp.eq.s32.totalorder %s56, 0
      %s59 = sadd.s32 %s58, 1
      %s60 = scalar_select %p57, %s58, %s59
      %p63 = pneg %p57
      %p64 = scmp.eq.s32.totalorder %s15, 3
      %p65 = por %p63, %p64
      %p66 = scmp.ne.s32.totalorder %s58, %s61
      %p67 = scmp.eq.s32.totalorder %s15, 0
      %p68 = por %p66, %p67
      %p69 = scmp.ne.s32.totalorder %s58, %s61
      %p70 = scmp.eq.s32.totalorder %s20, 3
      %p71 = por %p69, %p70
      %p72 = scmp.ne.s32.totalorder %s61, %s62
      %p73 = scmp.eq.s32.totalorder %s20, 0
      %p74 = por %p72, %p73
      %p75 = scmp.ne.s32.totalorder %s61, %s62
      %p76 = scmp.eq.s32.totalorder %s21, 3
      %p77 = por %p75, %p76
      %p79 = scmp.ne.s32.totalorder %s62, %s78
      %p80 = scmp.eq.s32.totalorder %s21, 0
      %p81 = por %p79, %p80
      %s82 = ssub.s32 %s22, %s34
      %p83 = scmp.eq.s32.totalorder %s82, 0
      %s85 = sadd.s32 %s84, 1
      %s86 = scalar_select %p83, %s84, %s85
      %p89 = pneg %p83
      %p90 = scmp.eq.s32.totalorder %s15, 3
      %p91 = por %p89, %p90
      %p92 = scmp.ne.s32.totalorder %s84, %s87
      %p93 = scmp.eq.s32.totalorder %s15, 0
      %p94 = por %p92, %p93
      %p95 = scmp.ne.s32.totalorder %s84, %s87
      %p96 = scmp.eq.s32.totalorder %s20, 3
      %p97 = por %p95, %p96
      %p98 = scmp.ne.s32.totalorder %s87, %s88
      %p99 = scmp.eq.s32.totalorder %s20, 0
      %p100 = por %p98, %p99
      %p101 = scmp.ne.s32.totalorder %s87, %s88
      %p102 = scmp.eq.s32.totalorder %s21, 3
      %p103 = por %p101, %p102
      %p105 = scmp.ne.s32.totalorder %s88, %s104
      %p106 = scmp.eq.s32.totalorder %s21, 0
      %p107 = por %p105, %p106
      %p108 = scmp.le.s32.totalorder 1, %s15
      %p109 = scmp.lt.s32.totalorder %s15, 5
      %p110 = pnand %p108, %p109
      %p111 = pneg %p110
      // Predicated region
      $region9: #{tpu_custom_call.1} parent=5 // pred_check
        _
      $region10: #{tpu_custom_call.1} parent=5 // pred_check_branch
        %113 = sbr.rel (%p110) target = $region12
      $region11: #{tpu_custom_call.1} parent=5 // pred_region
        %s114 = ssub.s32 %s15, 1
        // Predicated region
        $region13: #{tpu_custom_call.1} parent=11 // pred_check
          %p115 = pneg %p48
        $region14: #{tpu_custom_call.1} parent=11 // pred_check_branch
          %117 = sbr.rel (%p115) target = $region16
        $region15: #{tpu_custom_call.1} parent=11 // pred_region
          %119 = vsyncadd [#allocation3], 0
          %s121 = sshll.u32 %s0, 4
          %s122 = int_to_ptr.hbm [resolvable:$true] %s121
          %s123 = sshll.u32 [#allocation2], 4
          %s124 = int_to_ptr.vmem [resolvable:$true] %s123
          %126 = dma.hbm_to_vmem [thread:$0]  %s122, 128, %s124, [#allocation3]
        $region16: #{tpu_custom_call.1} parent=11 // pred_fallthru
          _
      $region12: #{tpu_custom_call.1} parent=5 // pred_fallthru
        _
      %p127 = scmp.lt.s32.totalorder %s15, 4
      // Predicated region
      $region17: #{tpu_custom_call.1} parent=5 // pred_check
        %p128 = pneg %p127
      $region18: #{tpu_custom_call.1} parent=5 // pred_check_branch
        %130 = sbr.rel (%p128) target = $region20
      $region19: #{tpu_custom_call.1} parent=5 // pred_region
        // Predicated region
        $region21: #{tpu_custom_call.1} parent=19 // pred_check
          %p131 = pneg %p68
        $region22: #{tpu_custom_call.1} parent=19 // pred_check_branch
          %133 = sbr.rel (%p131) target = $region24
        $region23: #{tpu_custom_call.1} parent=19 // pred_region
          %s134 = sand.u32 %s58, 1
          %s135 = scalar_lea.sflag [#allocation6], %s134
          %s136 = sand.u32 %s58, 1
          %s137 = smul.addr %s136, 8
          %s138 = scalar_lea.vmem [#allocation5], %s137
          %140 = vsyncadd %s135, 0
          %s141 = smul.addr %s22, 8
          %s142 = scalar_lea.hbm %s1, %s141
          %s144 = sshll.u32 %s142, 4
          %s145 = int_to_ptr.hbm [resolvable:$true] %s144
          %s146 = sshll.u32 %s138, 4
          %s147 = int_to_ptr.vmem [resolvable:$true] %s146
          %149 = dma.hbm_to_vmem [thread:$0]  %s145, 128, %s147, %s135
        $region24: #{tpu_custom_call.1} parent=19 // pred_fallthru
          _
      $region20: #{tpu_custom_call.1} parent=5 // pred_fallthru
        _
      %p150 = scmp.le.s32.totalorder 1, %s15
      %p151 = scmp.lt.s32.totalorder %s15, 5
      %p152 = pnand %p150, %p151
      %p153 = pneg %p152
      // Predicated region
      $region25: #{tpu_custom_call.1} parent=5 // pred_check
        _
      $region26: #{tpu_custom_call.1} parent=5 // pred_check_branch
        %155 = sbr.rel (%p152) target = $region28
      $region27: #{tpu_custom_call.1} parent=5 // pred_region
        %s156 = ssub.s32 %s15, 1
        // Predicated region
        $region29: #{tpu_custom_call.1} parent=27 // pred_check
          %p157 = pneg %p48
        $region30: #{tpu_custom_call.1} parent=27 // pred_check_branch
          %159 = sbr.rel (%p157) target = $region32
        $region31: #{tpu_custom_call.1} parent=27 // pred_region
          %161 = dma.done [#allocation3], 128
        $region32: #{tpu_custom_call.1} parent=27 // pred_fallthru
          _
        %s162 = sand.u32 %s61, 1
        %s163 = scalar_lea.sflag [#allocation6], %s162
        %s164 = sand.u32 %s61, 1
        %s165 = smul.addr %s164, 8
        %s166 = scalar_lea.vmem [#allocation5], %s165
        // Predicated region
        $region33: #{tpu_custom_call.1} parent=27 // pred_check
          %p167 = pneg %p74
        $region34: #{tpu_custom_call.1} parent=27 // pred_check_branch
          %169 = sbr.rel (%p167) target = $region36
        $region35: #{tpu_custom_call.1} parent=27 // pred_region
          %171 = dma.done %s163, 128
        $region36: #{tpu_custom_call.1} parent=27 // pred_fallthru
          _
        %p172 = pneg %p48
        %p173 = pneg %p45
        %s174 = sand.u32 %s61, 1
        %s175 = scalar_lea.sflag [#allocation6], %s174
        %s176 = sand.u32 %s61, 1
        %s177 = smul.addr %s176, 8
        %s178 = scalar_lea.vmem [#allocation5], %s177
        %p179 = pneg %p74
        %p180 = pneg %p71
        %p181 = pneg %p100
        %p182 = pneg %p97
        %s183 = sand.u32 %s87, 1
        %s184 = scalar_lea.sflag [#allocation4], %s183
        %s185 = sand.u32 %s87, 1
        %s186 = smul.addr %s185, 8
        %s187 = scalar_lea.vmem [#allocation7], %s186
        %p188 = scmp.eq.s32.totalorder %s25, 1
        // Predicated region
        $region37: #{tpu_custom_call.1} parent=27 // pred_check
          %p189 = pneg %p188
        $region38: #{tpu_custom_call.1} parent=27 // pred_check_branch
          %191 = sbr.rel (%p189) target = $region40
        $region39: #{tpu_custom_call.1} parent=27 // pred_region
          %v192 = vld [vmem:[%s166] sm:$0xff]
          %v193 = vld [vmem:[#allocation2] sm:$0xff]
          %v194 = vadd.f32 %v192, %v193
          %195 = vst [vmem:[%s187] sm:$0xff] %v194
        $region40: #{tpu_custom_call.1} parent=27 // pred_fallthru
          _
        %s196 = sand.u32 %s87, 1
        %s197 = scalar_lea.sflag [#allocation4], %s196
        %s198 = sand.u32 %s87, 1
        %s199 = smul.addr %s198, 8
        %s200 = scalar_lea.vmem [#allocation7], %s199
        // Predicated region
        $region41: #{tpu_custom_call.1} parent=27 // pred_check
          %p201 = pneg %p97
        $region42: #{tpu_custom_call.1} parent=27 // pred_check_branch
          %203 = sbr.rel (%p201) target = $region44
        $region43: #{tpu_custom_call.1} parent=27 // pred_region
          %205 = vsyncadd %s197, 0
          %s206 = smul.addr %s24, 8
          %s207 = scalar_lea.hbm %s2, %s206
          %s209 = sshll.u32 %s200, 4
          %s210 = int_to_ptr.vmem [resolvable:$true] %s209
          %s211 = sshll.u32 %s207, 4
          %s212 = int_to_ptr.hbm [resolvable:$true] %s211
          %214 = dma.vmem_to_hbm [thread:$0]  %s210, 128, %s212, %s197
        $region44: #{tpu_custom_call.1} parent=27 // pred_fallthru
          _
      $region28: #{tpu_custom_call.1} parent=5 // pred_fallthru
        _
      %p215 = scmp.le.s32.totalorder 2, %s15
      // Predicated region
      $region45: #{tpu_custom_call.1} parent=5 // pred_check
        %p216 = pneg %p215
      $region46: #{tpu_custom_call.1} parent=5 // pred_check_branch
        %218 = sbr.rel (%p216) target = $region48
      $region47: #{tpu_custom_call.1} parent=5 // pred_region
        %s219 = ssub.s32 %s15, 2
        // Predicated region
        $region49: #{tpu_custom_call.1} parent=47 // pred_check
          %p220 = pneg %p103
        $region50: #{tpu_custom_call.1} parent=47 // pred_check_branch
          %222 = sbr.rel (%p220) target = $region52
        $region51: #{tpu_custom_call.1} parent=47 // pred_region
          %s223 = sand.u32 %s88, 1
          %s224 = scalar_lea.sflag [#allocation4], %s223
          %s225 = sand.u32 %s88, 1
          %s226 = smul.addr %s225, 8
          %s227 = scalar_lea.vmem [#allocation7], %s226
          %229 = dma.done %s224, 128
        $region52: #{tpu_custom_call.1} parent=47 // pred_fallthru
          _
      $region48: #{tpu_custom_call.1} parent=5 // pred_fallthru
        _
    $region6: #{tpu_custom_call.1} parent=1 // loop_footer
      %s19 = sadd.s32 1, %s15
    $region7: #{tpu_custom_call.1} parent=1 // loop_footer_branch
      %14 = sbr.rel target = $region3
    $region8: #{tpu_custom_call.1} parent=1 // loop_exit
      _
    %230 = vsyncpa [#allocation3], 1
    %s231 = scalar_lea.sflag [#allocation3], 1
    %232 = vsyncpa %s231, 1
    %233 = vsyncpa [#allocation6], 1
    %s234 = scalar_lea.sflag [#allocation6], 1
    %235 = vsyncpa %s234, 1
    %236 = vsyncpa [#allocation4], 1
    %s237 = scalar_lea.sflag [#allocation4], 1
    %238 = vsyncpa %s237, 1

// kernel: tpu_custom_call.1
$region0: #{tpu_custom_call.1}
  #allocation0 [shape = 'u32[]', space=smem, size = 0x4, offset = 0x4, fixed_abs, tag = 'smem constant byte address 0x4 - core index']
  #allocation1 [shape = 'u32[72,128]{1,0:T(1,128)}', space=vmem, size = 0x9000, scoped, tag = 'internal scratch']
  %s0 = inlined_call_operand.hbm [shape: f32[256,128], index: 0, kind: input, shape index: {}]
  %s1 = inlined_call_operand.hbm [shape: f32[256,128], index: 1, kind: input, shape index: {}]
  %s2 = inlined_call_operand.hbm [shape: f32[128,768], index: 2, kind: input, shape index: {}]
  %s3 = inlined_call_operand.hbm [shape: f32[1,768], index: 3, kind: input, shape index: {}]
  %s4 = inlined_call_operand.hbm [shape: f32[128,384], index: 4, kind: input, shape index: {}]
  %s5 = inlined_call_operand.vmem [shape: f32[1,384], index: 5, kind: input, shape index: {}]
  %s6 = inlined_call_operand.vmem [shape: f32[8,256,16], index: 6, kind: output, shape index: {0}]
  %s7 = inlined_call_operand.hbm [shape: f32[8,16,256], index: 7, kind: output, shape index: {1}]
  %s8 = inlined_call_operand.hbm [shape: f32[8,16,256], index: 8, kind: output, shape index: {2}]
  %s9 = inlined_call_operand.hbm [shape: f32[256,512], index: 9, kind: output, shape index: {3}]
  %10 = xla_tuple %s6, %s7, %s8, %s9
  %s11 = sld [smem:[#allocation0]]
  $region135: #{tpu_custom_call.1} parent=0
    _
  %s13 = ssub.s32 1, %s11
  %s14 = scalar_select 0, %s13, %s11
  $region1: #{tpu_custom_call.1} parent=0
    #allocation2 [shape = 'u8[131072]{0}', space=vmem, size = 0x20000, scoped, tag = 'input window, operand 0']
    #allocation3 [shape = 's32[2]{0}', space=sflag, size = 0x8, scoped, tag = 'scoped memory for tpu_custom_call.1']
    #allocation4 [shape = 's32[2]{0}', space=sflag, size = 0x8, scoped, tag = 'scoped memory for tpu_custom_call.1']
    #allocation5 [shape = 'u8[131072]{0}', space=vmem, size = 0x20000, scoped, tag = 'input window, operand 1']
    #allocation6 [shape = 's32[2]{0}', space=sflag, size = 0x8, scoped, tag = 'scoped memory for tpu_custom_call.1']
    #allocation7 [shape = 'u8[393216]{0}', space=vmem, size = 0x60000, scoped, tag = 'input window, operand 2, single buffered']
    #allocation8 [shape = 'u8[3072]{0}', space=vmem, size = 0xc00, scoped, tag = 'input window, operand 3, single buffered']
    #allocation9 [shape = 's32[1]{0}', space=sflag, size = 0x4, scoped, tag = 'scoped memory for tpu_custom_call.1']
    #allocation10 [shape = 'u8[196608]{0}', space=vmem, size = 0x30000, scoped, tag = 'input window, operand 4, single buffered']
    #allocation11 [shape = 'u8[1048576]{0}', space=vmem, size = 0x100000, scoped, tag = 'output window, operand 0']
    #allocation12 [shape = 'u8[131072]{0}', space=vmem, size = 0x20000, scoped, tag = 'output window, operand 1']
    #allocation13 [shape = 'u8[131072]{0}', space=vmem, size = 0x20000, scoped, tag = 'output window, operand 2']
    #allocation14 [shape = 's32[2]{0}', space=sflag, size = 0x8, scoped, tag = 'scoped memory for tpu_custom_call.1']
    #allocation15 [shape = 'u8[524288]{0}', space=vmem, size = 0x80000, scoped, tag = 'output window, operand 3']
    %15 = vsyncpa [#allocation3], 0
    %s16 = scalar_lea.sflag [#allocation3], 1
    %17 = vsyncpa %s16, 0
    %18 = vsyncpa [#allocation6], 0
    %s19 = scalar_lea.sflag [#allocation6], 1
    %20 = vsyncpa %s19, 0
    %21 = vsyncpa [#allocation9], 0
    %22 = vsyncpa [#allocation4], 0
    %s23 = scalar_lea.sflag [#allocation4], 1
    %24 = vsyncpa %s23, 0
    %25 = vsyncpa [#allocation14], 0
    %s26 = scalar_lea.sflag [#allocation14], 1
    %27 = vsyncpa %s26, 0
    loop: start=0, step=1, limit=4
    $region2: #{tpu_custom_call.1} parent=1 // loop_pre_header
      _
    $region3: #{tpu_custom_call.1} parent=1 // loop_header
      %s29 = sphi 0, %s33
      %p30 = scmp.ge.s32.totalorder %s29, 4
      %s39 = sphi 0, %s41
      %s42 = sphi 0, %s39
      %s43 = sphi 0, %s42
      %s59 = sphi 0, %s43
      %s65 = sphi 0, %s67
      %s68 = sphi 0, %s65
      %s69 = sphi 0, %s68
      %s85 = sphi 0, %s69
      %s89 = sphi 0, %s89
      %s91 = sphi 0, %s89
      %s92 = sphi 0, %s91
      %s106 = sphi 0, %s92
      %s110 = sphi 0, %s110
      %s112 = sphi 0, %s110
      %s113 = sphi 0, %s112
      %s127 = sphi 0, %s113
      %s131 = sphi 0, %s131
      %s133 = sphi 0, %s131
      %s134 = sphi 0, %s133
      %s148 = sphi 0, %s134
      %s152 = sphi 0, %s152
      %s154 = sphi 0, %s152
      %s155 = sphi 0, %s154
      %s169 = sphi 0, %s155
      %s175 = sphi 0, %s177
      %s178 = sphi 0, %s175
      %s179 = sphi 0, %s178
      %s195 = sphi 0, %s179
      %s201 = sphi 0, %s203
      %s204 = sphi 0, %s201
      %s205 = sphi 0, %s204
      %s221 = sphi 0, %s205
      %s227 = sphi 0, %s229
      %s230 = sphi 0, %s227
      %s231 = sphi 0, %s230
      %s247 = sphi 0, %s231
      %s253 = sphi 0, %s255
      %s256 = sphi 0, %s253
      %s257 = sphi 0, %s256
      %s273 = sphi 0, %s257
    $region4: #{tpu_custom_call.1} parent=1 // loop_header_branch
      %32 = sbr.rel (%p30) target = $region8
    $region5: #{tpu_custom_call.1} parent=1 // loop_body
      %s34 = ssub.s32 %s29, 1
      %s35 = ssub.s32 %s29, 2
      %s36 = sadd.s32 %s29, 1
      %s37 = ssub.s32 %s29, %s36
      %p38 = scmp.eq.s32.totalorder %s37, 0
      %s40 = sadd.s32 %s39, 1
      %s41 = scalar_select %p38, %s39, %s40
      %p44 = pneg %p38
      %p45 = scmp.eq.s32.totalorder %s29, 1
      %p46 = por %p44, %p45
      %p47 = scmp.ne.s32.totalorder %s39, %s42
      %p48 = scmp.eq.s32.totalorder %s29, 0
      %p49 = por %p47, %p48
      %p50 = scmp.ne.s32.totalorder %s39, %s42
      %p51 = scmp.eq.s32.totalorder %s34, 1
      %p52 = por %p50, %p51
      %p53 = scmp.ne.s32.totalorder %s42, %s43
      %p54 = scmp.eq.s32.totalorder %s34, 0
      %p55 = por %p53, %p54
      %p56 = scmp.ne.s32.totalorder %s42, %s43
      %p57 = scmp.eq.s32.totalorder %s35, 1
      %p58 = por %p56, %p57
      %p60 = scmp.ne.s32.totalorder %s43, %s59
      %p61 = scmp.eq.s32.totalorder %s35, 0
      %p62 = por %p60, %p61
      %s63 = ssub.s32 %s29, %s36
      %p64 = scmp.eq.s32.totalorder %s63, 0
      %s66 = sadd.s32 %s65, 1
      %s67 = scalar_select %p64, %s65, %s66
      %p70 = pneg %p64
      %p71 = scmp.eq.s32.totalorder %s29, 1
      %p72 = por %p70, %p71
      %p73 = scmp.ne.s32.totalorder %s65, %s68
      %p74 = scmp.eq.s32.totalorder %s29, 0
      %p75 = por %p73, %p74
      %p76 = scmp.ne.s32.totalorder %s65, %s68
      %p77 = scmp.eq.s32.totalorder %s34, 1
      %p78 = por %p76, %p77
      %p79 = scmp.ne.s32.totalorder %s68, %s69
      %p80 = scmp.eq.s32.totalorder %s34, 0
      %p81 = por %p79, %p80
      %p82 = scmp.ne.s32.totalorder %s68, %s69
      %p83 = scmp.eq.s32.totalorder %s35, 1
      %p84 = por %p82, %p83
      %p86 = scmp.ne.s32.totalorder %s69, %s85
      %p87 = scmp.eq.s32.totalorder %s35, 0
      %p88 = por %p86, %p87
      %s90 = sadd.s32 %s89, 1
      %p93 = scmp.eq.s32.totalorder %s29, 1
      %p94 = scmp.ne.s32.totalorder %s89, %s91
      %p95 = scmp.eq.s32.totalorder %s29, 0
      %p96 = por %p94, %p95
      %p97 = scmp.ne.s32.totalorder %s89, %s91
      %p98 = scmp.eq.s32.totalorder %s34, 1
      %p99 = por %p97, %p98
      %p100 = scmp.ne.s32.totalorder %s91, %s92
      %p101 = scmp.eq.s32.totalorder %s34, 0
      %p102 = por %p100, %p101
      %p103 = scmp.ne.s32.totalorder %s91, %s92
      %p104 = scmp.eq.s32.totalorder %s35, 1
      %p105 = por %p103, %p104
      %p107 = scmp.ne.s32.totalorder %s92, %s106
      %p108 = scmp.eq.s32.totalorder %s35, 0
      %p109 = por %p107, %p108
      %s111 = sadd.s32 %s110, 1
      %p114 = scmp.eq.s32.totalorder %s29, 1
      %p115 = scmp.ne.s32.totalorder %s110, %s112
      %p116 = scmp.eq.s32.totalorder %s29, 0
      %p117 = por %p115, %p116
      %p118 = scmp.ne.s32.totalorder %s110, %s112
      %p119 = scmp.eq.s32.totalorder %s34, 1
      %p120 = por %p118, %p119
      %p121 = scmp.ne.s32.totalorder %s112, %s113
      %p122 = scmp.eq.s32.totalorder %s34, 0
      %p123 = por %p121, %p122
      %p124 = scmp.ne.s32.totalorder %s112, %s113
      %p125 = scmp.eq.s32.totalorder %s35, 1
      %p126 = por %p124, %p125
      %p128 = scmp.ne.s32.totalorder %s113, %s127
      %p129 = scmp.eq.s32.totalorder %s35, 0
      %p130 = por %p128, %p129
      %s132 = sadd.s32 %s131, 1
      %p135 = scmp.eq.s32.totalorder %s29, 1
      %p136 = scmp.ne.s32.totalorder %s131, %s133
      %p137 = scmp.eq.s32.totalorder %s29, 0
      %p138 = por %p136, %p137
      %p139 = scmp.ne.s32.totalorder %s131, %s133
      %p140 = scmp.eq.s32.totalorder %s34, 1
      %p141 = por %p139, %p140
      %p142 = scmp.ne.s32.totalorder %s133, %s134
      %p143 = scmp.eq.s32.totalorder %s34, 0
      %p144 = por %p142, %p143
      %p145 = scmp.ne.s32.totalorder %s133, %s134
      %p146 = scmp.eq.s32.totalorder %s35, 1
      %p147 = por %p145, %p146
      %p149 = scmp.ne.s32.totalorder %s134, %s148
      %p150 = scmp.eq.s32.totalorder %s35, 0
      %p151 = por %p149, %p150
      %s153 = sadd.s32 %s152, 1
      %p156 = scmp.eq.s32.totalorder %s29, 1
      %p157 = scmp.ne.s32.totalorder %s152, %s154
      %p158 = scmp.eq.s32.totalorder %s29, 0
      %p159 = por %p157, %p158
      %p160 = scmp.ne.s32.totalorder %s152, %s154
      %p161 = scmp.eq.s32.totalorder %s34, 1
      %p162 = por %p160, %p161
      %p163 = scmp.ne.s32.totalorder %s154, %s155
      %p164 = scmp.eq.s32.totalorder %s34, 0
      %p165 = por %p163, %p164
      %p166 = scmp.ne.s32.totalorder %s154, %s155
      %p167 = scmp.eq.s32.totalorder %s35, 1
      %p168 = por %p166, %p167
      %p170 = scmp.ne.s32.totalorder %s155, %s169
      %p171 = scmp.eq.s32.totalorder %s35, 0
      %p172 = por %p170, %p171
      %s173 = ssub.s32 %s29, %s36
      %p174 = scmp.eq.s32.totalorder %s173, 0
      %s176 = sadd.s32 %s175, 1
      %s177 = scalar_select %p174, %s175, %s176
      %p180 = pneg %p174
      %p181 = scmp.eq.s32.totalorder %s29, 1
      %p182 = por %p180, %p181
      %p183 = scmp.ne.s32.totalorder %s175, %s178
      %p184 = scmp.eq.s32.totalorder %s29, 0
      %p185 = por %p183, %p184
      %p186 = scmp.ne.s32.totalorder %s175, %s178
      %p187 = scmp.eq.s32.totalorder %s34, 1
      %p188 = por %p186, %p187
      %p189 = scmp.ne.s32.totalorder %s178, %s179
      %p190 = scmp.eq.s32.totalorder %s34, 0
      %p191 = por %p189, %p190
      %p192 = scmp.ne.s32.totalorder %s178, %s179
      %p193 = scmp.eq.s32.totalorder %s35, 1
      %p194 = por %p192, %p193
      %p196 = scmp.ne.s32.totalorder %s179, %s195
      %p197 = scmp.eq.s32.totalorder %s35, 0
      %p198 = por %p196, %p197
      %s199 = ssub.s32 %s29, %s36
      %p200 = scmp.eq.s32.totalorder %s199, 0
      %s202 = sadd.s32 %s201, 1
      %s203 = scalar_select %p200, %s201, %s202
      %p206 = pneg %p200
      %p207 = scmp.eq.s32.totalorder %s29, 1
      %p208 = por %p206, %p207
      %p209 = scmp.ne.s32.totalorder %s201, %s204
      %p210 = scmp.eq.s32.totalorder %s29, 0
      %p211 = por %p209, %p210
      %p212 = scmp.ne.s32.totalorder %s201, %s204
      %p213 = scmp.eq.s32.totalorder %s34, 1
      %p214 = por %p212, %p213
      %p215 = scmp.ne.s32.totalorder %s204, %s205
      %p216 = scmp.eq.s32.totalorder %s34, 0
      %p217 = por %p215, %p216
      %p218 = scmp.ne.s32.totalorder %s204, %s205
      %p219 = scmp.eq.s32.totalorder %s35, 1
      %p220 = por %p218, %p219
      %p222 = scmp.ne.s32.totalorder %s205, %s221
      %p223 = scmp.eq.s32.totalorder %s35, 0
      %p224 = por %p222, %p223
      %s225 = ssub.s32 %s29, %s36
      %p226 = scmp.eq.s32.totalorder %s225, 0
      %s228 = sadd.s32 %s227, 1
      %s229 = scalar_select %p226, %s227, %s228
      %p232 = pneg %p226
      %p233 = scmp.eq.s32.totalorder %s29, 1
      %p234 = por %p232, %p233
      %p235 = scmp.ne.s32.totalorder %s227, %s230
      %p236 = scmp.eq.s32.totalorder %s29, 0
      %p237 = por %p235, %p236
      %p238 = scmp.ne.s32.totalorder %s227, %s230
      %p239 = scmp.eq.s32.totalorder %s34, 1
      %p240 = por %p238, %p239
      %p241 = scmp.ne.s32.totalorder %s230, %s231
      %p242 = scmp.eq.s32.totalorder %s34, 0
      %p243 = por %p241, %p242
      %p244 = scmp.ne.s32.totalorder %s230, %s231
      %p245 = scmp.eq.s32.totalorder %s35, 1
      %p246 = por %p244, %p245
      %p248 = scmp.ne.s32.totalorder %s231, %s247
      %p249 = scmp.eq.s32.totalorder %s35, 0
      %p250 = por %p248, %p249
      %s251 = ssub.s32 %s29, %s36
      %p252 = scmp.eq.s32.totalorder %s251, 0
      %s254 = sadd.s32 %s253, 1
      %s255 = scalar_select %p252, %s253, %s254
      %p258 = pneg %p252
      %p259 = scmp.eq.s32.totalorder %s29, 1
      %p260 = por %p258, %p259
      %p261 = scmp.ne.s32.totalorder %s253, %s256
      %p262 = scmp.eq.s32.totalorder %s29, 0
      %p263 = por %p261, %p262
      %p264 = scmp.ne.s32.totalorder %s253, %s256
      %p265 = scmp.eq.s32.totalorder %s34, 1
      %p266 = por %p264, %p265
      %p267 = scmp.ne.s32.totalorder %s256, %s257
      %p268 = scmp.eq.s32.totalorder %s34, 0
      %p269 = por %p267, %p268
      %p270 = scmp.ne.s32.totalorder %s256, %s257
      %p271 = scmp.eq.s32.totalorder %s35, 1
      %p272 = por %p270, %p271
      %p274 = scmp.ne.s32.totalorder %s257, %s273
      %p275 = scmp.eq.s32.totalorder %s35, 0
      %p276 = por %p274, %p275
      %p277 = scmp.le.s32.totalorder 1, %s29
      %p278 = scmp.lt.s32.totalorder %s29, 3
      %p279 = pnand %p277, %p278
      %p280 = pneg %p279
      // Predicated region
      $region9: #{tpu_custom_call.1} parent=5 // pred_check
        _
      $region10: #{tpu_custom_call.1} parent=5 // pred_check_branch
        %282 = sbr.rel (%p279) target = $region12
      $region11: #{tpu_custom_call.1} parent=5 // pred_region
        %s283 = ssub.s32 %s29, 1
        // Predicated region
        $region13: #{tpu_custom_call.1} parent=11 // pred_check
          %p284 = pneg %p102
        $region14: #{tpu_custom_call.1} parent=11 // pred_check_branch
          %286 = sbr.rel (%p284) target = $region16
        $region15: #{tpu_custom_call.1} parent=11 // pred_region
          %288 = vsyncadd [#allocation6], 0
          %s289 = sshll.u32 %s2, 4
          %s290 = int_to_ptr.hbm [resolvable:$true] %s289
          %s291 = sshll.u32 [#allocation7], 4
          %s292 = int_to_ptr.vmem [resolvable:$true] %s291
          %297 = dma.hbm_to_vmem [thread:$0]  %s290, 12288, %s292, [#allocation6], 768, 768, 48
        $region16: #{tpu_custom_call.1} parent=11 // pred_fallthru
          _
        // Predicated region
        $region17: #{tpu_custom_call.1} parent=11 // pred_check
          %p298 = pneg %p123
        $region18: #{tpu_custom_call.1} parent=11 // pred_check_branch
          %300 = sbr.rel (%p298) target = $region20
        $region19: #{tpu_custom_call.1} parent=11 // pred_region
          %302 = vsyncadd [#allocation9], 0
          %s304 = sshll.u32 %s3, 4
          %s305 = int_to_ptr.hbm [resolvable:$true] %s304
          %s306 = sshll.u32 [#allocation8], 4
          %s307 = int_to_ptr.vmem [resolvable:$true] %s306
          %309 = dma.hbm_to_vmem [thread:$0]  %s305, 96, %s307, [#allocation9]
        $region20: #{tpu_custom_call.1} parent=11 // pred_fallthru
          _
        // Predicated region
        $region21: #{tpu_custom_call.1} parent=11 // pred_check
          %p310 = pneg %p144
        $region22: #{tpu_custom_call.1} parent=11 // pred_check_branch
          %312 = sbr.rel (%p310) target = $region24
        $region23: #{tpu_custom_call.1} parent=11 // pred_region
          %314 = vsyncadd [#allocation9], 0
          %s315 = sshll.u32 %s4, 4
          %s316 = int_to_ptr.hbm [resolvable:$true] %s315
          %s317 = sshll.u32 [#allocation10], 4
          %s318 = int_to_ptr.vmem [resolvable:$true] %s317
          %323 = dma.hbm_to_vmem [thread:$0]  %s316, 6144, %s318, [#allocation9], 384, 384, 24
        $region24: #{tpu_custom_call.1} parent=11 // pred_fallthru
          _
        // Predicated region
        $region25: #{tpu_custom_call.1} parent=11 // pred_check
          %p324 = pneg %p165
        $region26: #{tpu_custom_call.1} parent=11 // pred_check_branch
          %326 = sbr.rel (%p324) target = $region28
        $region27: #{tpu_custom_call.1} parent=11 // pred_region
          _
        $region28: #{tpu_custom_call.1} parent=11 // pred_fallthru
          _
      $region12: #{tpu_custom_call.1} parent=5 // pred_fallthru
        _
      %p327 = scmp.lt.s32.totalorder %s29, 2
      // Predicated region
      $region29: #{tpu_custom_call.1} parent=5 // pred_check
        %p328 = pneg %p327
      $region30: #{tpu_custom_call.1} parent=5 // pred_check_branch
        %330 = sbr.rel (%p328) target = $region32
      $region31: #{tpu_custom_call.1} parent=5 // pred_region
        // Predicated region
        $region33: #{tpu_custom_call.1} parent=31 // pred_check
          %p331 = pneg %p49
        $region34: #{tpu_custom_call.1} parent=31 // pred_check_branch
          %333 = sbr.rel (%p331) target = $region36
        $region35: #{tpu_custom_call.1} parent=31 // pred_region
          %s334 = sand.u32 %s39, 1
          %s335 = scalar_lea.sflag [#allocation3], %s334
          %s336 = sand.u32 %s39, 1
          %s337 = smul.addr %s336, 128
          %s338 = scalar_lea.vmem [#allocation2], %s337
          %s339 = smul.u32 16, %s29
          %341 = vsyncadd %s335, 0
          %s342 = smul.addr %s339, 8
          %s343 = scalar_lea.hbm %s0, %s342
          %s344 = sshll.u32 %s343, 4
          %s345 = int_to_ptr.hbm [resolvable:$true] %s344
          %s346 = sshll.u32 %s338, 4
          %s347 = int_to_ptr.vmem [resolvable:$true] %s346
          %352 = dma.hbm_to_vmem [thread:$0]  %s345, 2048, %s347, %s335, 128, 128, 8
        $region36: #{tpu_custom_call.1} parent=31 // pred_fallthru
          _
        // Predicated region
        $region37: #{tpu_custom_call.1} parent=31 // pred_check
          %p353 = pneg %p75
        $region38: #{tpu_custom_call.1} parent=31 // pred_check_branch
          %355 = sbr.rel (%p353) target = $region40
        $region39: #{tpu_custom_call.1} parent=31 // pred_region
          %s356 = sand.u32 %s29, 1
          %s357 = scalar_lea.sflag [#allocation6], %s356
          %s358 = sand.u32 %s65, 1
          %s359 = smul.addr %s358, 128
          %s360 = scalar_lea.vmem [#allocation5], %s359
          %s361 = smul.u32 16, %s29
          %363 = vsyncadd %s357, 0
          %s364 = smul.addr %s361, 8
          %s365 = scalar_lea.hbm %s1, %s364
          %s366 = sshll.u32 %s365, 4
          %s367 = int_to_ptr.hbm [resolvable:$true] %s366
          %s368 = sshll.u32 %s360, 4
          %s369 = int_to_ptr.vmem [resolvable:$true] %s368
          %374 = dma.hbm_to_vmem [thread:$0]  %s367, 2048, %s369, %s357, 128, 128, 8
        $region40: #{tpu_custom_call.1} parent=31 // pred_fallthru
          _
      $region32: #{tpu_custom_call.1} parent=5 // pred_fallthru
        _
      %p375 = scmp.le.s32.totalorder 1, %s29
      %p376 = scmp.lt.s32.totalorder %s29, 3
      %p377 = pnand %p375, %p376
      %p378 = pneg %p377
      // Predicated region
      $region41: #{tpu_custom_call.1} parent=5 // pred_check
        _
      $region42: #{tpu_custom_call.1} parent=5 // pred_check_branch
        %380 = sbr.rel (%p377) target = $region44
      $region43: #{tpu_custom_call.1} parent=5 // pred_region
        %s381 = ssub.s32 %s29, 1
        %s382 = sand.u32 %s42, 1
        %s383 = scalar_lea.sflag [#allocation3], %s382
        %s384 = sand.u32 %s42, 1
        %s385 = smul.addr %s384, 128
        %s386 = scalar_lea.vmem [#allocation2], %s385
        // Predicated region
        $region45: #{tpu_custom_call.1} parent=43 // pred_check
          %p387 = pneg %p55
        $region46: #{tpu_custom_call.1} parent=43 // pred_check_branch
          %389 = sbr.rel (%p387) target = $region48
        $region47: #{tpu_custom_call.1} parent=43 // pred_region
          %391 = dma.done %s383, 2048
        $region48: #{tpu_custom_call.1} parent=43 // pred_fallthru
          _
        %s392 = sand.u32 %s34, 1
        %s393 = scalar_lea.sflag [#allocation6], %s392
        %s394 = sand.u32 %s68, 1
        %s395 = smul.addr %s394, 128
        %s396 = scalar_lea.vmem [#allocation5], %s395
        // Predicated region
        $region49: #{tpu_custom_call.1} parent=43 // pred_check
          %p397 = pneg %p81
        $region50: #{tpu_custom_call.1} parent=43 // pred_check_branch
          %399 = sbr.rel (%p397) target = $region52
        $region51: #{tpu_custom_call.1} parent=43 // pred_region
          %401 = dma.done %s393, 2048
        $region52: #{tpu_custom_call.1} parent=43 // pred_fallthru
          _
        // Predicated region
        $region53: #{tpu_custom_call.1} parent=43 // pred_check
          %p402 = pneg %p102
        $region54: #{tpu_custom_call.1} parent=43 // pred_check_branch
          %404 = sbr.rel (%p402) target = $region56
        $region55: #{tpu_custom_call.1} parent=43 // pred_region
          %406 = dma.done [#allocation6], 12288
        $region56: #{tpu_custom_call.1} parent=43 // pred_fallthru
          _
        // Predicated region
        $region57: #{tpu_custom_call.1} parent=43 // pred_check
          %p407 = pneg %p123
        $region58: #{tpu_custom_call.1} parent=43 // pred_check_branch
          %409 = sbr.rel (%p407) target = $region60
        $region59: #{tpu_custom_call.1} parent=43 // pred_region
          %411 = dma.done [#allocation9], 96
        $region60: #{tpu_custom_call.1} parent=43 // pred_fallthru
          _
        // Predicated region
        $region61: #{tpu_custom_call.1} parent=43 // pred_check
          %p412 = pneg %p144
        $region62: #{tpu_custom_call.1} parent=43 // pred_check_branch
          %414 = sbr.rel (%p412) target = $region64
        $region63: #{tpu_custom_call.1} parent=43 // pred_region
          %416 = dma.done [#allocation9], 6144
        $region64: #{tpu_custom_call.1} parent=43 // pred_fallthru
          _
        %s417 = sand.u32 %s42, 1
        %s418 = scalar_lea.sflag [#allocation3], %s417
        %s419 = sand.u32 %s42, 1
        %s420 = smul.addr %s419, 128
        %s421 = scalar_lea.vmem [#allocation2], %s420
        %p422 = pneg %p55
        %p423 = pneg %p52
        %s424 = sand.u32 %s34, 1
        %s425 = scalar_lea.sflag [#allocation6], %s424
        %s426 = sand.u32 %s68, 1
        %s427 = smul.addr %s426, 128
        %s428 = scalar_lea.vmem [#allocation5], %s427
        %p429 = pneg %p81
        %p430 = pneg %p78
        %p431 = pneg %p102
        %p432 = pneg %p99
        %p433 = pneg %p123
        %p434 = pneg %p120
        %p435 = pneg %p144
        %p436 = pneg %p141
        %p437 = pneg %p165
        %p438 = pneg %p162
        %p439 = pneg %p191
        %p440 = pneg %p188
        %s441 = sand.u32 %s178, 1
        %s442 = sand.u32 %s178, 1
        %s443 = smul.addr %s442, 1024
        %s444 = scalar_lea.vmem [#allocation11], %s443
        %p445 = pneg %p217
        %p446 = pneg %p214
        %s447 = sand.u32 %s204, 1
        %s448 = scalar_lea.sflag [#allocation4], %s447
        %s449 = sand.u32 %s204, 1
        %s450 = smul.addr %s449, 128
        %s451 = scalar_lea.vmem [#allocation12], %s450
        %p452 = pneg %p243
        %p453 = pneg %p240
        %s454 = sand.u32 %s34, 1
        %s455 = scalar_lea.sflag [#allocation14], %s454
        %s456 = sand.u32 %s230, 1
        %s457 = smul.addr %s456, 128
        %s458 = scalar_lea.vmem [#allocation13], %s457
        %p459 = pneg %p269
        %p460 = pneg %p266
        %s461 = sand.u32 %s34, 1
        %s462 = scalar_lea.sflag [#allocation14], %s461
        %s463 = sand.u32 %s256, 1
        %s464 = smul.addr %s463, 512
        %s465 = scalar_lea.vmem [#allocation15], %s464
        %s466 = smul.u32 16, %s34
        %s467 = smul.u32 16, %s34
        %s468 = smul.u32 16, %s34
        %s469 = smul.u32 16, %s34
        %v470 = vld [vmem:[%s386] sm:$0xff]
        %v471 = vld [vmem:[%s386 + $0x8] sm:$0xff]
        %v472 = vld [vmem:[%s386 + $0x10] sm:$0xff]
        %v473 = vld [vmem:[%s386 + $0x18] sm:$0xff]
        %v474 = vld [vmem:[%s386 + $0x20] sm:$0xff]
        %v475 = vld [vmem:[%s386 + $0x28] sm:$0xff]
        %v476 = vld [vmem:[%s386 + $0x30] sm:$0xff]
        %v477 = vld [vmem:[%s386 + $0x38] sm:$0xff]
        %v478 = vld [vmem:[%s386 + $0x40] sm:$0xff]
        %v479 = vld [vmem:[%s386 + $0x48] sm:$0xff]
        %v480 = vld [vmem:[%s386 + $0x50] sm:$0xff]
        %v481 = vld [vmem:[%s386 + $0x58] sm:$0xff]
        %v482 = vld [vmem:[%s386 + $0x60] sm:$0xff]
        %v483 = vld [vmem:[%s386 + $0x68] sm:$0xff]
        %v484 = vld [vmem:[%s386 + $0x70] sm:$0xff]
        %v485 = vld [vmem:[%s386 + $0x78] sm:$0xff]
        %v486 = vld [vmem:[%s396] sm:$0xff]
        %v487 = vld [vmem:[%s396 + $0x8] sm:$0xff]
        %v488 = vld [vmem:[%s396 + $0x10] sm:$0xff]
        %v489 = vld [vmem:[%s396 + $0x18] sm:$0xff]
        %v490 = vld [vmem:[%s396 + $0x20] sm:$0xff]
        %v491 = vld [vmem:[%s396 + $0x28] sm:$0xff]
        %v492 = vld [vmem:[%s396 + $0x30] sm:$0xff]
        %v493 = vld [vmem:[%s396 + $0x38] sm:$0xff]
        %v494 = vld [vmem:[%s396 + $0x40] sm:$0xff]
        %v495 = vld [vmem:[%s396 + $0x48] sm:$0xff]
        %v496 = vld [vmem:[%s396 + $0x50] sm:$0xff]
        %v497 = vld [vmem:[%s396 + $0x58] sm:$0xff]
        %v498 = vld [vmem:[%s396 + $0x60] sm:$0xff]
        %v499 = vld [vmem:[%s396 + $0x68] sm:$0xff]
        %v500 = vld [vmem:[%s396 + $0x70] sm:$0xff]
        %v501 = vld [vmem:[%s396 + $0x78] sm:$0xff]
        %v502 = vxor.u32 %v486, 2147483648
        %v503 = vxor.u32 %v487, 2147483648
        %v504 = vxor.u32 %v488, 2147483648
        %v505 = vxor.u32 %v489, 2147483648
        %v506 = vxor.u32 %v490, 2147483648
        %v507 = vxor.u32 %v491, 2147483648
        %v508 = vxor.u32 %v492, 2147483648
        %v509 = vxor.u32 %v493, 2147483648
        %v510 = vxor.u32 %v494, 2147483648
        %v511 = vxor.u32 %v495, 2147483648
        %v512 = vxor.u32 %v496, 2147483648
        %v513 = vxor.u32 %v497, 2147483648
        %v514 = vxor.u32 %v498, 2147483648
        %v515 = vxor.u32 %v499, 2147483648
        %v516 = vxor.u32 %v500, 2147483648
        %v517 = vxor.u32 %v501, 2147483648
        %v518 = vmul.f32 %v502, 1.442695
        %v519 = vpow.pop %v518
        %v520 = vmul.f32 %v503, 1.442695
        %v521 = vpow.pop %v520
        %v522 = vmul.f32 %v504, 1.442695
        %v523 = vpow.pop %v522
        %v524 = vmul.f32 %v505, 1.442695
        %v525 = vpow.pop %v524
        %v526 = vmul.f32 %v506, 1.442695
        %v527 = vpow.pop %v526
        %v528 = vmul.f32 %v507, 1.442695
        %v529 = vpow.pop %v528
        %v530 = vmul.f32 %v508, 1.442695
        %v531 = vpow.pop %v530
        %v532 = vmul.f32 %v509, 1.442695
        %v533 = vpow.pop %v532
        %v534 = vmul.f32 %v510, 1.442695
        %v535 = vpow.pop %v534
        %v536 = vmul.f32 %v511, 1.442695
        %v537 = vpow.pop %v536
        %v538 = vmul.f32 %v512, 1.442695
        %v539 = vpow.pop %v538
        %v540 = vmul.f32 %v513, 1.442695
        %v541 = vpow.pop %v540
        %v542 = vmul.f32 %v514, 1.442695
        %v543 = vpow.pop %v542
        %v544 = vmul.f32 %v515, 1.442695
        %v545 = vpow.pop %v544
        %v546 = vmul.f32 %v516, 1.442695
        %v547 = vpow.pop %v546
        %v548 = vmul.f32 %v517, 1.442695
        %v549 = vpow.pop %v548
        %v550 = vadd.f32 %v519, 1.0
        %v551 = vadd.f32 %v521, 1.0
        %v552 = vadd.f32 %v523, 1.0
        %v553 = vadd.f32 %v525, 1.0
        %v554 = vadd.f32 %v527, 1.0
        %v555 = vadd.f32 %v529, 1.0
        %v556 = vadd.f32 %v531, 1.0
        %v557 = vadd.f32 %v533, 1.0
        %v558 = vadd.f32 %v535, 1.0
        %v559 = vadd.f32 %v537, 1.0
        %v560 = vadd.f32 %v539, 1.0
        %v561 = vadd.f32 %v541, 1.0
        %v562 = vadd.f32 %v543, 1.0
        %v563 = vadd.f32 %v545, 1.0
        %v564 = vadd.f32 %v547, 1.0
        %v565 = vadd.f32 %v549, 1.0
        %v566 = vrcp.pop %v550
        %v567 = vmul.f32 %v550, %v566
        %v568 = vsub.f32 1.0, %v567
        %v569 = vmul.f32 %v566, %v568
        %v570 = vadd.f32 %v566, %v569
        %vm571 = vweird.f32 %v550
        %vm572 = vweird.f32 %v566
        %vm573 = vmor %vm571, %vm572
        %v574 = vsel %vm573, %v566, %v570
        %v575 = vand.u32 2147483647, %v550
        %vm576 = vcmp.eq.f32.partialorder %v575, 8.507059e+37
        %v577 = vand.u32 %v550, 2147483648
        %v578 = vor.u32 1.1754944e-38, %v577
        %v579 = vsel %vm576, %v578, %v574
        %v580 = vmul.f32 1.0, %v579
        %v581 = vrcp.pop %v551
        %v582 = vmul.f32 %v551, %v581
        %v583 = vsub.f32 1.0, %v582
        %v584 = vmul.f32 %v581, %v583
        %v585 = vadd.f32 %v581, %v584
        %vm586 = vweird.f32 %v551
        %vm587 = vweird.f32 %v581
        %vm588 = vmor %vm586, %vm587
        %v589 = vsel %vm588, %v581, %v585
        %v590 = vand.u32 2147483647, %v551
        %vm591 = vcmp.eq.f32.partialorder %v590, 8.507059e+37
        %v592 = vand.u32 %v551, 2147483648
        %v593 = vor.u32 1.1754944e-38, %v592
        %v594 = vsel %vm591, %v593, %v589
        %v595 = vmul.f32 1.0, %v594
        %v596 = vrcp.pop %v552
        %v597 = vmul.f32 %v552, %v596
        %v598 = vsub.f32 1.0, %v597
        %v599 = vmul.f32 %v596, %v598
        %v600 = vadd.f32 %v596, %v599
        %vm601 = vweird.f32 %v552
        %vm602 = vweird.f32 %v596
        %vm603 = vmor %vm601, %vm602
        %v604 = vsel %vm603, %v596, %v600
        %v605 = vand.u32 2147483647, %v552
        %vm606 = vcmp.eq.f32.partialorder %v605, 8.507059e+37
        %v607 = vand.u32 %v552, 2147483648
        %v608 = vor.u32 1.1754944e-38, %v607
        %v609 = vsel %vm606, %v608, %v604
        %v610 = vmul.f32 1.0, %v609
        %v611 = vrcp.pop %v553
        %v612 = vmul.f32 %v553, %v611
        %v613 = vsub.f32 1.0, %v612
        %v614 = vmul.f32 %v611, %v613
        %v615 = vadd.f32 %v611, %v614
        %vm616 = vweird.f32 %v553
        %vm617 = vweird.f32 %v611
        %vm618 = vmor %vm616, %vm617
        %v619 = vsel %vm618, %v611, %v615
        %v620 = vand.u32 2147483647, %v553
        %vm621 = vcmp.eq.f32.partialorder %v620, 8.507059e+37
        %v622 = vand.u32 %v553, 2147483648
        %v623 = vor.u32 1.1754944e-38, %v622
        %v624 = vsel %vm621, %v623, %v619
        %v625 = vmul.f32 1.0, %v624
        %v626 = vrcp.pop %v554
        %v627 = vmul.f32 %v554, %v626
        %v628 = vsub.f32 1.0, %v627
        %v629 = vmul.f32 %v626, %v628
        %v630 = vadd.f32 %v626, %v629
        %vm631 = vweird.f32 %v554
        %vm632 = vweird.f32 %v626
        %vm633 = vmor %vm631, %vm632
        %v634 = vsel %vm633, %v626, %v630
        %v635 = vand.u32 2147483647, %v554
        %vm636 = vcmp.eq.f32.partialorder %v635, 8.507059e+37
        %v637 = vand.u32 %v554, 2147483648
        %v638 = vor.u32 1.1754944e-38, %v637
        %v639 = vsel %vm636, %v638, %v634
        %v640 = vmul.f32 1.0, %v639
        %v641 = vrcp.pop %v555
        %v642 = vmul.f32 %v555, %v641
        %v643 = vsub.f32 1.0, %v642
        %v644 = vmul.f32 %v641, %v643
        %v645 = vadd.f32 %v641, %v644
        %vm646 = vweird.f32 %v555
        %vm647 = vweird.f32 %v641
        %vm648 = vmor %vm646, %vm647
        %v649 = vsel %vm648, %v641, %v645
        %v650 = vand.u32 2147483647, %v555
        %vm651 = vcmp.eq.f32.partialorder %v650, 8.507059e+37
        %v652 = vand.u32 %v555, 2147483648
        %v653 = vor.u32 1.1754944e-38, %v652
        %v654 = vsel %vm651, %v653, %v649
        %v655 = vmul.f32 1.0, %v654
        %v656 = vrcp.pop %v556
        %v657 = vmul.f32 %v556, %v656
        %v658 = vsub.f32 1.0, %v657
        %v659 = vmul.f32 %v656, %v658
        %v660 = vadd.f32 %v656, %v659
        %vm661 = vweird.f32 %v556
        %vm662 = vweird.f32 %v656
        %vm663 = vmor %vm661, %vm662
        %v664 = vsel %vm663, %v656, %v660
        %v665 = vand.u32 2147483647, %v556
        %vm666 = vcmp.eq.f32.partialorder %v665, 8.507059e+37
        %v667 = vand.u32 %v556, 2147483648
        %v668 = vor.u32 1.1754944e-38, %v667
        %v669 = vsel %vm666, %v668, %v664
        %v670 = vmul.f32 1.0, %v669
        %v671 = vrcp.pop %v557
        %v672 = vmul.f32 %v557, %v671
        %v673 = vsub.f32 1.0, %v672
        %v674 = vmul.f32 %v671, %v673
        %v675 = vadd.f32 %v671, %v674
        %vm676 = vweird.f32 %v557
        %vm677 = vweird.f32 %v671
        %vm678 = vmor %vm676, %vm677
        %v679 = vsel %vm678, %v671, %v675
        %v680 = vand.u32 2147483647, %v557
        %vm681 = vcmp.eq.f32.partialorder %v680, 8.507059e+37
        %v682 = vand.u32 %v557, 2147483648
        %v683 = vor.u32 1.1754944e-38, %v682
        %v684 = vsel %vm681, %v683, %v679
        %v685 = vmul.f32 1.0, %v684
        %v686 = vrcp.pop %v558
        %v687 = vmul.f32 %v558, %v686
        %v688 = vsub.f32 1.0, %v687
        %v689 = vmul.f32 %v686, %v688
        %v690 = vadd.f32 %v686, %v689
        %vm691 = vweird.f32 %v558
        %vm692 = vweird.f32 %v686
        %vm693 = vmor %vm691, %vm692
        %v694 = vsel %vm693, %v686, %v690
        %v695 = vand.u32 2147483647, %v558
        %vm696 = vcmp.eq.f32.partialorder %v695, 8.507059e+37
        %v697 = vand.u32 %v558, 2147483648
        %v698 = vor.u32 1.1754944e-38, %v697
        %v699 = vsel %vm696, %v698, %v694
        %v700 = vmul.f32 1.0, %v699
        %v701 = vrcp.pop %v559
        %v702 = vmul.f32 %v559, %v701
        %v703 = vsub.f32 1.0, %v702
        %v704 = vmul.f32 %v701, %v703
        %v705 = vadd.f32 %v701, %v704
        %vm706 = vweird.f32 %v559
        %vm707 = vweird.f32 %v701
        %vm708 = vmor %vm706, %vm707
        %v709 = vsel %vm708, %v701, %v705
        %v710 = vand.u32 2147483647, %v559
        %vm711 = vcmp.eq.f32.partialorder %v710, 8.507059e+37
        %v712 = vand.u32 %v559, 2147483648
        %v713 = vor.u32 1.1754944e-38, %v712
        %v714 = vsel %vm711, %v713, %v709
        %v715 = vmul.f32 1.0, %v714
        %v716 = vrcp.pop %v560
        %v717 = vmul.f32 %v560, %v716
        %v718 = vsub.f32 1.0, %v717
        %v719 = vmul.f32 %v716, %v718
        %v720 = vadd.f32 %v716, %v719
        %vm721 = vweird.f32 %v560
        %vm722 = vweird.f32 %v716
        %vm723 = vmor %vm721, %vm722
        %v724 = vsel %vm723, %v716, %v720
        %v725 = vand.u32 2147483647, %v560
        %vm726 = vcmp.eq.f32.partialorder %v725, 8.507059e+37
        %v727 = vand.u32 %v560, 2147483648
        %v728 = vor.u32 1.1754944e-38, %v727
        %v729 = vsel %vm726, %v728, %v724
        %v730 = vmul.f32 1.0, %v729
        %v731 = vrcp.pop %v561
        %v732 = vmul.f32 %v561, %v731
        %v733 = vsub.f32 1.0, %v732
        %v734 = vmul.f32 %v731, %v733
        %v735 = vadd.f32 %v731, %v734
        %vm736 = vweird.f32 %v561
        %vm737 = vweird.f32 %v731
        %vm738 = vmor %vm736, %vm737
        %v739 = vsel %vm738, %v731, %v735
        %v740 = vand.u32 2147483647, %v561
        %vm741 = vcmp.eq.f32.partialorder %v740, 8.507059e+37
        %v742 = vand.u32 %v561, 2147483648
        %v743 = vor.u32 1.1754944e-38, %v742
        %v744 = vsel %vm741, %v743, %v739
        %v745 = vmul.f32 1.0, %v744
        %v746 = vrcp.pop %v562
        %v747 = vmul.f32 %v562, %v746
        %v748 = vsub.f32 1.0, %v747
        %v749 = vmul.f32 %v746, %v748
        %v750 = vadd.f32 %v746, %v749
        %vm751 = vweird.f32 %v562
        %vm752 = vweird.f32 %v746
        %vm753 = vmor %vm751, %vm752
        %v754 = vsel %vm753, %v746, %v750
        %v755 = vand.u32 2147483647, %v562
        %vm756 = vcmp.eq.f32.partialorder %v755, 8.507059e+37
        %v757 = vand.u32 %v562, 2147483648
        %v758 = vor.u32 1.1754944e-38, %v757
        %v759 = vsel %vm756, %v758, %v754
        %v760 = vmul.f32 1.0, %v759
        %v761 = vrcp.pop %v563
        %v762 = vmul.f32 %v563, %v761
        %v763 = vsub.f32 1.0, %v762
        %v764 = vmul.f32 %v761, %v763
        %v765 = vadd.f32 %v761, %v764
        %vm766 = vweird.f32 %v563
        %vm767 = vweird.f32 %v761
        %vm768 = vmor %vm766, %vm767
        %v769 = vsel %vm768, %v761, %v765
        %v770 = vand.u32 2147483647, %v563
        %vm771 = vcmp.eq.f32.partialorder %v770, 8.507059e+37
        %v772 = vand.u32 %v563, 2147483648
        %v773 = vor.u32 1.1754944e-38, %v772
        %v774 = vsel %vm771, %v773, %v769
        %v775 = vmul.f32 1.0, %v774
        %v776 = vrcp.pop %v564
        %v777 = vmul.f32 %v564, %v776
        %v778 = vsub.f32 1.0, %v777
        %v779 = vmul.f32 %v776, %v778
        %v780 = vadd.f32 %v776, %v779
        %vm781 = vweird.f32 %v564
        %vm782 = vweird.f32 %v776
        %vm783 = vmor %vm781, %vm782
        %v784 = vsel %vm783, %v776, %v780
        %v785 = vand.u32 2147483647, %v564
        %vm786 = vcmp.eq.f32.partialorder %v785, 8.507059e+37
        %v787 = vand.u32 %v564, 2147483648
        %v788 = vor.u32 1.1754944e-38, %v787
        %v789 = vsel %vm786, %v788, %v784
        %v790 = vmul.f32 1.0, %v789
        %v791 = vrcp.pop %v565
        %v792 = vmul.f32 %v565, %v791
        %v793 = vsub.f32 1.0, %v792
        %v794 = vmul.f32 %v791, %v793
        %v795 = vadd.f32 %v791, %v794
        %vm796 = vweird.f32 %v565
        %vm797 = vweird.f32 %v791
        %vm798 = vmor %vm796, %vm797
        %v799 = vsel %vm798, %v791, %v795
        %v800 = vand.u32 2147483647, %v565
        %vm801 = vcmp.eq.f32.partialorder %v800, 8.507059e+37
        %v802 = vand.u32 %v565, 2147483648
        %v803 = vor.u32 1.1754944e-38, %v802
        %v804 = vsel %vm801, %v803, %v799
        %v805 = vmul.f32 1.0, %v804
        %v806 = vmul.f32 %v486, %v580
        %v807 = vmul.f32 %v487, %v595
        %v808 = vmul.f32 %v488, %v610
        %v809 = vmul.f32 %v489, %v625
        %v810 = vmul.f32 %v490, %v640
        %v811 = vmul.f32 %v491, %v655
        %v812 = vmul.f32 %v492, %v670
        %v813 = vmul.f32 %v493, %v685
        %v814 = vmul.f32 %v494, %v700
        %v815 = vmul.f32 %v495, %v715
        %v816 = vmul.f32 %v496, %v730
        %v817 = vmul.f32 %v497, %v745
        %v818 = vmul.f32 %v498, %v760
        %v819 = vmul.f32 %v499, %v775
        %v820 = vmul.f32 %v500, %v790
        %v821 = vmul.f32 %v501, %v805
        %v822 = vld [vmem:[#allocation7] sm:$0xff]
        %v823 = vld [vmem:[#allocation7 + $0x8] sm:$0xff]
        %v824 = vld [vmem:[#allocation7 + $0x10] sm:$0xff]
        %v825 = vld [vmem:[#allocation7 + $0x18] sm:$0xff]
        %v826 = vld [vmem:[#allocation7 + $0x20] sm:$0xff]
        %v827 = vld [vmem:[#allocation7 + $0x28] sm:$0xff]
        %v828 = vld [vmem:[#allocation7 + $0x30] sm:$0xff]
        %v829 = vld [vmem:[#allocation7 + $0x38] sm:$0xff]
        %v830 = vld [vmem:[#allocation7 + $0x40] sm:$0xff]
        %v831 = vld [vmem:[#allocation7 + $0x48] sm:$0xff]
        %v832 = vld [vmem:[#allocation7 + $0x50] sm:$0xff]
        %v833 = vld [vmem:[#allocation7 + $0x58] sm:$0xff]
        %v834 = vld [vmem:[#allocation7 + $0x60] sm:$0xff]
        %v835 = vld [vmem:[#allocation7 + $0x68] sm:$0xff]
        %v836 = vld [vmem:[#allocation7 + $0x70] sm:$0xff]
        %v837 = vld [vmem:[#allocation7 + $0x78] sm:$0xff]
        %v838 = vld [vmem:[#allocation7 + $0x80] sm:$0xff]
        %v839 = vld [vmem:[#allocation7 + $0x88] sm:$0xff]
        %v840 = vld [vmem:[#allocation7 + $0x90] sm:$0xff]
        %v841 = vld [vmem:[#allocation7 + $0x98] sm:$0xff]
        %v842 = vld [vmem:[#allocation7 + $0xa0] sm:$0xff]
        %v843 = vld [vmem:[#allocation7 + $0xa8] sm:$0xff]
        %v844 = vld [vmem:[#allocation7 + $0xb0] sm:$0xff]
        %v845 = vld [vmem:[#allocation7 + $0xb8] sm:$0xff]
        %v846 = vld [vmem:[#allocation7 + $0xc0] sm:$0xff]
        %v847 = vld [vmem:[#allocation7 + $0xc8] sm:$0xff]
        %v848 = vld [vmem:[#allocation7 + $0xd0] sm:$0xff]
        %v849 = vld [vmem:[#allocation7 + $0xd8] sm:$0xff]
        %v850 = vld [vmem:[#allocation7 + $0xe0] sm:$0xff]
        %v851 = vld [vmem:[#allocation7 + $0xe8] sm:$0xff]
        %v852 = vld [vmem:[#allocation7 + $0xf0] sm:$0xff]
        %v853 = vld [vmem:[#allocation7 + $0xf8] sm:$0xff]
        %v854 = vld [vmem:[#allocation7 + $0x100] sm:$0xff]
        %v855 = vld [vmem:[#allocation7 + $0x108] sm:$0xff]
        %v856 = vld [vmem:[#allocation7 + $0x110] sm:$0xff]
        %v857 = vld [vmem:[#allocation7 + $0x118] sm:$0xff]
        %v858 = vld [vmem:[#allocation7 + $0x120] sm:$0xff]
        %v859 = vld [vmem:[#allocation7 + $0x128] sm:$0xff]
        %v860 = vld [vmem:[#allocation7 + $0x130] sm:$0xff]
        %v861 = vld [vmem:[#allocation7 + $0x138] sm:$0xff]
        %v862 = vld [vmem:[#allocation7 + $0x140] sm:$0xff]
        %v863 = vld [vmem:[#allocation7 + $0x148] sm:$0xff]
        %v864 = vld [vmem:[#allocation7 + $0x150] sm:$0xff]
        %v865 = vld [vmem:[#allocation7 + $0x158] sm:$0xff]
        %v866 = vld [vmem:[#allocation7 + $0x160] sm:$0xff]
        %v867 = vld [vmem:[#allocation7 + $0x168] sm:$0xff]
        %v868 = vld [vmem:[#allocation7 + $0x170] sm:$0xff]
        %v869 = vld [vmem:[#allocation7 + $0x178] sm:$0xff]
        %v870 = vld [vmem:[#allocation7 + $0x180] sm:$0xff]
        %v871 = vld [vmem:[#allocation7 + $0x188] sm:$0xff]
        %v872 = vld [vmem:[#allocation7 + $0x190] sm:$0xff]
        %v873 = vld [vmem:[#allocation7 + $0x198] sm:$0xff]
        %v874 = vld [vmem:[#allocation7 + $0x1a0] sm:$0xff]
        %v875 = vld [vmem:[#allocation7 + $0x1a8] sm:$0xff]
        %v876 = vld [vmem:[#allocation7 + $0x1b0] sm:$0xff]
        %v877 = vld [vmem:[#allocation7 + $0x1b8] sm:$0xff]
        %v878 = vld [vmem:[#allocation7 + $0x1c0] sm:$0xff]
        %v879 = vld [vmem:[#allocation7 + $0x1c8] sm:$0xff]
        %v880 = vld [vmem:[#allocation7 + $0x1d0] sm:$0xff]
        %v881 = vld [vmem:[#allocation7 + $0x1d8] sm:$0xff]
        %v882 = vld [vmem:[#allocation7 + $0x1e0] sm:$0xff]
        %v883 = vld [vmem:[#allocation7 + $0x1e8] sm:$0xff]
        %v884 = vld [vmem:[#allocation7 + $0x1f0] sm:$0xff]
        %v885 = vld [vmem:[#allocation7 + $0x1f8] sm:$0xff]
        %v886 = vld [vmem:[#allocation7 + $0x200] sm:$0xff]
        %v887 = vld [vmem:[#allocation7 + $0x208] sm:$0xff]
        %v888 = vld [vmem:[#allocation7 + $0x210] sm:$0xff]
        %v889 = vld [vmem:[#allocation7 + $0x218] sm:$0xff]
        %v890 = vld [vmem:[#allocation7 + $0x220] sm:$0xff]
        %v891 = vld [vmem:[#allocation7 + $0x228] sm:$0xff]
        %v892 = vld [vmem:[#allocation7 + $0x230] sm:$0xff]
        %v893 = vld [vmem:[#allocation7 + $0x238] sm:$0xff]
        %v894 = vld [vmem:[#allocation7 + $0x240] sm:$0xff]
        %v895 = vld [vmem:[#allocation7 + $0x248] sm:$0xff]
        %v896 = vld [vmem:[#allocation7 + $0x250] sm:$0xff]
        %v897 = vld [vmem:[#allocation7 + $0x258] sm:$0xff]
        %v898 = vld [vmem:[#allocation7 + $0x260] sm:$0xff]
        %v899 = vld [vmem:[#allocation7 + $0x268] sm:$0xff]
        %v900 = vld [vmem:[#allocation7 + $0x270] sm:$0xff]
        %v901 = vld [vmem:[#allocation7 + $0x278] sm:$0xff]
        %v902 = vld [vmem:[#allocation7 + $0x280] sm:$0xff]
        %v903 = vld [vmem:[#allocation7 + $0x288] sm:$0xff]
        %v904 = vld [vmem:[#allocation7 + $0x290] sm:$0xff]
        %v905 = vld [vmem:[#allocation7 + $0x298] sm:$0xff]
        %v906 = vld [vmem:[#allocation7 + $0x2a0] sm:$0xff]
        %v907 = vld [vmem:[#allocation7 + $0x2a8] sm:$0xff]
        %v908 = vld [vmem:[#allocation7 + $0x2b0] sm:$0xff]
        %v909 = vld [vmem:[#allocation7 + $0x2b8] sm:$0xff]
        %v910 = vld [vmem:[#allocation7 + $0x2c0] sm:$0xff]
        %v911 = vld [vmem:[#allocation7 + $0x2c8] sm:$0xff]
        %v912 = vld [vmem:[#allocation7 + $0x2d0] sm:$0xff]
        %v913 = vld [vmem:[#allocation7 + $0x2d8] sm:$0xff]
        %v914 = vld [vmem:[#allocation7 + $0x2e0] sm:$0xff]
        %v915 = vld [vmem:[#allocation7 + $0x2e8] sm:$0xff]
        %v916 = vld [vmem:[#allocation7 + $0x2f0] sm:$0xff]
        %v917 = vld [vmem:[#allocation7 + $0x2f8] sm:$0xff]
        %v918 = vld [vmem:[#allocation8] sm:$0x3f]
        %v920 = vperm.slane %v918, 0
        %v921 = vperm.slane %v918, 1
        %v922 = vperm.slane %v918, 2
        %v923 = vperm.slane %v918, 3
        %v924 = vperm.slane %v918, 4
        %v925 = vperm.slane %v918, 5
        %932 = vmatpush.msra.mxu0 %v912
        %933 = vmatpush.msra.mxu0 %v906
        %934 = vmatpush.msra.mxu0 %v900
        %935 = vmatpush.msra.mxu0 %v894
        %936 = vmatpush.msra.mxu0 %v888
        %937 = vmatpush.msra.mxu0 %v882
        %938 = vmatpush.msra.mxu0 %v876
        %939 = vmatpush.msra.mxu0 %v870
        %940 = vmatpush.msra.mxu0 %v864
        %941 = vmatpush.msra.mxu0 %v858
        %942 = vmatpush.msra.mxu0 %v852
        %943 = vmatpush.msra.mxu0 %v846
        %944 = vmatpush.msra.mxu0 %v840
        %945 = vmatpush.msra.mxu0 %v834
        %946 = vmatpush.msra.mxu0 %v828
        %947 = vmatpush.msra.mxu0 %v822
        %948 = vmatmul.f32.gmra.mxu0 %v806
        %v949 = vpop.f32.mrf.mxu0
        %v950 = vadd.f32 %v920, %v949
        %951 = vmatmul.f32.gmra.mxu0 %v807
        %v952 = vpop.f32.mrf.mxu0
        %v953 = vadd.f32 %v920, %v952
        %954 = vmatmul.f32.gmra.mxu0 %v808
        %v955 = vpop.f32.mrf.mxu0
        %v956 = vadd.f32 %v920, %v955
        %957 = vmatmul.f32.gmra.mxu0 %v809
        %v958 = vpop.f32.mrf.mxu0
        %v959 = vadd.f32 %v920, %v958
        %960 = vmatmul.f32.gmra.mxu0 %v810
        %v961 = vpop.f32.mrf.mxu0
        %v962 = vadd.f32 %v920, %v961
        %963 = vmatmul.f32.gmra.mxu0 %v811
        %v964 = vpop.f32.mrf.mxu0
        %v965 = vadd.f32 %v920, %v964
        %966 = vmatmul.f32.gmra.mxu0 %v812
        %v967 = vpop.f32.mrf.mxu0
        %v968 = vadd.f32 %v920, %v967
        %969 = vmatmul.f32.gmra.mxu0 %v813
        %v970 = vpop.f32.mrf.mxu0
        %v971 = vadd.f32 %v920, %v970
        %972 = vmatmul.f32.gmra.mxu0 %v814
        %v973 = vpop.f32.mrf.mxu0
        %v974 = vadd.f32 %v920, %v973
        %975 = vmatmul.f32.gmra.mxu0 %v815
        %v976 = vpop.f32.mrf.mxu0
        %v977 = vadd.f32 %v920, %v976
        %978 = vmatmul.f32.gmra.mxu0 %v816
        %v979 = vpop.f32.mrf.mxu0
        %v980 = vadd.f32 %v920, %v979
        %981 = vmatmul.f32.gmra.mxu0 %v817
        %v982 = vpop.f32.mrf.mxu0
        %v983 = vadd.f32 %v920, %v982
        %984 = vmatmul.f32.gmra.mxu0 %v818
        %v985 = vpop.f32.mrf.mxu0
        %v986 = vadd.f32 %v920, %v985
        %987 = vmatmul.f32.gmra.mxu0 %v819
        %v988 = vpop.f32.mrf.mxu0
        %v989 = vadd.f32 %v920, %v988
        %990 = vmatmul.f32.gmra.mxu0 %v820
        %v991 = vpop.f32.mrf.mxu0
        %v992 = vadd.f32 %v920, %v991
        %993 = vmatmul.f32.gmra.mxu0 %v821
        %v994 = vpop.f32.mrf.mxu0
        %v995 = vadd.f32 %v920, %v994
        %996 = vdwg.mxu0
        %997 = vmatpush.msra.mxu0 %v913
        %998 = vmatpush.msra.mxu0 %v907
        %999 = vmatpush.msra.mxu0 %v901
        %1000 = vmatpush.msra.mxu0 %v895
        %1001 = vmatpush.msra.mxu0 %v889
        %1002 = vmatpush.msra.mxu0 %v883
        %1003 = vmatpush.msra.mxu0 %v877
        %1004 = vmatpush.msra.mxu0 %v871
        %1005 = vmatpush.msra.mxu0 %v865
        %1006 = vmatpush.msra.mxu0 %v859
        %1007 = vmatpush.msra.mxu0 %v853
        %1008 = vmatpush.msra.mxu0 %v847
        %1009 = vmatpush.msra.mxu0 %v841
        %1010 = vmatpush.msra.mxu0 %v835
        %1011 = vmatpush.msra.mxu0 %v829
        %1012 = vmatpush.msra.mxu0 %v823
        %1013 = vmatmul.f32.gmra.mxu0 %v806
        %v1014 = vpop.f32.mrf.mxu0
        %v1015 = vadd.f32 %v921, %v1014
        %1016 = vmatmul.f32.gmra.mxu0 %v807
        %v1017 = vpop.f32.mrf.mxu0
        %v1018 = vadd.f32 %v921, %v1017
        %1019 = vmatmul.f32.gmra.mxu0 %v808
        %v1020 = vpop.f32.mrf.mxu0
        %v1021 = vadd.f32 %v921, %v1020
        %1022 = vmatmul.f32.gmra.mxu0 %v809
        %v1023 = vpop.f32.mrf.mxu0
        %v1024 = vadd.f32 %v921, %v1023
        %1025 = vmatmul.f32.gmra.mxu0 %v810
        %v1026 = vpop.f32.mrf.mxu0
        %v1027 = vadd.f32 %v921, %v1026
        %1028 = vmatmul.f32.gmra.mxu0 %v811
        %v1029 = vpop.f32.mrf.mxu0
        %v1030 = vadd.f32 %v921, %v1029
        %1031 = vmatmul.f32.gmra.mxu0 %v812
        %v1032 = vpop.f32.mrf.mxu0
        %v1033 = vadd.f32 %v921, %v1032
        %1034 = vmatmul.f32.gmra.mxu0 %v813
        %v1035 = vpop.f32.mrf.mxu0
        %v1036 = vadd.f32 %v921, %v1035
        %1037 = vmatmul.f32.gmra.mxu0 %v814
        %v1038 = vpop.f32.mrf.mxu0
        %v1039 = vadd.f32 %v921, %v1038
        %1040 = vmatmul.f32.gmra.mxu0 %v815
        %v1041 = vpop.f32.mrf.mxu0
        %v1042 = vadd.f32 %v921, %v1041
        %1043 = vmatmul.f32.gmra.mxu0 %v816
        %v1044 = vpop.f32.mrf.mxu0
        %v1045 = vadd.f32 %v921, %v1044
        %1046 = vmatmul.f32.gmra.mxu0 %v817
        %v1047 = vpop.f32.mrf.mxu0
        %v1048 = vadd.f32 %v921, %v1047
        %1049 = vmatmul.f32.gmra.mxu0 %v818
        %v1050 = vpop.f32.mrf.mxu0
        %v1051 = vadd.f32 %v921, %v1050
        %1052 = vmatmul.f32.gmra.mxu0 %v819
        %v1053 = vpop.f32.mrf.mxu0
        %v1054 = vadd.f32 %v921, %v1053
        %1055 = vmatmul.f32.gmra.mxu0 %v820
        %v1056 = vpop.f32.mrf.mxu0
        %v1057 = vadd.f32 %v921, %v1056
        %1058 = vmatmul.f32.gmra.mxu0 %v821
        %v1059 = vpop.f32.mrf.mxu0
        %v1060 = vadd.f32 %v921, %v1059
        %1061 = vdwg.mxu0
        %1062 = vmatpush.msra.mxu0 %v914
        %1063 = vmatpush.msra.mxu0 %v908
        %1064 = vmatpush.msra.mxu0 %v902
        %1065 = vmatpush.msra.mxu0 %v896
        %1066 = vmatpush.msra.mxu0 %v890
        %1067 = vmatpush.msra.mxu0 %v884
        %1068 = vmatpush.msra.mxu0 %v878
        %1069 = vmatpush.msra.mxu0 %v872
        %1070 = vmatpush.msra.mxu0 %v866
        %1071 = vmatpush.msra.mxu0 %v860
        %1072 = vmatpush.msra.mxu0 %v854
        %1073 = vmatpush.msra.mxu0 %v848
        %1074 = vmatpush.msra.mxu0 %v842
        %1075 = vmatpush.msra.mxu0 %v836
        %1076 = vmatpush.msra.mxu0 %v830
        %1077 = vmatpush.msra.mxu0 %v824
        %1078 = vmatmul.f32.gmra.mxu0 %v806
        %v1079 = vpop.f32.mrf.mxu0
        %v1080 = vadd.f32 %v922, %v1079
        %1081 = vmatmul.f32.gmra.mxu0 %v807
        %v1082 = vpop.f32.mrf.mxu0
        %v1083 = vadd.f32 %v922, %v1082
        %1084 = vmatmul.f32.gmra.mxu0 %v808
        %v1085 = vpop.f32.mrf.mxu0
        %v1086 = vadd.f32 %v922, %v1085
        %1087 = vmatmul.f32.gmra.mxu0 %v809
        %v1088 = vpop.f32.mrf.mxu0
        %v1089 = vadd.f32 %v922, %v1088
        %1090 = vmatmul.f32.gmra.mxu0 %v810
        %v1091 = vpop.f32.mrf.mxu0
        %v1092 = vadd.f32 %v922, %v1091
        %1093 = vmatmul.f32.gmra.mxu0 %v811
        %v1094 = vpop.f32.mrf.mxu0
        %v1095 = vadd.f32 %v922, %v1094
        %1096 = vmatmul.f32.gmra.mxu0 %v812
        %v1097 = vpop.f32.mrf.mxu0
        %v1098 = vadd.f32 %v922, %v1097
        %1099 = vmatmul.f32.gmra.mxu0 %v813
        %v1100 = vpop.f32.mrf.mxu0
        %v1101 = vadd.f32 %v922, %v1100
        %1102 = vmatmul.f32.gmra.mxu0 %v814
        %v1103 = vpop.f32.mrf.mxu0
        %v1104 = vadd.f32 %v922, %v1103
        %1105 = vmatmul.f32.gmra.mxu0 %v815
        %v1106 = vpop.f32.mrf.mxu0
        %v1107 = vadd.f32 %v922, %v1106
        %1108 = vmatmul.f32.gmra.mxu0 %v816
        %v1109 = vpop.f32.mrf.mxu0
        %v1110 = vadd.f32 %v922, %v1109
        %1111 = vmatmul.f32.gmra.mxu0 %v817
        %v1112 = vpop.f32.mrf.mxu0
        %v1113 = vadd.f32 %v922, %v1112
        %1114 = vmatmul.f32.gmra.mxu0 %v818
        %v1115 = vpop.f32.mrf.mxu0
        %v1116 = vadd.f32 %v922, %v1115
        %1117 = vmatmul.f32.gmra.mxu0 %v819
        %v1118 = vpop.f32.mrf.mxu0
        %v1119 = vadd.f32 %v922, %v1118
        %1120 = vmatmul.f32.gmra.mxu0 %v820
        %v1121 = vpop.f32.mrf.mxu0
        %v1122 = vadd.f32 %v922, %v1121
        %1123 = vmatmul.f32.gmra.mxu0 %v821
        %v1124 = vpop.f32.mrf.mxu0
        %v1125 = vadd.f32 %v922, %v1124
        %1126 = vdwg.mxu0
        %1127 = vmatpush.msra.mxu0 %v915
        %1128 = vmatpush.msra.mxu0 %v909
        %1129 = vmatpush.msra.mxu0 %v903
        %1130 = vmatpush.msra.mxu0 %v897
        %1131 = vmatpush.msra.mxu0 %v891
        %1132 = vmatpush.msra.mxu0 %v885
        %1133 = vmatpush.msra.mxu0 %v879
        %1134 = vmatpush.msra.mxu0 %v873
        %1135 = vmatpush.msra.mxu0 %v867
        %1136 = vmatpush.msra.mxu0 %v861
        %1137 = vmatpush.msra.mxu0 %v855
        %1138 = vmatpush.msra.mxu0 %v849
        %1139 = vmatpush.msra.mxu0 %v843
        %1140 = vmatpush.msra.mxu0 %v837
        %1141 = vmatpush.msra.mxu0 %v831
        %1142 = vmatpush.msra.mxu0 %v825
        %1143 = vmatmul.f32.gmra.mxu0 %v806
        %v1144 = vpop.f32.mrf.mxu0
        %v1145 = vadd.f32 %v923, %v1144
        %1146 = vmatmul.f32.gmra.mxu0 %v807
        %v1147 = vpop.f32.mrf.mxu0
        %v1148 = vadd.f32 %v923, %v1147
        %1149 = vmatmul.f32.gmra.mxu0 %v808
        %v1150 = vpop.f32.mrf.mxu0
        %v1151 = vadd.f32 %v923, %v1150
        %1152 = vmatmul.f32.gmra.mxu0 %v809
        %v1153 = vpop.f32.mrf.mxu0
        %v1154 = vadd.f32 %v923, %v1153
        %1155 = vmatmul.f32.gmra.mxu0 %v810
        %v1156 = vpop.f32.mrf.mxu0
        %v1157 = vadd.f32 %v923, %v1156
        %1158 = vmatmul.f32.gmra.mxu0 %v811
        %v1159 = vpop.f32.mrf.mxu0
        %v1160 = vadd.f32 %v923, %v1159
        %1161 = vmatmul.f32.gmra.mxu0 %v812
        %v1162 = vpop.f32.mrf.mxu0
        %v1163 = vadd.f32 %v923, %v1162
        %1164 = vmatmul.f32.gmra.mxu0 %v813
        %v1165 = vpop.f32.mrf.mxu0
        %v1166 = vadd.f32 %v923, %v1165
        %1167 = vmatmul.f32.gmra.mxu0 %v814
        %v1168 = vpop.f32.mrf.mxu0
        %v1169 = vadd.f32 %v923, %v1168
        %1170 = vmatmul.f32.gmra.mxu0 %v815
        %v1171 = vpop.f32.mrf.mxu0
        %v1172 = vadd.f32 %v923, %v1171
        %1173 = vmatmul.f32.gmra.mxu0 %v816
        %v1174 = vpop.f32.mrf.mxu0
        %v1175 = vadd.f32 %v923, %v1174
        %1176 = vmatmul.f32.gmra.mxu0 %v817
        %v1177 = vpop.f32.mrf.mxu0
        %v1178 = vadd.f32 %v923, %v1177
        %1179 = vmatmul.f32.gmra.mxu0 %v818
        %v1180 = vpop.f32.mrf.mxu0
        %v1181 = vadd.f32 %v923, %v1180
        %1182 = vmatmul.f32.gmra.mxu0 %v819
        %v1183 = vpop.f32.mrf.mxu0
        %v1184 = vadd.f32 %v923, %v1183
        %1185 = vmatmul.f32.gmra.mxu0 %v820
        %v1186 = vpop.f32.mrf.mxu0
        %v1187 = vadd.f32 %v923, %v1186
        %1188 = vmatmul.f32.gmra.mxu0 %v821
        %v1189 = vpop.f32.mrf.mxu0
        %v1190 = vadd.f32 %v923, %v1189
        %1191 = vdwg.mxu0
        %1192 = vmatpush.msra.mxu0 %v916
        %1193 = vmatpush.msra.mxu0 %v910
        %1194 = vmatpush.msra.mxu0 %v904
        %1195 = vmatpush.msra.mxu0 %v898
        %1196 = vmatpush.msra.mxu0 %v892
        %1197 = vmatpush.msra.mxu0 %v886
        %1198 = vmatpush.msra.mxu0 %v880
        %1199 = vmatpush.msra.mxu0 %v874
        %1200 = vmatpush.msra.mxu0 %v868
        %1201 = vmatpush.msra.mxu0 %v862
        %1202 = vmatpush.msra.mxu0 %v856
        %1203 = vmatpush.msra.mxu0 %v850
        %1204 = vmatpush.msra.mxu0 %v844
        %1205 = vmatpush.msra.mxu0 %v838
        %1206 = vmatpush.msra.mxu0 %v832
        %1207 = vmatpush.msra.mxu0 %v826
        %1208 = vmatmul.f32.gmra.mxu0 %v806
        %v1209 = vpop.f32.mrf.mxu0
        %v1210 = vadd.f32 %v924, %v1209
        %1211 = vmatmul.f32.gmra.mxu0 %v807
        %v1212 = vpop.f32.mrf.mxu0
        %v1213 = vadd.f32 %v924, %v1212
        %1214 = vmatmul.f32.gmra.mxu0 %v808
        %v1215 = vpop.f32.mrf.mxu0
        %v1216 = vadd.f32 %v924, %v1215
        %1217 = vmatmul.f32.gmra.mxu0 %v809
        %v1218 = vpop.f32.mrf.mxu0
        %v1219 = vadd.f32 %v924, %v1218
        %1220 = vmatmul.f32.gmra.mxu0 %v810
        %v1221 = vpop.f32.mrf.mxu0
        %v1222 = vadd.f32 %v924, %v1221
        %1223 = vmatmul.f32.gmra.mxu0 %v811
        %v1224 = vpop.f32.mrf.mxu0
        %v1225 = vadd.f32 %v924, %v1224
        %1226 = vmatmul.f32.gmra.mxu0 %v812
        %v1227 = vpop.f32.mrf.mxu0
        %v1228 = vadd.f32 %v924, %v1227
        %1229 = vmatmul.f32.gmra.mxu0 %v813
        %v1230 = vpop.f32.mrf.mxu0
        %v1231 = vadd.f32 %v924, %v1230
        %1232 = vmatmul.f32.gmra.mxu0 %v814
        %v1233 = vpop.f32.mrf.mxu0
        %v1234 = vadd.f32 %v924, %v1233
        %1235 = vmatmul.f32.gmra.mxu0 %v815
        %v1236 = vpop.f32.mrf.mxu0
        %v1237 = vadd.f32 %v924, %v1236
        %1238 = vmatmul.f32.gmra.mxu0 %v816
        %v1239 = vpop.f32.mrf.mxu0
        %v1240 = vadd.f32 %v924, %v1239
        %1241 = vmatmul.f32.gmra.mxu0 %v817
        %v1242 = vpop.f32.mrf.mxu0
        %v1243 = vadd.f32 %v924, %v1242
        %1244 = vmatmul.f32.gmra.mxu0 %v818
        %v1245 = vpop.f32.mrf.mxu0
        %v1246 = vadd.f32 %v924, %v1245
        %1247 = vmatmul.f32.gmra.mxu0 %v819
        %v1248 = vpop.f32.mrf.mxu0
        %v1249 = vadd.f32 %v924, %v1248
        %1250 = vmatmul.f32.gmra.mxu0 %v820
        %v1251 = vpop.f32.mrf.mxu0
        %v1252 = vadd.f32 %v924, %v1251
        %1253 = vmatmul.f32.gmra.mxu0 %v821
        %v1254 = vpop.f32.mrf.mxu0
        %v1255 = vadd.f32 %v924, %v1254
        %1256 = vdwg.mxu0
        %1257 = vmatpush.msra.mxu0 %v917
        %1258 = vmatpush.msra.mxu0 %v911
        %1259 = vmatpush.msra.mxu0 %v905
        %1260 = vmatpush.msra.mxu0 %v899
        %1261 = vmatpush.msra.mxu0 %v893
        %1262 = vmatpush.msra.mxu0 %v887
        %1263 = vmatpush.msra.mxu0 %v881
        %1264 = vmatpush.msra.mxu0 %v875
        %1265 = vmatpush.msra.mxu0 %v869
        %1266 = vmatpush.msra.mxu0 %v863
        %1267 = vmatpush.msra.mxu0 %v857
        %1268 = vmatpush.msra.mxu0 %v851
        %1269 = vmatpush.msra.mxu0 %v845
        %1270 = vmatpush.msra.mxu0 %v839
        %1271 = vmatpush.msra.mxu0 %v833
        %1272 = vmatpush.msra.mxu0 %v827
        %1273 = vmatmul.f32.gmra.mxu0 %v806
        %v1274 = vpop.f32.mrf.mxu0
        %v1275 = vadd.f32 %v925, %v1274
        %1276 = vmatmul.f32.gmra.mxu0 %v807
        %v1277 = vpop.f32.mrf.mxu0
        %v1278 = vadd.f32 %v925, %v1277
        %1279 = vmatmul.f32.gmra.mxu0 %v808
        %v1280 = vpop.f32.mrf.mxu0
        %v1281 = vadd.f32 %v925, %v1280
        %1282 = vmatmul.f32.gmra.mxu0 %v809
        %v1283 = vpop.f32.mrf.mxu0
        %v1284 = vadd.f32 %v925, %v1283
        %1285 = vmatmul.f32.gmra.mxu0 %v810
        %v1286 = vpop.f32.mrf.mxu0
        %v1287 = vadd.f32 %v925, %v1286
        %1288 = vmatmul.f32.gmra.mxu0 %v811
        %v1289 = vpop.f32.mrf.mxu0
        %v1290 = vadd.f32 %v925, %v1289
        %1291 = vmatmul.f32.gmra.mxu0 %v812
        %v1292 = vpop.f32.mrf.mxu0
        %v1293 = vadd.f32 %v925, %v1292
        %1294 = vmatmul.f32.gmra.mxu0 %v813
        %v1295 = vpop.f32.mrf.mxu0
        %v1296 = vadd.f32 %v925, %v1295
        %1297 = vmatmul.f32.gmra.mxu0 %v814
        %v1298 = vpop.f32.mrf.mxu0
        %v1299 = vadd.f32 %v925, %v1298
        %1300 = vmatmul.f32.gmra.mxu0 %v815
        %v1301 = vpop.f32.mrf.mxu0
        %v1302 = vadd.f32 %v925, %v1301
        %1303 = vmatmul.f32.gmra.mxu0 %v816
        %v1304 = vpop.f32.mrf.mxu0
        %v1305 = vadd.f32 %v925, %v1304
        %1306 = vmatmul.f32.gmra.mxu0 %v817
        %v1307 = vpop.f32.mrf.mxu0
        %v1308 = vadd.f32 %v925, %v1307
        %1309 = vmatmul.f32.gmra.mxu0 %v818
        %v1310 = vpop.f32.mrf.mxu0
        %v1311 = vadd.f32 %v925, %v1310
        %1312 = vmatmul.f32.gmra.mxu0 %v819
        %v1313 = vpop.f32.mrf.mxu0
        %v1314 = vadd.f32 %v925, %v1313
        %1315 = vmatmul.f32.gmra.mxu0 %v820
        %v1316 = vpop.f32.mrf.mxu0
        %v1317 = vadd.f32 %v925, %v1316
        %1318 = vmatmul.f32.gmra.mxu0 %v821
        %v1319 = vpop.f32.mrf.mxu0
        %v1320 = vadd.f32 %v925, %v1319
        %1321 = vdwg.mxu0
        %1322 = vst [vmem:[%s465] sm:$0xff] %v1080
        %1323 = vst [vmem:[%s465 + $0x8] sm:$0xff] %v1145
        %1324 = vst [vmem:[%s465 + $0x10] sm:$0xff] %v1210
        %1325 = vst [vmem:[%s465 + $0x18] sm:$0xff] %v1275
        %1326 = vst [vmem:[%s465 + $0x20] sm:$0xff] %v1083
        %1327 = vst [vmem:[%s465 + $0x28] sm:$0xff] %v1148
        %1328 = vst [vmem:[%s465 + $0x30] sm:$0xff] %v1213
        %1329 = vst [vmem:[%s465 + $0x38] sm:$0xff] %v1278
        %1330 = vst [vmem:[%s465 + $0x40] sm:$0xff] %v1086
        %1331 = vst [vmem:[%s465 + $0x48] sm:$0xff] %v1151
        %1332 = vst [vmem:[%s465 + $0x50] sm:$0xff] %v1216
        %1333 = vst [vmem:[%s465 + $0x58] sm:$0xff] %v1281
        %1334 = vst [vmem:[%s465 + $0x60] sm:$0xff] %v1089
        %1335 = vst [vmem:[%s465 + $0x68] sm:$0xff] %v1154
        %1336 = vst [vmem:[%s465 + $0x70] sm:$0xff] %v1219
        %1337 = vst [vmem:[%s465 + $0x78] sm:$0xff] %v1284
        %1338 = vst [vmem:[%s465 + $0x80] sm:$0xff] %v1092
        %1339 = vst [vmem:[%s465 + $0x88] sm:$0xff] %v1157
        %1340 = vst [vmem:[%s465 + $0x90] sm:$0xff] %v1222
        %1341 = vst [vmem:[%s465 + $0x98] sm:$0xff] %v1287
        %1342 = vst [vmem:[%s465 + $0xa0] sm:$0xff] %v1095
        %1343 = vst [vmem:[%s465 + $0xa8] sm:$0xff] %v1160
        %1344 = vst [vmem:[%s465 + $0xb0] sm:$0xff] %v1225
        %1345 = vst [vmem:[%s465 + $0xb8] sm:$0xff] %v1290
        %1346 = vst [vmem:[%s465 + $0xc0] sm:$0xff] %v1098
        %1347 = vst [vmem:[%s465 + $0xc8] sm:$0xff] %v1163
        %1348 = vst [vmem:[%s465 + $0xd0] sm:$0xff] %v1228
        %1349 = vst [vmem:[%s465 + $0xd8] sm:$0xff] %v1293
        %1350 = vst [vmem:[%s465 + $0xe0] sm:$0xff] %v1101
        %1351 = vst [vmem:[%s465 + $0xe8] sm:$0xff] %v1166
        %1352 = vst [vmem:[%s465 + $0xf0] sm:$0xff] %v1231
        %1353 = vst [vmem:[%s465 + $0xf8] sm:$0xff] %v1296
        %1354 = vst [vmem:[%s465 + $0x100] sm:$0xff] %v1104
        %1355 = vst [vmem:[%s465 + $0x108] sm:$0xff] %v1169
        %1356 = vst [vmem:[%s465 + $0x110] sm:$0xff] %v1234
        %1357 = vst [vmem:[%s465 + $0x118] sm:$0xff] %v1299
        %1358 = vst [vmem:[%s465 + $0x120] sm:$0xff] %v1107
        %1359 = vst [vmem:[%s465 + $0x128] sm:$0xff] %v1172
        %1360 = vst [vmem:[%s465 + $0x130] sm:$0xff] %v1237
        %1361 = vst [vmem:[%s465 + $0x138] sm:$0xff] %v1302
        %1362 = vst [vmem:[%s465 + $0x140] sm:$0xff] %v1110
        %1363 = vst [vmem:[%s465 + $0x148] sm:$0xff] %v1175
        %1364 = vst [vmem:[%s465 + $0x150] sm:$0xff] %v1240
        %1365 = vst [vmem:[%s465 + $0x158] sm:$0xff] %v1305
        %1366 = vst [vmem:[%s465 + $0x160] sm:$0xff] %v1113
        %1367 = vst [vmem:[%s465 + $0x168] sm:$0xff] %v1178
        %1368 = vst [vmem:[%s465 + $0x170] sm:$0xff] %v1243
        %1369 = vst [vmem:[%s465 + $0x178] sm:$0xff] %v1308
        %1370 = vst [vmem:[%s465 + $0x180] sm:$0xff] %v1116
        %1371 = vst [vmem:[%s465 + $0x188] sm:$0xff] %v1181
        %1372 = vst [vmem:[%s465 + $0x190] sm:$0xff] %v1246
        %1373 = vst [vmem:[%s465 + $0x198] sm:$0xff] %v1311
        %1374 = vst [vmem:[%s465 + $0x1a0] sm:$0xff] %v1119
        %1375 = vst [vmem:[%s465 + $0x1a8] sm:$0xff] %v1184
        %1376 = vst [vmem:[%s465 + $0x1b0] sm:$0xff] %v1249
        %1377 = vst [vmem:[%s465 + $0x1b8] sm:$0xff] %v1314
        %1378 = vst [vmem:[%s465 + $0x1c0] sm:$0xff] %v1122
        %1379 = vst [vmem:[%s465 + $0x1c8] sm:$0xff] %v1187
        %1380 = vst [vmem:[%s465 + $0x1d0] sm:$0xff] %v1252
        %1381 = vst [vmem:[%s465 + $0x1d8] sm:$0xff] %v1317
        %1382 = vst [vmem:[%s465 + $0x1e0] sm:$0xff] %v1125
        %1383 = vst [vmem:[%s465 + $0x1e8] sm:$0xff] %v1190
        %1384 = vst [vmem:[%s465 + $0x1f0] sm:$0xff] %v1255
        %1385 = vst [vmem:[%s465 + $0x1f8] sm:$0xff] %v1320
        %1386 = vadd.xlane.f32.xlu0 %v470
        %v1387 = vpop.xlane.xlu0 %1386
        %1388 = vadd.xlane.f32.xlu0 %v471
        %v1389 = vpop.xlane.xlu0 %1388
        %1390 = vadd.xlane.f32.xlu0 %v472
        %v1391 = vpop.xlane.xlu0 %1390
        %1392 = vadd.xlane.f32.xlu0 %v473
        %v1393 = vpop.xlane.xlu0 %1392
        %1394 = vadd.xlane.f32.xlu0 %v474
        %v1395 = vpop.xlane.xlu0 %1394
        %1396 = vadd.xlane.f32.xlu0 %v475
        %v1397 = vpop.xlane.xlu0 %1396
        %1398 = vadd.xlane.f32.xlu0 %v476
        %v1399 = vpop.xlane.xlu0 %1398
        %1400 = vadd.xlane.f32.xlu0 %v477
        %v1401 = vpop.xlane.xlu0 %1400
        %1402 = vadd.xlane.f32.xlu0 %v478
        %v1403 = vpop.xlane.xlu0 %1402
        %1404 = vadd.xlane.f32.xlu0 %v479
        %v1405 = vpop.xlane.xlu0 %1404
        %1406 = vadd.xlane.f32.xlu0 %v480
        %v1407 = vpop.xlane.xlu0 %1406
        %1408 = vadd.xlane.f32.xlu0 %v481
        %v1409 = vpop.xlane.xlu0 %1408
        %1410 = vadd.xlane.f32.xlu0 %v482
        %v1411 = vpop.xlane.xlu0 %1410
        %1412 = vadd.xlane.f32.xlu0 %v483
        %v1413 = vpop.xlane.xlu0 %1412
        %1414 = vadd.xlane.f32.xlu0 %v484
        %v1415 = vpop.xlane.xlu0 %1414
        %1416 = vadd.xlane.f32.xlu0 %v485
        %v1417 = vpop.xlane.xlu0 %1416
        %v1418 = vrcp.pop 128.0
        %v1419 = vmul.f32 128.0, %v1418
        %v1420 = vsub.f32 1.0, %v1419
        %v1421 = vmul.f32 %v1418, %v1420
        %v1422 = vadd.f32 %v1418, %v1421
        %vm1423 = vweird.f32 %v1418
        %v1424 = vsel %vm1423, %v1418, %v1422
        %v1425 = vmul.f32 %v1387, %v1424
        %v1426 = vmul.f32 %v1389, %v1424
        %v1427 = vmul.f32 %v1391, %v1424
        %v1428 = vmul.f32 %v1393, %v1424
        %v1429 = vmul.f32 %v1395, %v1424
        %v1430 = vmul.f32 %v1397, %v1424
        %v1431 = vmul.f32 %v1399, %v1424
        %v1432 = vmul.f32 %v1401, %v1424
        %v1433 = vmul.f32 %v1403, %v1424
        %v1434 = vmul.f32 %v1405, %v1424
        %v1435 = vmul.f32 %v1407, %v1424
        %v1436 = vmul.f32 %v1409, %v1424
        %v1437 = vmul.f32 %v1411, %v1424
        %v1438 = vmul.f32 %v1413, %v1424
        %v1439 = vmul.f32 %v1415, %v1424
        %v1440 = vmul.f32 %v1417, %v1424
        %v1441 = vsub.f32 %v470, %v1425
        %v1442 = vsub.f32 %v471, %v1426
        %v1443 = vsub.f32 %v472, %v1427
        %v1444 = vsub.f32 %v473, %v1428
        %v1445 = vsub.f32 %v474, %v1429
        %v1446 = vsub.f32 %v475, %v1430
        %v1447 = vsub.f32 %v476, %v1431
        %v1448 = vsub.f32 %v477, %v1432
        %v1449 = vsub.f32 %v478, %v1433
        %v1450 = vsub.f32 %v479, %v1434
        %v1451 = vsub.f32 %v480, %v1435
        %v1452 = vsub.f32 %v481, %v1436
        %v1453 = vsub.f32 %v482, %v1437
        %v1454 = vsub.f32 %v483, %v1438
        %v1455 = vsub.f32 %v484, %v1439
        %v1456 = vsub.f32 %v485, %v1440
        %v1457 = vmul.f32 %v1441, %v1441
        %v1458 = vmul.f32 %v1442, %v1442
        %v1459 = vmul.f32 %v1443, %v1443
        %v1460 = vmul.f32 %v1444, %v1444
        %v1461 = vmul.f32 %v1445, %v1445
        %v1462 = vmul.f32 %v1446, %v1446
        %v1463 = vmul.f32 %v1447, %v1447
        %v1464 = vmul.f32 %v1448, %v1448
        %v1465 = vmul.f32 %v1449, %v1449
        %v1466 = vmul.f32 %v1450, %v1450
        %v1467 = vmul.f32 %v1451, %v1451
        %v1468 = vmul.f32 %v1452, %v1452
        %v1469 = vmul.f32 %v1453, %v1453
        %v1470 = vmul.f32 %v1454, %v1454
        %v1471 = vmul.f32 %v1455, %v1455
        %v1472 = vmul.f32 %v1456, %v1456
        %1473 = vadd.xlane.f32.xlu0 %v1457
        %v1474 = vpop.xlane.xlu0 %1473
        %1475 = vadd.xlane.f32.xlu0 %v1458
        %v1476 = vpop.xlane.xlu0 %1475
        %1477 = vadd.xlane.f32.xlu0 %v1459
        %v1478 = vpop.xlane.xlu0 %1477
        %1479 = vadd.xlane.f32.xlu0 %v1460
        %v1480 = vpop.xlane.xlu0 %1479
        %1481 = vadd.xlane.f32.xlu0 %v1461
        %v1482 = vpop.xlane.xlu0 %1481
        %1483 = vadd.xlane.f32.xlu0 %v1462
        %v1484 = vpop.xlane.xlu0 %1483
        %1485 = vadd.xlane.f32.xlu0 %v1463
        %v1486 = vpop.xlane.xlu0 %1485
        %1487 = vadd.xlane.f32.xlu0 %v1464
        %v1488 = vpop.xlane.xlu0 %1487
        %1489 = vadd.xlane.f32.xlu0 %v1465
        %v1490 = vpop.xlane.xlu0 %1489
        %1491 = vadd.xlane.f32.xlu0 %v1466
        %v1492 = vpop.xlane.xlu0 %1491
        %1493 = vadd.xlane.f32.xlu0 %v1467
        %v1494 = vpop.xlane.xlu0 %1493
        %1495 = vadd.xlane.f32.xlu0 %v1468
        %v1496 = vpop.xlane.xlu0 %1495
        %1497 = vadd.xlane.f32.xlu0 %v1469
        %v1498 = vpop.xlane.xlu0 %1497
        %1499 = vadd.xlane.f32.xlu0 %v1470
        %v1500 = vpop.xlane.xlu0 %1499
        %1501 = vadd.xlane.f32.xlu0 %v1471
        %v1502 = vpop.xlane.xlu0 %1501
        %1503 = vadd.xlane.f32.xlu0 %v1472
        %v1504 = vpop.xlane.xlu0 %1503
        %v1505 = vmul.f32 %v1474, %v1424
        %v1506 = vmul.f32 %v1476, %v1424
        %v1507 = vmul.f32 %v1478, %v1424
        %v1508 = vmul.f32 %v1480, %v1424
        %v1509 = vmul.f32 %v1482, %v1424
        %v1510 = vmul.f32 %v1484, %v1424
        %v1511 = vmul.f32 %v1486, %v1424
        %v1512 = vmul.f32 %v1488, %v1424
        %v1513 = vmul.f32 %v1490, %v1424
        %v1514 = vmul.f32 %v1492, %v1424
        %v1515 = vmul.f32 %v1494, %v1424
        %v1516 = vmul.f32 %v1496, %v1424
        %v1517 = vmul.f32 %v1498, %v1424
        %v1518 = vmul.f32 %v1500, %v1424
        %v1519 = vmul.f32 %v1502, %v1424
        %v1520 = vmul.f32 %v1504, %v1424
        %v1521 = vadd.f32 %v1505, 0.0001
        %v1522 = vadd.f32 %v1506, 0.0001
        %v1523 = vadd.f32 %v1507, 0.0001
        %v1524 = vadd.f32 %v1508, 0.0001
        %v1525 = vadd.f32 %v1509, 0.0001
        %v1526 = vadd.f32 %v1510, 0.0001
        %v1527 = vadd.f32 %v1511, 0.0001
        %v1528 = vadd.f32 %v1512, 0.0001
        %v1529 = vadd.f32 %v1513, 0.0001
        %v1530 = vadd.f32 %v1514, 0.0001
        %v1531 = vadd.f32 %v1515, 0.0001
        %v1532 = vadd.f32 %v1516, 0.0001
        %v1533 = vadd.f32 %v1517, 0.0001
        %v1534 = vadd.f32 %v1518, 0.0001
        %v1535 = vadd.f32 %v1519, 0.0001
        %v1536 = vadd.f32 %v1520, 0.0001
        %v1537 = vrsqrt.pop %v1521
        %v1538 = vmul.f32 %v1537, %v1521
        %v1539 = vmul.f32 %v1538, %v1537
        %v1540 = vmul.f32 0.5, %v1539
        %v1541 = vsub.f32 1.5, %v1540
        %v1542 = vmul.f32 %v1537, %v1541
        %vm1543 = vweird.f32 %v1521
        %vm1544 = vweird.f32 %v1537
        %vm1545 = vmor %vm1543, %vm1544
        %v1546 = vsel %vm1545, %v1537, %v1542
        %v1547 = vrsqrt.pop %v1522
        %v1548 = vmul.f32 %v1547, %v1522
        %v1549 = vmul.f32 %v1548, %v1547
        %v1550 = vmul.f32 0.5, %v1549
        %v1551 = vsub.f32 1.5, %v1550
        %v1552 = vmul.f32 %v1547, %v1551
        %vm1553 = vweird.f32 %v1522
        %vm1554 = vweird.f32 %v1547
        %vm1555 = vmor %vm1553, %vm1554
        %v1556 = vsel %vm1555, %v1547, %v1552
        %v1557 = vrsqrt.pop %v1523
        %v1558 = vmul.f32 %v1557, %v1523
        %v1559 = vmul.f32 %v1558, %v1557
        %v1560 = vmul.f32 0.5, %v1559
        %v1561 = vsub.f32 1.5, %v1560
        %v1562 = vmul.f32 %v1557, %v1561
        %vm1563 = vweird.f32 %v1523
        %vm1564 = vweird.f32 %v1557
        %vm1565 = vmor %vm1563, %vm1564
        %v1566 = vsel %vm1565, %v1557, %v1562
        %v1567 = vrsqrt.pop %v1524
        %v1568 = vmul.f32 %v1567, %v1524
        %v1569 = vmul.f32 %v1568, %v1567
        %v1570 = vmul.f32 0.5, %v1569
        %v1571 = vsub.f32 1.5, %v1570
        %v1572 = vmul.f32 %v1567, %v1571
        %vm1573 = vweird.f32 %v1524
        %vm1574 = vweird.f32 %v1567
        %vm1575 = vmor %vm1573, %vm1574
        %v1576 = vsel %vm1575, %v1567, %v1572
        %v1577 = vrsqrt.pop %v1525
        %v1578 = vmul.f32 %v1577, %v1525
        %v1579 = vmul.f32 %v1578, %v1577
        %v1580 = vmul.f32 0.5, %v1579
        %v1581 = vsub.f32 1.5, %v1580
        %v1582 = vmul.f32 %v1577, %v1581
        %vm1583 = vweird.f32 %v1525
        %vm1584 = vweird.f32 %v1577
        %vm1585 = vmor %vm1583, %vm1584
        %v1586 = vsel %vm1585, %v1577, %v1582
        %v1587 = vrsqrt.pop %v1526
        %v1588 = vmul.f32 %v1587, %v1526
        %v1589 = vmul.f32 %v1588, %v1587
        %v1590 = vmul.f32 0.5, %v1589
        %v1591 = vsub.f32 1.5, %v1590
        %v1592 = vmul.f32 %v1587, %v1591
        %vm1593 = vweird.f32 %v1526
        %vm1594 = vweird.f32 %v1587
        %vm1595 = vmor %vm1593, %vm1594
        %v1596 = vsel %vm1595, %v1587, %v1592
        %v1597 = vrsqrt.pop %v1527
        %v1598 = vmul.f32 %v1597, %v1527
        %v1599 = vmul.f32 %v1598, %v1597
        %v1600 = vmul.f32 0.5, %v1599
        %v1601 = vsub.f32 1.5, %v1600
        %v1602 = vmul.f32 %v1597, %v1601
        %vm1603 = vweird.f32 %v1527
        %vm1604 = vweird.f32 %v1597
        %vm1605 = vmor %vm1603, %vm1604
        %v1606 = vsel %vm1605, %v1597, %v1602
        %v1607 = vrsqrt.pop %v1528
        %v1608 = vmul.f32 %v1607, %v1528
        %v1609 = vmul.f32 %v1608, %v1607
        %v1610 = vmul.f32 0.5, %v1609
        %v1611 = vsub.f32 1.5, %v1610
        %v1612 = vmul.f32 %v1607, %v1611
        %vm1613 = vweird.f32 %v1528
        %vm1614 = vweird.f32 %v1607
        %vm1615 = vmor %vm1613, %vm1614
        %v1616 = vsel %vm1615, %v1607, %v1612
        %v1617 = vrsqrt.pop %v1529
        %v1618 = vmul.f32 %v1617, %v1529
        %v1619 = vmul.f32 %v1618, %v1617
        %v1620 = vmul.f32 0.5, %v1619
        %v1621 = vsub.f32 1.5, %v1620
        %v1622 = vmul.f32 %v1617, %v1621
        %vm1623 = vweird.f32 %v1529
        %vm1624 = vweird.f32 %v1617
        %vm1625 = vmor %vm1623, %vm1624
        %v1626 = vsel %vm1625, %v1617, %v1622
        %v1627 = vrsqrt.pop %v1530
        %v1628 = vmul.f32 %v1627, %v1530
        %v1629 = vmul.f32 %v1628, %v1627
        %v1630 = vmul.f32 0.5, %v1629
        %v1631 = vsub.f32 1.5, %v1630
        %v1632 = vmul.f32 %v1627, %v1631
        %vm1633 = vweird.f32 %v1530
        %vm1634 = vweird.f32 %v1627
        %vm1635 = vmor %vm1633, %vm1634
        %v1636 = vsel %vm1635, %v1627, %v1632
        %v1637 = vrsqrt.pop %v1531
        %v1638 = vmul.f32 %v1637, %v1531
        %v1639 = vmul.f32 %v1638, %v1637
        %v1640 = vmul.f32 0.5, %v1639
        %v1641 = vsub.f32 1.5, %v1640
        %v1642 = vmul.f32 %v1637, %v1641
        %vm1643 = vweird.f32 %v1531
        %vm1644 = vweird.f32 %v1637
        %vm1645 = vmor %vm1643, %vm1644
        %v1646 = vsel %vm1645, %v1637, %v1642
        %v1647 = vrsqrt.pop %v1532
        %v1648 = vmul.f32 %v1647, %v1532
        %v1649 = vmul.f32 %v1648, %v1647
        %v1650 = vmul.f32 0.5, %v1649
        %v1651 = vsub.f32 1.5, %v1650
        %v1652 = vmul.f32 %v1647, %v1651
        %vm1653 = vweird.f32 %v1532
        %vm1654 = vweird.f32 %v1647
        %vm1655 = vmor %vm1653, %vm1654
        %v1656 = vsel %vm1655, %v1647, %v1652
        %v1657 = vrsqrt.pop %v1533
        %v1658 = vmul.f32 %v1657, %v1533
        %v1659 = vmul.f32 %v1658, %v1657
        %v1660 = vmul.f32 0.5, %v1659
        %v1661 = vsub.f32 1.5, %v1660
        %v1662 = vmul.f32 %v1657, %v1661
        %vm1663 = vweird.f32 %v1533
        %vm1664 = vweird.f32 %v1657
        %vm1665 = vmor %vm1663, %vm1664
        %v1666 = vsel %vm1665, %v1657, %v1662
        %v1667 = vrsqrt.pop %v1534
        %v1668 = vmul.f32 %v1667, %v1534
        %v1669 = vmul.f32 %v1668, %v1667
        %v1670 = vmul.f32 0.5, %v1669
        %v1671 = vsub.f32 1.5, %v1670
        %v1672 = vmul.f32 %v1667, %v1671
        %vm1673 = vweird.f32 %v1534
        %vm1674 = vweird.f32 %v1667
        %vm1675 = vmor %vm1673, %vm1674
        %v1676 = vsel %vm1675, %v1667, %v1672
        %v1677 = vrsqrt.pop %v1535
        %v1678 = vmul.f32 %v1677, %v1535
        %v1679 = vmul.f32 %v1678, %v1677
        %v1680 = vmul.f32 0.5, %v1679
        %v1681 = vsub.f32 1.5, %v1680
        %v1682 = vmul.f32 %v1677, %v1681
        %vm1683 = vweird.f32 %v1535
        %vm1684 = vweird.f32 %v1677
        %vm1685 = vmor %vm1683, %vm1684
        %v1686 = vsel %vm1685, %v1677, %v1682
        %v1687 = vrsqrt.pop %v1536
        %v1688 = vmul.f32 %v1687, %v1536
        %v1689 = vmul.f32 %v1688, %v1687
        %v1690 = vmul.f32 0.5, %v1689
        %v1691 = vsub.f32 1.5, %v1690
        %v1692 = vmul.f32 %v1687, %v1691
        %vm1693 = vweird.f32 %v1536
        %vm1694 = vweird.f32 %v1687
        %vm1695 = vmor %vm1693, %vm1694
        %v1696 = vsel %vm1695, %v1687, %v1692
        %v1697 = vmul.f32 %v1441, %v1546
        %v1698 = vmul.f32 %v1442, %v1556
        %v1699 = vmul.f32 %v1443, %v1566
        %v1700 = vmul.f32 %v1444, %v1576
        %v1701 = vmul.f32 %v1445, %v1586
        %v1702 = vmul.f32 %v1446, %v1596
        %v1703 = vmul.f32 %v1447, %v1606
        %v1704 = vmul.f32 %v1448, %v1616
        %v1705 = vmul.f32 %v1449, %v1626
        %v1706 = vmul.f32 %v1450, %v1636
        %v1707 = vmul.f32 %v1451, %v1646
        %v1708 = vmul.f32 %v1452, %v1656
        %v1709 = vmul.f32 %v1453, %v1666
        %v1710 = vmul.f32 %v1454, %v1676
        %v1711 = vmul.f32 %v1455, %v1686
        %v1712 = vmul.f32 %v1456, %v1696
        %v1713 = vadd.f32 %v1015, 1.0
        %v1714 = vadd.f32 %v1018, 1.0
        %v1715 = vadd.f32 %v1021, 1.0
        %v1716 = vadd.f32 %v1024, 1.0
        %v1717 = vadd.f32 %v1027, 1.0
        %v1718 = vadd.f32 %v1030, 1.0
        %v1719 = vadd.f32 %v1033, 1.0
        %v1720 = vadd.f32 %v1036, 1.0
        %v1721 = vadd.f32 %v1039, 1.0
        %v1722 = vadd.f32 %v1042, 1.0
        %v1723 = vadd.f32 %v1045, 1.0
        %v1724 = vadd.f32 %v1048, 1.0
        %v1725 = vadd.f32 %v1051, 1.0
        %v1726 = vadd.f32 %v1054, 1.0
        %v1727 = vadd.f32 %v1057, 1.0
        %v1728 = vadd.f32 %v1060, 1.0
        %v1729 = vmul.f32 %v1697, %v1713
        %v1730 = vmul.f32 %v1698, %v1714
        %v1731 = vmul.f32 %v1699, %v1715
        %v1732 = vmul.f32 %v1700, %v1716
        %v1733 = vmul.f32 %v1701, %v1717
        %v1734 = vmul.f32 %v1702, %v1718
        %v1735 = vmul.f32 %v1703, %v1719
        %v1736 = vmul.f32 %v1704, %v1720
        %v1737 = vmul.f32 %v1705, %v1721
        %v1738 = vmul.f32 %v1706, %v1722
        %v1739 = vmul.f32 %v1707, %v1723
        %v1740 = vmul.f32 %v1708, %v1724
        %v1741 = vmul.f32 %v1709, %v1725
        %v1742 = vmul.f32 %v1710, %v1726
        %v1743 = vmul.f32 %v1711, %v1727
        %v1744 = vmul.f32 %v1712, %v1728
        %v1745 = vadd.f32 %v1729, %v950
        %v1746 = vadd.f32 %v1730, %v953
        %v1747 = vadd.f32 %v1731, %v956
        %v1748 = vadd.f32 %v1732, %v959
        %v1749 = vadd.f32 %v1733, %v962
        %v1750 = vadd.f32 %v1734, %v965
        %v1751 = vadd.f32 %v1735, %v968
        %v1752 = vadd.f32 %v1736, %v971
        %v1753 = vadd.f32 %v1737, %v974
        %v1754 = vadd.f32 %v1738, %v977
        %v1755 = vadd.f32 %v1739, %v980
        %v1756 = vadd.f32 %v1740, %v983
        %v1757 = vadd.f32 %v1741, %v986
        %v1758 = vadd.f32 %v1742, %v989
        %v1759 = vadd.f32 %v1743, %v992
        %v1760 = vadd.f32 %v1744, %v995
        %v1761 = vld [vmem:[#allocation10] sm:$0xff]
        %v1762 = vld [vmem:[#allocation10 + $0x18] sm:$0xff]
        %v1763 = vld [vmem:[#allocation10 + $0x30] sm:$0xff]
        %v1764 = vld [vmem:[#allocation10 + $0x48] sm:$0xff]
        %v1765 = vld [vmem:[#allocation10 + $0x60] sm:$0xff]
        %v1766 = vld [vmem:[#allocation10 + $0x78] sm:$0xff]
        %v1767 = vld [vmem:[#allocation10 + $0x90] sm:$0xff]
        %v1768 = vld [vmem:[#allocation10 + $0xa8] sm:$0xff]
        %v1769 = vld [vmem:[#allocation10 + $0xc0] sm:$0xff]
        %v1770 = vld [vmem:[#allocation10 + $0xd8] sm:$0xff]
        %v1771 = vld [vmem:[#allocation10 + $0xf0] sm:$0xff]
        %v1772 = vld [vmem:[#allocation10 + $0x108] sm:$0xff]
        %v1773 = vld [vmem:[#allocation10 + $0x120] sm:$0xff]
        %v1774 = vld [vmem:[#allocation10 + $0x138] sm:$0xff]
        %v1775 = vld [vmem:[#allocation10 + $0x150] sm:$0xff]
        %v1776 = vld [vmem:[#allocation10 + $0x168] sm:$0xff]
        %v1777 = vld [vmem:[%s5] sm:$0x1]
        %v1779 = vperm.slane %v1777, 0
        %1781 = vmatpush.msra.mxu0 %v1776
        %1782 = vmatpush.msra.mxu0 %v1775
        %1783 = vmatpush.msra.mxu0 %v1774
        %1784 = vmatpush.msra.mxu0 %v1773
        %1785 = vmatpush.msra.mxu0 %v1772
        %1786 = vmatpush.msra.mxu0 %v1771
        %1787 = vmatpush.msra.mxu0 %v1770
        %1788 = vmatpush.msra.mxu0 %v1769
        %1789 = vmatpush.msra.mxu0 %v1768
        %1790 = vmatpush.msra.mxu0 %v1767
        %1791 = vmatpush.msra.mxu0 %v1766
        %1792 = vmatpush.msra.mxu0 %v1765
        %1793 = vmatpush.msra.mxu0 %v1764
        %1794 = vmatpush.msra.mxu0 %v1763
        %1795 = vmatpush.msra.mxu0 %v1762
        %1796 = vmatpush.msra.mxu0 %v1761
        %1797 = vmatmul.f32.gmra.mxu0 %v1745
        %v1798 = vpop.f32.mrf.mxu0
        %v1799 = vadd.f32 %v1779, %v1798
        %1800 = vmatmul.f32.gmra.mxu0 %v1746
        %v1801 = vpop.f32.mrf.mxu0
        %v1802 = vadd.f32 %v1779, %v1801
        %1803 = vmatmul.f32.gmra.mxu0 %v1747
        %v1804 = vpop.f32.mrf.mxu0
        %v1805 = vadd.f32 %v1779, %v1804
        %1806 = vmatmul.f32.gmra.mxu0 %v1748
        %v1807 = vpop.f32.mrf.mxu0
        %v1808 = vadd.f32 %v1779, %v1807
        %1809 = vmatmul.f32.gmra.mxu0 %v1749
        %v1810 = vpop.f32.mrf.mxu0
        %v1811 = vadd.f32 %v1779, %v1810
        %1812 = vmatmul.f32.gmra.mxu0 %v1750
        %v1813 = vpop.f32.mrf.mxu0
        %v1814 = vadd.f32 %v1779, %v1813
        %1815 = vmatmul.f32.gmra.mxu0 %v1751
        %v1816 = vpop.f32.mrf.mxu0
        %v1817 = vadd.f32 %v1779, %v1816
        %1818 = vmatmul.f32.gmra.mxu0 %v1752
        %v1819 = vpop.f32.mrf.mxu0
        %v1820 = vadd.f32 %v1779, %v1819
        %1821 = vmatmul.f32.gmra.mxu0 %v1753
        %v1822 = vpop.f32.mrf.mxu0
        %v1823 = vadd.f32 %v1779, %v1822
        %1824 = vmatmul.f32.gmra.mxu0 %v1754
        %v1825 = vpop.f32.mrf.mxu0
        %v1826 = vadd.f32 %v1779, %v1825
        %1827 = vmatmul.f32.gmra.mxu0 %v1755
        %v1828 = vpop.f32.mrf.mxu0
        %v1829 = vadd.f32 %v1779, %v1828
        %1830 = vmatmul.f32.gmra.mxu0 %v1756
        %v1831 = vpop.f32.mrf.mxu0
        %v1832 = vadd.f32 %v1779, %v1831
        %1833 = vmatmul.f32.gmra.mxu0 %v1757
        %v1834 = vpop.f32.mrf.mxu0
        %v1835 = vadd.f32 %v1779, %v1834
        %1836 = vmatmul.f32.gmra.mxu0 %v1758
        %v1837 = vpop.f32.mrf.mxu0
        %v1838 = vadd.f32 %v1779, %v1837
        %1839 = vmatmul.f32.gmra.mxu0 %v1759
        %v1840 = vpop.f32.mrf.mxu0
        %v1841 = vadd.f32 %v1779, %v1840
        %1842 = vmatmul.f32.gmra.mxu0 %v1760
        %v1843 = vpop.f32.mrf.mxu0
        %v1844 = vadd.f32 %v1779, %v1843
        %1845 = vdwg.mxu0
        %v1846 = vmul.f32 %v1799, 0.25
        %v1847 = vmul.f32 %v1802, 0.25
        %v1848 = vmul.f32 %v1805, 0.25
        %v1849 = vmul.f32 %v1808, 0.25
        %v1850 = vmul.f32 %v1811, 0.25
        %v1851 = vmul.f32 %v1814, 0.25
        %v1852 = vmul.f32 %v1817, 0.25
        %v1853 = vmul.f32 %v1820, 0.25
        %v1854 = vmul.f32 %v1823, 0.25
        %v1855 = vmul.f32 %v1826, 0.25
        %v1856 = vmul.f32 %v1829, 0.25
        %v1857 = vmul.f32 %v1832, 0.25
        %v1858 = vmul.f32 %v1835, 0.25
        %v1859 = vmul.f32 %v1838, 0.25
        %v1860 = vmul.f32 %v1841, 0.25
        %v1861 = vmul.f32 %v1844, 0.25
        %1862 = vxpose.xlu0.b32.start [1/16] %v1846, 128
        %1863 = vxpose.xlu0.b32.cont [2/16] %v1847, 128
        %1864 = vxpose.xlu0.b32.cont [3/16] %v1848, 128
        %1865 = vxpose.xlu0.b32.cont [4/16] %v1849, 128
        %1866 = vxpose.xlu0.b32.cont [5/16] %v1850, 128
        %1867 = vxpose.xlu0.b32.cont [6/16] %v1851, 128
        %1868 = vxpose.xlu0.b32.cont [7/16] %v1852, 128
        %1869 = vxpose.xlu0.b32.cont [8/16] %v1853, 128
        %1870 = vxpose.xlu0.b32.cont [9/16] %v1854, 128
        %1871 = vxpose.xlu0.b32.cont [10/16] %v1855, 128
        %1872 = vxpose.xlu0.b32.cont [11/16] %v1856, 128
        %1873 = vxpose.xlu0.b32.cont [12/16] %v1857, 128
        %1874 = vxpose.xlu0.b32.cont [13/16] %v1858, 128
        %1875 = vxpose.xlu0.b32.cont [14/16] %v1859, 128
        %1876 = vxpose.xlu0.b32.cont [15/16] %v1860, 128
        %1877 = vxpose.xlu0.b32.end [16/16] %v1861, 128
        %v1878 = vpop.trf.xlu0
        %v1879 = vpop.trf.xlu0
        %v1880 = vpop.trf.xlu0
        %v1881 = vpop.trf.xlu0
        %v1882 = vpop.trf.xlu0
        %v1883 = vpop.trf.xlu0
        %v1884 = vpop.trf.xlu0
        %v1885 = vpop.trf.xlu0
        %v1886 = vpop.trf.xlu0
        %v1887 = vpop.trf.xlu0
        %v1888 = vpop.trf.xlu0
        %v1889 = vpop.trf.xlu0
        %v1890 = vpop.trf.xlu0
        %v1891 = vpop.trf.xlu0
        %v1892 = vpop.trf.xlu0
        %v1893 = vpop.trf.xlu0
        %1894 = vxpose.xlu0.b32.start [1/16] %v1878, 128
        %1895 = vxpose.xlu0.b32.cont [2/16] %v1879, 128
        %1896 = vxpose.xlu0.b32.cont [3/16] 0.0, 128
        %1897 = vxpose.xlu0.b32.cont [4/16] 0.0, 128
        %1898 = vxpose.xlu0.b32.cont [5/16] 0.0, 128
        %1899 = vxpose.xlu0.b32.cont [6/16] 0.0, 128
        %1900 = vxpose.xlu0.b32.cont [7/16] 0.0, 128
        %1901 = vxpose.xlu0.b32.cont [8/16] 0.0, 128
        %1902 = vxpose.xlu0.b32.cont [9/16] 0.0, 128
        %1903 = vxpose.xlu0.b32.cont [10/16] 0.0, 128
        %1904 = vxpose.xlu0.b32.cont [11/16] 0.0, 128
        %1905 = vxpose.xlu0.b32.cont [12/16] 0.0, 128
        %1906 = vxpose.xlu0.b32.cont [13/16] 0.0, 128
        %1907 = vxpose.xlu0.b32.cont [14/16] 0.0, 128
        %1908 = vxpose.xlu0.b32.cont [15/16] 0.0, 128
        %1909 = vxpose.xlu0.b32.end [16/16] 0.0, 128
        %v1910 = vpop.trf.xlu0
        %v1911 = vpop.trf.xlu0
        %v1912 = vpop.trf.xlu0
        %v1913 = vpop.trf.xlu0
        %v1914 = vpop.trf.xlu0
        %v1915 = vpop.trf.xlu0
        %v1916 = vpop.trf.xlu0
        %v1917 = vpop.trf.xlu0
        %v1918 = vpop.trf.xlu0
        %v1919 = vpop.trf.xlu0
        %v1920 = vpop.trf.xlu0
        %v1921 = vpop.trf.xlu0
        %v1922 = vpop.trf.xlu0
        %v1923 = vpop.trf.xlu0
        %v1924 = vpop.trf.xlu0
        %v1925 = vpop.trf.xlu0
        %1926 = vxpose.xlu0.b32.start [1/16] %v1880, 128
        %1927 = vxpose.xlu0.b32.cont [2/16] %v1881, 128
        %1928 = vxpose.xlu0.b32.cont [3/16] 0.0, 128
        %1929 = vxpose.xlu0.b32.cont [4/16] 0.0, 128
        %1930 = vxpose.xlu0.b32.cont [5/16] 0.0, 128
        %1931 = vxpose.xlu0.b32.cont [6/16] 0.0, 128
        %1932 = vxpose.xlu0.b32.cont [7/16] 0.0, 128
        %1933 = vxpose.xlu0.b32.cont [8/16] 0.0, 128
        %1934 = vxpose.xlu0.b32.cont [9/16] 0.0, 128
        %1935 = vxpose.xlu0.b32.cont [10/16] 0.0, 128
        %1936 = vxpose.xlu0.b32.cont [11/16] 0.0, 128
        %1937 = vxpose.xlu0.b32.cont [12/16] 0.0, 128
        %1938 = vxpose.xlu0.b32.cont [13/16] 0.0, 128
        %1939 = vxpose.xlu0.b32.cont [14/16] 0.0, 128
        %1940 = vxpose.xlu0.b32.cont [15/16] 0.0, 128
        %1941 = vxpose.xlu0.b32.end [16/16] 0.0, 128
        %v1942 = vpop.trf.xlu0
        %v1943 = vpop.trf.xlu0
        %v1944 = vpop.trf.xlu0
        %v1945 = vpop.trf.xlu0
        %v1946 = vpop.trf.xlu0
        %v1947 = vpop.trf.xlu0
        %v1948 = vpop.trf.xlu0
        %v1949 = vpop.trf.xlu0
        %v1950 = vpop.trf.xlu0
        %v1951 = vpop.trf.xlu0
        %v1952 = vpop.trf.xlu0
        %v1953 = vpop.trf.xlu0
        %v1954 = vpop.trf.xlu0
        %v1955 = vpop.trf.xlu0
        %v1956 = vpop.trf.xlu0
        %v1957 = vpop.trf.xlu0
        %1958 = vxpose.xlu0.b32.start [1/16] %v1882, 128
        %1959 = vxpose.xlu0.b32.cont [2/16] %v1883, 128
        %1960 = vxpose.xlu0.b32.cont [3/16] 0.0, 128
        %1961 = vxpose.xlu0.b32.cont [4/16] 0.0, 128
        %1962 = vxpose.xlu0.b32.cont [5/16] 0.0, 128
        %1963 = vxpose.xlu0.b32.cont [6/16] 0.0, 128
        %1964 = vxpose.xlu0.b32.cont [7/16] 0.0, 128
        %1965 = vxpose.xlu0.b32.cont [8/16] 0.0, 128
        %1966 = vxpose.xlu0.b32.cont [9/16] 0.0, 128
        %1967 = vxpose.xlu0.b32.cont [10/16] 0.0, 128
        %1968 = vxpose.xlu0.b32.cont [11/16] 0.0, 128
        %1969 = vxpose.xlu0.b32.cont [12/16] 0.0, 128
        %1970 = vxpose.xlu0.b32.cont [13/16] 0.0, 128
        %1971 = vxpose.xlu0.b32.cont [14/16] 0.0, 128
        %1972 = vxpose.xlu0.b32.cont [15/16] 0.0, 128
        %1973 = vxpose.xlu0.b32.end [16/16] 0.0, 128
        %v1974 = vpop.trf.xlu0
        %v1975 = vpop.trf.xlu0
        %v1976 = vpop.trf.xlu0
        %v1977 = vpop.trf.xlu0
        %v1978 = vpop.trf.xlu0
        %v1979 = vpop.trf.xlu0
        %v1980 = vpop.trf.xlu0
        %v1981 = vpop.trf.xlu0
        %v1982 = vpop.trf.xlu0
        %v1983 = vpop.trf.xlu0
        %v1984 = vpop.trf.xlu0
        %v1985 = vpop.trf.xlu0
        %v1986 = vpop.trf.xlu0
        %v1987 = vpop.trf.xlu0
        %v1988 = vpop.trf.xlu0
        %v1989 = vpop.trf.xlu0
        %1990 = vxpose.xlu0.b32.start [1/16] %v1884, 128
        %1991 = vxpose.xlu0.b32.cont [2/16] %v1885, 128
        %1992 = vxpose.xlu0.b32.cont [3/16] 0.0, 128
        %1993 = vxpose.xlu0.b32.cont [4/16] 0.0, 128
        %1994 = vxpose.xlu0.b32.cont [5/16] 0.0, 128
        %1995 = vxpose.xlu0.b32.cont [6/16] 0.0, 128
        %1996 = vxpose.xlu0.b32.cont [7/16] 0.0, 128
        %1997 = vxpose.xlu0.b32.cont [8/16] 0.0, 128
        %1998 = vxpose.xlu0.b32.cont [9/16] 0.0, 128
        %1999 = vxpose.xlu0.b32.cont [10/16] 0.0, 128
        %2000 = vxpose.xlu0.b32.cont [11/16] 0.0, 128
        %2001 = vxpose.xlu0.b32.cont [12/16] 0.0, 128
        %2002 = vxpose.xlu0.b32.cont [13/16] 0.0, 128
        %2003 = vxpose.xlu0.b32.cont [14/16] 0.0, 128
        %2004 = vxpose.xlu0.b32.cont [15/16] 0.0, 128
        %2005 = vxpose.xlu0.b32.end [16/16] 0.0, 128
        %v2006 = vpop.trf.xlu0
        %v2007 = vpop.trf.xlu0
        %v2008 = vpop.trf.xlu0
        %v2009 = vpop.trf.xlu0
        %v2010 = vpop.trf.xlu0
        %v2011 = vpop.trf.xlu0
        %v2012 = vpop.trf.xlu0
        %v2013 = vpop.trf.xlu0
        %v2014 = vpop.trf.xlu0
        %v2015 = vpop.trf.xlu0
        %v2016 = vpop.trf.xlu0
        %v2017 = vpop.trf.xlu0
        %v2018 = vpop.trf.xlu0
        %v2019 = vpop.trf.xlu0
        %v2020 = vpop.trf.xlu0
        %v2021 = vpop.trf.xlu0
        %2022 = vxpose.xlu0.b32.start [1/16] %v1886, 128
        %2023 = vxpose.xlu0.b32.cont [2/16] %v1887, 128
        %2024 = vxpose.xlu0.b32.cont [3/16] 0.0, 128
        %2025 = vxpose.xlu0.b32.cont [4/16] 0.0, 128
        %2026 = vxpose.xlu0.b32.cont [5/16] 0.0, 128
        %2027 = vxpose.xlu0.b32.cont [6/16] 0.0, 128
        %2028 = vxpose.xlu0.b32.cont [7/16] 0.0, 128
        %2029 = vxpose.xlu0.b32.cont [8/16] 0.0, 128
        %2030 = vxpose.xlu0.b32.cont [9/16] 0.0, 128
        %2031 = vxpose.xlu0.b32.cont [10/16] 0.0, 128
        %2032 = vxpose.xlu0.b32.cont [11/16] 0.0, 128
        %2033 = vxpose.xlu0.b32.cont [12/16] 0.0, 128
        %2034 = vxpose.xlu0.b32.cont [13/16] 0.0, 128
        %2035 = vxpose.xlu0.b32.cont [14/16] 0.0, 128
        %2036 = vxpose.xlu0.b32.cont [15/16] 0.0, 128
        %2037 = vxpose.xlu0.b32.end [16/16] 0.0, 128
        %v2038 = vpop.trf.xlu0
        %v2039 = vpop.trf.xlu0
        %v2040 = vpop.trf.xlu0
        %v2041 = vpop.trf.xlu0
        %v2042 = vpop.trf.xlu0
        %v2043 = vpop.trf.xlu0
        %v2044 = vpop.trf.xlu0
        %v2045 = vpop.trf.xlu0
        %v2046 = vpop.trf.xlu0
        %v2047 = vpop.trf.xlu0
        %v2048 = vpop.trf.xlu0
        %v2049 = vpop.trf.xlu0
        %v2050 = vpop.trf.xlu0
        %v2051 = vpop.trf.xlu0
        %v2052 = vpop.trf.xlu0
        %v2053 = vpop.trf.xlu0
        %2054 = vxpose.xlu0.b32.start [1/16] %v1888, 128
        %2055 = vxpose.xlu0.b32.cont [2/16] %v1889, 128
        %2056 = vxpose.xlu0.b32.cont [3/16] 0.0, 128
        %2057 = vxpose.xlu0.b32.cont [4/16] 0.0, 128
        %2058 = vxpose.xlu0.b32.cont [5/16] 0.0, 128
        %2059 = vxpose.xlu0.b32.cont [6/16] 0.0, 128
        %2060 = vxpose.xlu0.b32.cont [7/16] 0.0, 128
        %2061 = vxpose.xlu0.b32.cont [8/16] 0.0, 128
        %2062 = vxpose.xlu0.b32.cont [9/16] 0.0, 128
        %2063 = vxpose.xlu0.b32.cont [10/16] 0.0, 128
        %2064 = vxpose.xlu0.b32.cont [11/16] 0.0, 128
        %2065 = vxpose.xlu0.b32.cont [12/16] 0.0, 128
        %2066 = vxpose.xlu0.b32.cont [13/16] 0.0, 128
        %2067 = vxpose.xlu0.b32.cont [14/16] 0.0, 128
        %2068 = vxpose.xlu0.b32.cont [15/16] 0.0, 128
        %2069 = vxpose.xlu0.b32.end [16/16] 0.0, 128
        %v2070 = vpop.trf.xlu0
        %v2071 = vpop.trf.xlu0
        %v2072 = vpop.trf.xlu0
        %v2073 = vpop.trf.xlu0
        %v2074 = vpop.trf.xlu0
        %v2075 = vpop.trf.xlu0
        %v2076 = vpop.trf.xlu0
        %v2077 = vpop.trf.xlu0
        %v2078 = vpop.trf.xlu0
        %v2079 = vpop.trf.xlu0
        %v2080 = vpop.trf.xlu0
        %v2081 = vpop.trf.xlu0
        %v2082 = vpop.trf.xlu0
        %v2083 = vpop.trf.xlu0
        %v2084 = vpop.trf.xlu0
        %v2085 = vpop.trf.xlu0
        %2086 = vxpose.xlu0.b32.start [1/16] %v1890, 128
        %2087 = vxpose.xlu0.b32.cont [2/16] %v1891, 128
        %2088 = vxpose.xlu0.b32.cont [3/16] 0.0, 128
        %2089 = vxpose.xlu0.b32.cont [4/16] 0.0, 128
        %2090 = vxpose.xlu0.b32.cont [5/16] 0.0, 128
        %2091 = vxpose.xlu0.b32.cont [6/16] 0.0, 128
        %2092 = vxpose.xlu0.b32.cont [7/16] 0.0, 128
        %2093 = vxpose.xlu0.b32.cont [8/16] 0.0, 128
        %2094 = vxpose.xlu0.b32.cont [9/16] 0.0, 128
        %2095 = vxpose.xlu0.b32.cont [10/16] 0.0, 128
        %2096 = vxpose.xlu0.b32.cont [11/16] 0.0, 128
        %2097 = vxpose.xlu0.b32.cont [12/16] 0.0, 128
        %2098 = vxpose.xlu0.b32.cont [13/16] 0.0, 128
        %2099 = vxpose.xlu0.b32.cont [14/16] 0.0, 128
        %2100 = vxpose.xlu0.b32.cont [15/16] 0.0, 128
        %2101 = vxpose.xlu0.b32.end [16/16] 0.0, 128
        %v2102 = vpop.trf.xlu0
        %v2103 = vpop.trf.xlu0
        %v2104 = vpop.trf.xlu0
        %v2105 = vpop.trf.xlu0
        %v2106 = vpop.trf.xlu0
        %v2107 = vpop.trf.xlu0
        %v2108 = vpop.trf.xlu0
        %v2109 = vpop.trf.xlu0
        %v2110 = vpop.trf.xlu0
        %v2111 = vpop.trf.xlu0
        %v2112 = vpop.trf.xlu0
        %v2113 = vpop.trf.xlu0
        %v2114 = vpop.trf.xlu0
        %v2115 = vpop.trf.xlu0
        %v2116 = vpop.trf.xlu0
        %v2117 = vpop.trf.xlu0
        %2118 = vxpose.xlu0.b32.start [1/16] %v1892, 128
        %2119 = vxpose.xlu0.b32.cont [2/16] %v1893, 128
        %2120 = vxpose.xlu0.b32.cont [3/16] 0.0, 128
        %2121 = vxpose.xlu0.b32.cont [4/16] 0.0, 128
        %2122 = vxpose.xlu0.b32.cont [5/16] 0.0, 128
        %2123 = vxpose.xlu0.b32.cont [6/16] 0.0, 128
        %2124 = vxpose.xlu0.b32.cont [7/16] 0.0, 128
        %2125 = vxpose.xlu0.b32.cont [8/16] 0.0, 128
        %2126 = vxpose.xlu0.b32.cont [9/16] 0.0, 128
        %2127 = vxpose.xlu0.b32.cont [10/16] 0.0, 128
        %2128 = vxpose.xlu0.b32.cont [11/16] 0.0, 128
        %2129 = vxpose.xlu0.b32.cont [12/16] 0.0, 128
        %2130 = vxpose.xlu0.b32.cont [13/16] 0.0, 128
        %2131 = vxpose.xlu0.b32.cont [14/16] 0.0, 128
        %2132 = vxpose.xlu0.b32.cont [15/16] 0.0, 128
        %2133 = vxpose.xlu0.b32.end [16/16] 0.0, 128
        %v2134 = vpop.trf.xlu0
        %v2135 = vpop.trf.xlu0
        %v2136 = vpop.trf.xlu0
        %v2137 = vpop.trf.xlu0
        %v2138 = vpop.trf.xlu0
        %v2139 = vpop.trf.xlu0
        %v2140 = vpop.trf.xlu0
        %v2141 = vpop.trf.xlu0
        %v2142 = vpop.trf.xlu0
        %v2143 = vpop.trf.xlu0
        %v2144 = vpop.trf.xlu0
        %v2145 = vpop.trf.xlu0
        %v2146 = vpop.trf.xlu0
        %v2147 = vpop.trf.xlu0
        %v2148 = vpop.trf.xlu0
        %v2149 = vpop.trf.xlu0
        %vm2150 = vcmask 130048
        %2151 = vst.msk [vmem:[%s444] sm:$0xff] %vm2150, %v1910
        %2152 = vst.msk [vmem:[%s444 + $0x8] sm:$0xff] %vm2150, %v1911
        %2153 = vst.msk [vmem:[%s444 + $0x10] sm:$0xff] %vm2150, %v1912
        %2154 = vst.msk [vmem:[%s444 + $0x18] sm:$0xff] %vm2150, %v1913
        %2155 = vst.msk [vmem:[%s444 + $0x20] sm:$0xff] %vm2150, %v1914
        %2156 = vst.msk [vmem:[%s444 + $0x28] sm:$0xff] %vm2150, %v1915
        %2157 = vst.msk [vmem:[%s444 + $0x30] sm:$0xff] %vm2150, %v1916
        %2158 = vst.msk [vmem:[%s444 + $0x38] sm:$0xff] %vm2150, %v1917
        %2159 = vst.msk [vmem:[%s444 + $0x40] sm:$0xff] %vm2150, %v1918
        %2160 = vst.msk [vmem:[%s444 + $0x48] sm:$0xff] %vm2150, %v1919
        %2161 = vst.msk [vmem:[%s444 + $0x50] sm:$0xff] %vm2150, %v1920
        %2162 = vst.msk [vmem:[%s444 + $0x58] sm:$0xff] %vm2150, %v1921
        %2163 = vst.msk [vmem:[%s444 + $0x60] sm:$0xff] %vm2150, %v1922
        %2164 = vst.msk [vmem:[%s444 + $0x68] sm:$0xff] %vm2150, %v1923
        %2165 = vst.msk [vmem:[%s444 + $0x70] sm:$0xff] %vm2150, %v1924
        %2166 = vst.msk [vmem:[%s444 + $0x78] sm:$0xff] %vm2150, %v1925
        %2167 = vst.msk [vmem:[%s444 + $0x80] sm:$0xff] %vm2150, %v1942
        %2168 = vst.msk [vmem:[%s444 + $0x88] sm:$0xff] %vm2150, %v1943
        %2169 = vst.msk [vmem:[%s444 + $0x90] sm:$0xff] %vm2150, %v1944
        %2170 = vst.msk [vmem:[%s444 + $0x98] sm:$0xff] %vm2150, %v1945
        %2171 = vst.msk [vmem:[%s444 + $0xa0] sm:$0xff] %vm2150, %v1946
        %2172 = vst.msk [vmem:[%s444 + $0xa8] sm:$0xff] %vm2150, %v1947
        %2173 = vst.msk [vmem:[%s444 + $0xb0] sm:$0xff] %vm2150, %v1948
        %2174 = vst.msk [vmem:[%s444 + $0xb8] sm:$0xff] %vm2150, %v1949
        %2175 = vst.msk [vmem:[%s444 + $0xc0] sm:$0xff] %vm2150, %v1950
        %2176 = vst.msk [vmem:[%s444 + $0xc8] sm:$0xff] %vm2150, %v1951
        %2177 = vst.msk [vmem:[%s444 + $0xd0] sm:$0xff] %vm2150, %v1952
        %2178 = vst.msk [vmem:[%s444 + $0xd8] sm:$0xff] %vm2150, %v1953
        %2179 = vst.msk [vmem:[%s444 + $0xe0] sm:$0xff] %vm2150, %v1954
        %2180 = vst.msk [vmem:[%s444 + $0xe8] sm:$0xff] %vm2150, %v1955
        %2181 = vst.msk [vmem:[%s444 + $0xf0] sm:$0xff] %vm2150, %v1956
        %2182 = vst.msk [vmem:[%s444 + $0xf8] sm:$0xff] %vm2150, %v1957
        %2183 = vst.msk [vmem:[%s444 + $0x100] sm:$0xff] %vm2150, %v1974
        %2184 = vst.msk [vmem:[%s444 + $0x108] sm:$0xff] %vm2150, %v1975
        %2185 = vst.msk [vmem:[%s444 + $0x110] sm:$0xff] %vm2150, %v1976
        %2186 = vst.msk [vmem:[%s444 + $0x118] sm:$0xff] %vm2150, %v1977
        %2187 = vst.msk [vmem:[%s444 + $0x120] sm:$0xff] %vm2150, %v1978
        %2188 = vst.msk [vmem:[%s444 + $0x128] sm:$0xff] %vm2150, %v1979
        %2189 = vst.msk [vmem:[%s444 + $0x130] sm:$0xff] %vm2150, %v1980
        %2190 = vst.msk [vmem:[%s444 + $0x138] sm:$0xff] %vm2150, %v1981
        %2191 = vst.msk [vmem:[%s444 + $0x140] sm:$0xff] %vm2150, %v1982
        %2192 = vst.msk [vmem:[%s444 + $0x148] sm:$0xff] %vm2150, %v1983
        %2193 = vst.msk [vmem:[%s444 + $0x150] sm:$0xff] %vm2150, %v1984
        %2194 = vst.msk [vmem:[%s444 + $0x158] sm:$0xff] %vm2150, %v1985
        %2195 = vst.msk [vmem:[%s444 + $0x160] sm:$0xff] %vm2150, %v1986
        %2196 = vst.msk [vmem:[%s444 + $0x168] sm:$0xff] %vm2150, %v1987
        %2197 = vst.msk [vmem:[%s444 + $0x170] sm:$0xff] %vm2150, %v1988
        %2198 = vst.msk [vmem:[%s444 + $0x178] sm:$0xff] %vm2150, %v1989
        %2199 = vst.msk [vmem:[%s444 + $0x180] sm:$0xff] %vm2150, %v2006
        %2200 = vst.msk [vmem:[%s444 + $0x188] sm:$0xff] %vm2150, %v2007
        %2201 = vst.msk [vmem:[%s444 + $0x190] sm:$0xff] %vm2150, %v2008
        %2202 = vst.msk [vmem:[%s444 + $0x198] sm:$0xff] %vm2150, %v2009
        %2203 = vst.msk [vmem:[%s444 + $0x1a0] sm:$0xff] %vm2150, %v2010
        %2204 = vst.msk [vmem:[%s444 + $0x1a8] sm:$0xff] %vm2150, %v2011
        %2205 = vst.msk [vmem:[%s444 + $0x1b0] sm:$0xff] %vm2150, %v2012
        %2206 = vst.msk [vmem:[%s444 + $0x1b8] sm:$0xff] %vm2150, %v2013
        %2207 = vst.msk [vmem:[%s444 + $0x1c0] sm:$0xff] %vm2150, %v2014
        %2208 = vst.msk [vmem:[%s444 + $0x1c8] sm:$0xff] %vm2150, %v2015
        %2209 = vst.msk [vmem:[%s444 + $0x1d0] sm:$0xff] %vm2150, %v2016
        %2210 = vst.msk [vmem:[%s444 + $0x1d8] sm:$0xff] %vm2150, %v2017
        %2211 = vst.msk [vmem:[%s444 + $0x1e0] sm:$0xff] %vm2150, %v2018
        %2212 = vst.msk [vmem:[%s444 + $0x1e8] sm:$0xff] %vm2150, %v2019
        %2213 = vst.msk [vmem:[%s444 + $0x1f0] sm:$0xff] %vm2150, %v2020
        %2214 = vst.msk [vmem:[%s444 + $0x1f8] sm:$0xff] %vm2150, %v2021
        %2215 = vst.msk [vmem:[%s444 + $0x200] sm:$0xff] %vm2150, %v2038
        %2216 = vst.msk [vmem:[%s444 + $0x208] sm:$0xff] %vm2150, %v2039
        %2217 = vst.msk [vmem:[%s444 + $0x210] sm:$0xff] %vm2150, %v2040
        %2218 = vst.msk [vmem:[%s444 + $0x218] sm:$0xff] %vm2150, %v2041
        %2219 = vst.msk [vmem:[%s444 + $0x220] sm:$0xff] %vm2150, %v2042
        %2220 = vst.msk [vmem:[%s444 + $0x228] sm:$0xff] %vm2150, %v2043
        %2221 = vst.msk [vmem:[%s444 + $0x230] sm:$0xff] %vm2150, %v2044
        %2222 = vst.msk [vmem:[%s444 + $0x238] sm:$0xff] %vm2150, %v2045
        %2223 = vst.msk [vmem:[%s444 + $0x240] sm:$0xff] %vm2150, %v2046
        %2224 = vst.msk [vmem:[%s444 + $0x248] sm:$0xff] %vm2150, %v2047
        %2225 = vst.msk [vmem:[%s444 + $0x250] sm:$0xff] %vm2150, %v2048
        %2226 = vst.msk [vmem:[%s444 + $0x258] sm:$0xff] %vm2150, %v2049
        %2227 = vst.msk [vmem:[%s444 + $0x260] sm:$0xff] %vm2150, %v2050
        %2228 = vst.msk [vmem:[%s444 + $0x268] sm:$0xff] %vm2150, %v2051
        %2229 = vst.msk [vmem:[%s444 + $0x270] sm:$0xff] %vm2150, %v2052
        %2230 = vst.msk [vmem:[%s444 + $0x278] sm:$0xff] %vm2150, %v2053
        %2231 = vst.msk [vmem:[%s444 + $0x280] sm:$0xff] %vm2150, %v2070
        %2232 = vst.msk [vmem:[%s444 + $0x288] sm:$0xff] %vm2150, %v2071
        %2233 = vst.msk [vmem:[%s444 + $0x290] sm:$0xff] %vm2150, %v2072
        %2234 = vst.msk [vmem:[%s444 + $0x298] sm:$0xff] %vm2150, %v2073
        %2235 = vst.msk [vmem:[%s444 + $0x2a0] sm:$0xff] %vm2150, %v2074
        %2236 = vst.msk [vmem:[%s444 + $0x2a8] sm:$0xff] %vm2150, %v2075
        %2237 = vst.msk [vmem:[%s444 + $0x2b0] sm:$0xff] %vm2150, %v2076
        %2238 = vst.msk [vmem:[%s444 + $0x2b8] sm:$0xff] %vm2150, %v2077
        %2239 = vst.msk [vmem:[%s444 + $0x2c0] sm:$0xff] %vm2150, %v2078
        %2240 = vst.msk [vmem:[%s444 + $0x2c8] sm:$0xff] %vm2150, %v2079
        %2241 = vst.msk [vmem:[%s444 + $0x2d0] sm:$0xff] %vm2150, %v2080
        %2242 = vst.msk [vmem:[%s444 + $0x2d8] sm:$0xff] %vm2150, %v2081
        %2243 = vst.msk [vmem:[%s444 + $0x2e0] sm:$0xff] %vm2150, %v2082
        %2244 = vst.msk [vmem:[%s444 + $0x2e8] sm:$0xff] %vm2150, %v2083
        %2245 = vst.msk [vmem:[%s444 + $0x2f0] sm:$0xff] %vm2150, %v2084
        %2246 = vst.msk [vmem:[%s444 + $0x2f8] sm:$0xff] %vm2150, %v2085
        %2247 = vst.msk [vmem:[%s444 + $0x300] sm:$0xff] %vm2150, %v2102
        %2248 = vst.msk [vmem:[%s444 + $0x308] sm:$0xff] %vm2150, %v2103
        %2249 = vst.msk [vmem:[%s444 + $0x310] sm:$0xff] %vm2150, %v2104
        %2250 = vst.msk [vmem:[%s444 + $0x318] sm:$0xff] %vm2150, %v2105
        %2251 = vst.msk [vmem:[%s444 + $0x320] sm:$0xff] %vm2150, %v2106
        %2252 = vst.msk [vmem:[%s444 + $0x328] sm:$0xff] %vm2150, %v2107
        %2253 = vst.msk [vmem:[%s444 + $0x330] sm:$0xff] %vm2150, %v2108
        %2254 = vst.msk [vmem:[%s444 + $0x338] sm:$0xff] %vm2150, %v2109
        %2255 = vst.msk [vmem:[%s444 + $0x340] sm:$0xff] %vm2150, %v2110
        %2256 = vst.msk [vmem:[%s444 + $0x348] sm:$0xff] %vm2150, %v2111
        %2257 = vst.msk [vmem:[%s444 + $0x350] sm:$0xff] %vm2150, %v2112
        %2258 = vst.msk [vmem:[%s444 + $0x358] sm:$0xff] %vm2150, %v2113
        %2259 = vst.msk [vmem:[%s444 + $0x360] sm:$0xff] %vm2150, %v2114
        %2260 = vst.msk [vmem:[%s444 + $0x368] sm:$0xff] %vm2150, %v2115
        %2261 = vst.msk [vmem:[%s444 + $0x370] sm:$0xff] %vm2150, %v2116
        %2262 = vst.msk [vmem:[%s444 + $0x378] sm:$0xff] %vm2150, %v2117
        %2263 = vst.msk [vmem:[%s444 + $0x380] sm:$0xff] %vm2150, %v2134
        %2264 = vst.msk [vmem:[%s444 + $0x388] sm:$0xff] %vm2150, %v2135
        %2265 = vst.msk [vmem:[%s444 + $0x390] sm:$0xff] %vm2150, %v2136
        %2266 = vst.msk [vmem:[%s444 + $0x398] sm:$0xff] %vm2150, %v2137
        %2267 = vst.msk [vmem:[%s444 + $0x3a0] sm:$0xff] %vm2150, %v2138
        %2268 = vst.msk [vmem:[%s444 + $0x3a8] sm:$0xff] %vm2150, %v2139
        %2269 = vst.msk [vmem:[%s444 + $0x3b0] sm:$0xff] %vm2150, %v2140
        %2270 = vst.msk [vmem:[%s444 + $0x3b8] sm:$0xff] %vm2150, %v2141
        %2271 = vst.msk [vmem:[%s444 + $0x3c0] sm:$0xff] %vm2150, %v2142
        %2272 = vst.msk [vmem:[%s444 + $0x3c8] sm:$0xff] %vm2150, %v2143
        %2273 = vst.msk [vmem:[%s444 + $0x3d0] sm:$0xff] %vm2150, %v2144
        %2274 = vst.msk [vmem:[%s444 + $0x3d8] sm:$0xff] %vm2150, %v2145
        %2275 = vst.msk [vmem:[%s444 + $0x3e0] sm:$0xff] %vm2150, %v2146
        %2276 = vst.msk [vmem:[%s444 + $0x3e8] sm:$0xff] %vm2150, %v2147
        %2277 = vst.msk [vmem:[%s444 + $0x3f0] sm:$0xff] %vm2150, %v2148
        %2278 = vst.msk [vmem:[%s444 + $0x3f8] sm:$0xff] %vm2150, %v2149
        %v2279 = vld [vmem:[#allocation10 + $0x8] sm:$0xff]
        %v2280 = vld [vmem:[#allocation10 + $0x20] sm:$0xff]
        %v2281 = vld [vmem:[#allocation10 + $0x38] sm:$0xff]
        %v2282 = vld [vmem:[#allocation10 + $0x50] sm:$0xff]
        %v2283 = vld [vmem:[#allocation10 + $0x68] sm:$0xff]
        %v2284 = vld [vmem:[#allocation10 + $0x80] sm:$0xff]
        %v2285 = vld [vmem:[#allocation10 + $0x98] sm:$0xff]
        %v2286 = vld [vmem:[#allocation10 + $0xb0] sm:$0xff]
        %v2287 = vld [vmem:[#allocation10 + $0xc8] sm:$0xff]
        %v2288 = vld [vmem:[#allocation10 + $0xe0] sm:$0xff]
        %v2289 = vld [vmem:[#allocation10 + $0xf8] sm:$0xff]
        %v2290 = vld [vmem:[#allocation10 + $0x110] sm:$0xff]
        %v2291 = vld [vmem:[#allocation10 + $0x128] sm:$0xff]
        %v2292 = vld [vmem:[#allocation10 + $0x140] sm:$0xff]
        %v2293 = vld [vmem:[#allocation10 + $0x158] sm:$0xff]
        %v2294 = vld [vmem:[#allocation10 + $0x170] sm:$0xff]
        %v2295 = vld [vmem:[%s5 + $0x1] sm:$0x1]
        %v2297 = vperm.slane %v2295, 0
        %2299 = vmatpush.msra.mxu0 %v2294
        %2300 = vmatpush.msra.mxu0 %v2293
        %2301 = vmatpush.msra.mxu0 %v2292
        %2302 = vmatpush.msra.mxu0 %v2291
        %2303 = vmatpush.msra.mxu0 %v2290
        %2304 = vmatpush.msra.mxu0 %v2289
        %2305 = vmatpush.msra.mxu0 %v2288
        %2306 = vmatpush.msra.mxu0 %v2287
        %2307 = vmatpush.msra.mxu0 %v2286
        %2308 = vmatpush.msra.mxu0 %v2285
        %2309 = vmatpush.msra.mxu0 %v2284
        %2310 = vmatpush.msra.mxu0 %v2283
        %2311 = vmatpush.msra.mxu0 %v2282
        %2312 = vmatpush.msra.mxu0 %v2281
        %2313 = vmatpush.msra.mxu0 %v2280
        %2314 = vmatpush.msra.mxu0 %v2279
        %2315 = vmatmul.f32.gmra.mxu0 %v1745
        %v2316 = vpop.f32.mrf.mxu0
        %v2317 = vadd.f32 %v2297, %v2316
        %2318 = vmatmul.f32.gmra.mxu0 %v1746
        %v2319 = vpop.f32.mrf.mxu0
        %v2320 = vadd.f32 %v2297, %v2319
        %2321 = vmatmul.f32.gmra.mxu0 %v1747
        %v2322 = vpop.f32.mrf.mxu0
        %v2323 = vadd.f32 %v2297, %v2322
        %2324 = vmatmul.f32.gmra.mxu0 %v1748
        %v2325 = vpop.f32.mrf.mxu0
        %v2326 = vadd.f32 %v2297, %v2325
        %2327 = vmatmul.f32.gmra.mxu0 %v1749
        %v2328 = vpop.f32.mrf.mxu0
        %v2329 = vadd.f32 %v2297, %v2328
        %2330 = vmatmul.f32.gmra.mxu0 %v1750
        %v2331 = vpop.f32.mrf.mxu0
        %v2332 = vadd.f32 %v2297, %v2331
        %2333 = vmatmul.f32.gmra.mxu0 %v1751
        %v2334 = vpop.f32.mrf.mxu0
        %v2335 = vadd.f32 %v2297, %v2334
        %2336 = vmatmul.f32.gmra.mxu0 %v1752
        %v2337 = vpop.f32.mrf.mxu0
        %v2338 = vadd.f32 %v2297, %v2337
        %2339 = vmatmul.f32.gmra.mxu0 %v1753
        %v2340 = vpop.f32.mrf.mxu0
        %v2341 = vadd.f32 %v2297, %v2340
        %2342 = vmatmul.f32.gmra.mxu0 %v1754
        %v2343 = vpop.f32.mrf.mxu0
        %v2344 = vadd.f32 %v2297, %v2343
        %2345 = vmatmul.f32.gmra.mxu0 %v1755
        %v2346 = vpop.f32.mrf.mxu0
        %v2347 = vadd.f32 %v2297, %v2346
        %2348 = vmatmul.f32.gmra.mxu0 %v1756
        %v2349 = vpop.f32.mrf.mxu0
        %v2350 = vadd.f32 %v2297, %v2349
        %2351 = vmatmul.f32.gmra.mxu0 %v1757
        %v2352 = vpop.f32.mrf.mxu0
        %v2353 = vadd.f32 %v2297, %v2352
        %2354 = vmatmul.f32.gmra.mxu0 %v1758
        %v2355 = vpop.f32.mrf.mxu0
        %v2356 = vadd.f32 %v2297, %v2355
        %2357 = vmatmul.f32.gmra.mxu0 %v1759
        %v2358 = vpop.f32.mrf.mxu0
        %v2359 = vadd.f32 %v2297, %v2358
        %2360 = vmatmul.f32.gmra.mxu0 %v1760
        %v2361 = vpop.f32.mrf.mxu0
        %v2362 = vadd.f32 %v2297, %v2361
        %2363 = vdwg.mxu0
        %2364 = vxpose.xlu0.b32.start [1/16] %v2317, 128
        %2365 = vxpose.xlu0.b32.cont [2/16] %v2320, 128
        %2366 = vxpose.xlu0.b32.cont [3/16] %v2323, 128
        %2367 = vxpose.xlu0.b32.cont [4/16] %v2326, 128
        %2368 = vxpose.xlu0.b32.cont [5/16] %v2329, 128
        %2369 = vxpose.xlu0.b32.cont [6/16] %v2332, 128
        %2370 = vxpose.xlu0.b32.cont [7/16] %v2335, 128
        %2371 = vxpose.xlu0.b32.cont [8/16] %v2338, 128
        %2372 = vxpose.xlu0.b32.cont [9/16] %v2341, 128
        %2373 = vxpose.xlu0.b32.cont [10/16] %v2344, 128
        %2374 = vxpose.xlu0.b32.cont [11/16] %v2347, 128
        %2375 = vxpose.xlu0.b32.cont [12/16] %v2350, 128
        %2376 = vxpose.xlu0.b32.cont [13/16] %v2353, 128
        %2377 = vxpose.xlu0.b32.cont [14/16] %v2356, 128
        %2378 = vxpose.xlu0.b32.cont [15/16] %v2359, 128
        %2379 = vxpose.xlu0.b32.end [16/16] %v2362, 128
        %v2380 = vpop.trf.xlu0
        %v2381 = vpop.trf.xlu0
        %v2382 = vpop.trf.xlu0
        %v2383 = vpop.trf.xlu0
        %v2384 = vpop.trf.xlu0
        %v2385 = vpop.trf.xlu0
        %v2386 = vpop.trf.xlu0
        %v2387 = vpop.trf.xlu0
        %v2388 = vpop.trf.xlu0
        %v2389 = vpop.trf.xlu0
        %v2390 = vpop.trf.xlu0
        %v2391 = vpop.trf.xlu0
        %v2392 = vpop.trf.xlu0
        %v2393 = vpop.trf.xlu0
        %v2394 = vpop.trf.xlu0
        %v2395 = vpop.trf.xlu0
        %2396 = vst [vmem:[%s451] sm:$0xff] %v2380
        %2397 = vst [vmem:[%s451 + $0x8] sm:$0xff] %v2381
        %2398 = vst [vmem:[%s451 + $0x10] sm:$0xff] %v2382
        %2399 = vst [vmem:[%s451 + $0x18] sm:$0xff] %v2383
        %2400 = vst [vmem:[%s451 + $0x20] sm:$0xff] %v2384
        %2401 = vst [vmem:[%s451 + $0x28] sm:$0xff] %v2385
        %2402 = vst [vmem:[%s451 + $0x30] sm:$0xff] %v2386
        %2403 = vst [vmem:[%s451 + $0x38] sm:$0xff] %v2387
        %2404 = vst [vmem:[%s451 + $0x40] sm:$0xff] %v2388
        %2405 = vst [vmem:[%s451 + $0x48] sm:$0xff] %v2389
        %2406 = vst [vmem:[%s451 + $0x50] sm:$0xff] %v2390
        %2407 = vst [vmem:[%s451 + $0x58] sm:$0xff] %v2391
        %2408 = vst [vmem:[%s451 + $0x60] sm:$0xff] %v2392
        %2409 = vst [vmem:[%s451 + $0x68] sm:$0xff] %v2393
        %2410 = vst [vmem:[%s451 + $0x70] sm:$0xff] %v2394
        %2411 = vst [vmem:[%s451 + $0x78] sm:$0xff] %v2395
        %v2412 = vld [vmem:[#allocation10 + $0x10] sm:$0xff]
        %v2413 = vld [vmem:[#allocation10 + $0x28] sm:$0xff]
        %v2414 = vld [vmem:[#allocation10 + $0x40] sm:$0xff]
        %v2415 = vld [vmem:[#allocation10 + $0x58] sm:$0xff]
        %v2416 = vld [vmem:[#allocation10 + $0x70] sm:$0xff]
        %v2417 = vld [vmem:[#allocation10 + $0x88] sm:$0xff]
        %v2418 = vld [vmem:[#allocation10 + $0xa0] sm:$0xff]
        %v2419 = vld [vmem:[#allocation10 + $0xb8] sm:$0xff]
        %v2420 = vld [vmem:[#allocation10 + $0xd0] sm:$0xff]
        %v2421 = vld [vmem:[#allocation10 + $0xe8] sm:$0xff]
        %v2422 = vld [vmem:[#allocation10 + $0x100] sm:$0xff]
        %v2423 = vld [vmem:[#allocation10 + $0x118] sm:$0xff]
        %v2424 = vld [vmem:[#allocation10 + $0x130] sm:$0xff]
        %v2425 = vld [vmem:[#allocation10 + $0x148] sm:$0xff]
        %v2426 = vld [vmem:[#allocation10 + $0x160] sm:$0xff]
        %v2427 = vld [vmem:[#allocation10 + $0x178] sm:$0xff]
        %v2428 = vld [vmem:[%s5 + $0x2] sm:$0x1]
        %v2430 = vperm.slane %v2428, 0
        %2432 = vmatpush.msra.mxu0 %v2427
        %2433 = vmatpush.msra.mxu0 %v2426
        %2434 = vmatpush.msra.mxu0 %v2425
        %2435 = vmatpush.msra.mxu0 %v2424
        %2436 = vmatpush.msra.mxu0 %v2423
        %2437 = vmatpush.msra.mxu0 %v2422
        %2438 = vmatpush.msra.mxu0 %v2421
        %2439 = vmatpush.msra.mxu0 %v2420
        %2440 = vmatpush.msra.mxu0 %v2419
        %2441 = vmatpush.msra.mxu0 %v2418
        %2442 = vmatpush.msra.mxu0 %v2417
        %2443 = vmatpush.msra.mxu0 %v2416
        %2444 = vmatpush.msra.mxu0 %v2415
        %2445 = vmatpush.msra.mxu0 %v2414
        %2446 = vmatpush.msra.mxu0 %v2413
        %2447 = vmatpush.msra.mxu0 %v2412
        %2448 = vmatmul.f32.gmra.mxu0 %v1745
        %v2449 = vpop.f32.mrf.mxu0
        %v2450 = vadd.f32 %v2430, %v2449
        %2451 = vmatmul.f32.gmra.mxu0 %v1746
        %v2452 = vpop.f32.mrf.mxu0
        %v2453 = vadd.f32 %v2430, %v2452
        %2454 = vmatmul.f32.gmra.mxu0 %v1747
        %v2455 = vpop.f32.mrf.mxu0
        %v2456 = vadd.f32 %v2430, %v2455
        %2457 = vmatmul.f32.gmra.mxu0 %v1748
        %v2458 = vpop.f32.mrf.mxu0
        %v2459 = vadd.f32 %v2430, %v2458
        %2460 = vmatmul.f32.gmra.mxu0 %v1749
        %v2461 = vpop.f32.mrf.mxu0
        %v2462 = vadd.f32 %v2430, %v2461
        %2463 = vmatmul.f32.gmra.mxu0 %v1750
        %v2464 = vpop.f32.mrf.mxu0
        %v2465 = vadd.f32 %v2430, %v2464
        %2466 = vmatmul.f32.gmra.mxu0 %v1751
        %v2467 = vpop.f32.mrf.mxu0
        %v2468 = vadd.f32 %v2430, %v2467
        %2469 = vmatmul.f32.gmra.mxu0 %v1752
        %v2470 = vpop.f32.mrf.mxu0
        %v2471 = vadd.f32 %v2430, %v2470
        %2472 = vmatmul.f32.gmra.mxu0 %v1753
        %v2473 = vpop.f32.mrf.mxu0
        %v2474 = vadd.f32 %v2430, %v2473
        %2475 = vmatmul.f32.gmra.mxu0 %v1754
        %v2476 = vpop.f32.mrf.mxu0
        %v2477 = vadd.f32 %v2430, %v2476
        %2478 = vmatmul.f32.gmra.mxu0 %v1755
        %v2479 = vpop.f32.mrf.mxu0
        %v2480 = vadd.f32 %v2430, %v2479
        %2481 = vmatmul.f32.gmra.mxu0 %v1756
        %v2482 = vpop.f32.mrf.mxu0
        %v2483 = vadd.f32 %v2430, %v2482
        %2484 = vmatmul.f32.gmra.mxu0 %v1757
        %v2485 = vpop.f32.mrf.mxu0
        %v2486 = vadd.f32 %v2430, %v2485
        %2487 = vmatmul.f32.gmra.mxu0 %v1758
        %v2488 = vpop.f32.mrf.mxu0
        %v2489 = vadd.f32 %v2430, %v2488
        %2490 = vmatmul.f32.gmra.mxu0 %v1759
        %v2491 = vpop.f32.mrf.mxu0
        %v2492 = vadd.f32 %v2430, %v2491
        %2493 = vmatmul.f32.gmra.mxu0 %v1760
        %v2494 = vpop.f32.mrf.mxu0
        %v2495 = vadd.f32 %v2430, %v2494
        %2496 = vdwg.mxu0
        %2497 = vxpose.xlu0.b32.start [1/16] %v2450, 128
        %2498 = vxpose.xlu0.b32.cont [2/16] %v2453, 128
        %2499 = vxpose.xlu0.b32.cont [3/16] %v2456, 128
        %2500 = vxpose.xlu0.b32.cont [4/16] %v2459, 128
        %2501 = vxpose.xlu0.b32.cont [5/16] %v2462, 128
        %2502 = vxpose.xlu0.b32.cont [6/16] %v2465, 128
        %2503 = vxpose.xlu0.b32.cont [7/16] %v2468, 128
        %2504 = vxpose.xlu0.b32.cont [8/16] %v2471, 128
        %2505 = vxpose.xlu0.b32.cont [9/16] %v2474, 128
        %2506 = vxpose.xlu0.b32.cont [10/16] %v2477, 128
        %2507 = vxpose.xlu0.b32.cont [11/16] %v2480, 128
        %2508 = vxpose.xlu0.b32.cont [12/16] %v2483, 128
        %2509 = vxpose.xlu0.b32.cont [13/16] %v2486, 128
        %2510 = vxpose.xlu0.b32.cont [14/16] %v2489, 128
        %2511 = vxpose.xlu0.b32.cont [15/16] %v2492, 128
        %2512 = vxpose.xlu0.b32.end [16/16] %v2495, 128
        %v2513 = vpop.trf.xlu0
        %v2514 = vpop.trf.xlu0
        %v2515 = vpop.trf.xlu0
        %v2516 = vpop.trf.xlu0
        %v2517 = vpop.trf.xlu0
        %v2518 = vpop.trf.xlu0
        %v2519 = vpop.trf.xlu0
        %v2520 = vpop.trf.xlu0
        %v2521 = vpop.trf.xlu0
        %v2522 = vpop.trf.xlu0
        %v2523 = vpop.trf.xlu0
        %v2524 = vpop.trf.xlu0
        %v2525 = vpop.trf.xlu0
        %v2526 = vpop.trf.xlu0
        %v2527 = vpop.trf.xlu0
        %v2528 = vpop.trf.xlu0
        %2529 = vst [vmem:[%s458] sm:$0xff] %v2513
        %2530 = vst [vmem:[%s458 + $0x8] sm:$0xff] %v2514
        %2531 = vst [vmem:[%s458 + $0x10] sm:$0xff] %v2515
        %2532 = vst [vmem:[%s458 + $0x18] sm:$0xff] %v2516
        %2533 = vst [vmem:[%s458 + $0x20] sm:$0xff] %v2517
        %2534 = vst [vmem:[%s458 + $0x28] sm:$0xff] %v2518
        %2535 = vst [vmem:[%s458 + $0x30] sm:$0xff] %v2519
        %2536 = vst [vmem:[%s458 + $0x38] sm:$0xff] %v2520
        %2537 = vst [vmem:[%s458 + $0x40] sm:$0xff] %v2521
        %2538 = vst [vmem:[%s458 + $0x48] sm:$0xff] %v2522
        %2539 = vst [vmem:[%s458 + $0x50] sm:$0xff] %v2523
        %2540 = vst [vmem:[%s458 + $0x58] sm:$0xff] %v2524
        %2541 = vst [vmem:[%s458 + $0x60] sm:$0xff] %v2525
        %2542 = vst [vmem:[%s458 + $0x68] sm:$0xff] %v2526
        %2543 = vst [vmem:[%s458 + $0x70] sm:$0xff] %v2527
        %2544 = vst [vmem:[%s458 + $0x78] sm:$0xff] %v2528
        %s2545 = sand.u32 %s178, 1
        %s2546 = sand.u32 %s178, 1
        %s2547 = smul.addr %s2546, 1024
        %s2548 = scalar_lea.vmem [#allocation11], %s2547
        %s2549 = sand.u32 %s204, 1
        %s2550 = scalar_lea.sflag [#allocation4], %s2549
        %s2551 = sand.u32 %s204, 1
        %s2552 = smul.addr %s2551, 128
        %s2553 = scalar_lea.vmem [#allocation12], %s2552
        %s2554 = sand.u32 %s34, 1
        %s2555 = scalar_lea.sflag [#allocation14], %s2554
        %s2556 = sand.u32 %s230, 1
        %s2557 = smul.addr %s2556, 128
        %s2558 = scalar_lea.vmem [#allocation13], %s2557
        %s2559 = sand.u32 %s34, 1
        %s2560 = scalar_lea.sflag [#allocation14], %s2559
        %s2561 = sand.u32 %s256, 1
        %s2562 = smul.addr %s2561, 512
        %s2563 = scalar_lea.vmem [#allocation15], %s2562
        // Predicated region
        $region65: #{tpu_custom_call.1} parent=43 // pred_check
          %p2564 = pneg %p188
        $region66: #{tpu_custom_call.1} parent=43 // pred_check_branch
          %2566 = sbr.rel (%p2564) target = $region68
        $region67: #{tpu_custom_call.1} parent=43 // pred_region
          %s2567 = smul.u32 16, %s34
          %s2568 = smul.addr %s2567, 8
          %s2569 = scalar_lea.vmem %s6, %s2568
          // Predicated region
          $region69: #{tpu_custom_call.1} parent=67 // pred_check
            _
          $region70: #{tpu_custom_call.1} parent=67 // pred_check_branch
            %2571 = sbr.rel (0) target = $region72
          $region71: #{tpu_custom_call.1} parent=67 // pred_region
            // Predicated region
            $region73: #{tpu_custom_call.1} parent=71 // pred_check
              _
            $region74: #{tpu_custom_call.1} parent=71 // pred_check_branch
              %2573 = sbr.rel (0) target = $region76
            $region75: #{tpu_custom_call.1} parent=71 // pred_region
              // Predicated region
              $region88: #{tpu_custom_call.1} parent=75 // pred_check
                _
              $region89: #{tpu_custom_call.1} parent=75 // pred_check_branch
                %2843 = sbr.rel (0) target = $region91
              $region90: #{tpu_custom_call.1} parent=75 // pred_region
                loop: start=0, step=1, limit=1
                $region92: #{tpu_custom_call.1} parent=90 // loop_pre_header
                  _
                $region93: #{tpu_custom_call.1} parent=90 // loop_header
                  %s2845 = sphi 0, %s2849
                  %p2846 = scmp.ge.s32.totalorder %s2845, 1
                  %s2850 = sphi %s2548, %s2548
                  %s2851 = sphi %s2569, %s2569
                $region94: #{tpu_custom_call.1} parent=90 // loop_header_branch
                  %2848 = sbr.rel (%p2846) target = $region98
                $region95: #{tpu_custom_call.1} parent=90 // loop_body
                  %v2852 = vld [vmem:[%s2850] sm:$0xff]
                  %2853 = vst [vmem:[%s2851] sm:$0xff] %v2852
                  %v2854 = vld [vmem:[%s2850 + $0x8] sm:$0xff]
                  %2855 = vst [vmem:[%s2851 + $0x8] sm:$0xff] %v2854
                  %v2856 = vld [vmem:[%s2850 + $0x10] sm:$0xff]
                  %2857 = vst [vmem:[%s2851 + $0x10] sm:$0xff] %v2856
                  %v2858 = vld [vmem:[%s2850 + $0x18] sm:$0xff]
                  %2859 = vst [vmem:[%s2851 + $0x18] sm:$0xff] %v2858
                  %v2860 = vld [vmem:[%s2850 + $0x20] sm:$0xff]
                  %2861 = vst [vmem:[%s2851 + $0x20] sm:$0xff] %v2860
                  %v2862 = vld [vmem:[%s2850 + $0x28] sm:$0xff]
                  %2863 = vst [vmem:[%s2851 + $0x28] sm:$0xff] %v2862
                  %v2864 = vld [vmem:[%s2850 + $0x30] sm:$0xff]
                  %2865 = vst [vmem:[%s2851 + $0x30] sm:$0xff] %v2864
                  %v2866 = vld [vmem:[%s2850 + $0x38] sm:$0xff]
                  %2867 = vst [vmem:[%s2851 + $0x38] sm:$0xff] %v2866
                  %v2868 = vld [vmem:[%s2850 + $0x40] sm:$0xff]
                  %2869 = vst [vmem:[%s2851 + $0x40] sm:$0xff] %v2868
                  %v2870 = vld [vmem:[%s2850 + $0x48] sm:$0xff]
                  %2871 = vst [vmem:[%s2851 + $0x48] sm:$0xff] %v2870
                  %v2872 = vld [vmem:[%s2850 + $0x50] sm:$0xff]
                  %2873 = vst [vmem:[%s2851 + $0x50] sm:$0xff] %v2872
                  %v2874 = vld [vmem:[%s2850 + $0x58] sm:$0xff]
                  %2875 = vst [vmem:[%s2851 + $0x58] sm:$0xff] %v2874
                  %v2876 = vld [vmem:[%s2850 + $0x60] sm:$0xff]
                  %2877 = vst [vmem:[%s2851 + $0x60] sm:$0xff] %v2876
                  %v2878 = vld [vmem:[%s2850 + $0x68] sm:$0xff]
                  %2879 = vst [vmem:[%s2851 + $0x68] sm:$0xff] %v2878
                  %v2880 = vld [vmem:[%s2850 + $0x70] sm:$0xff]
                  %2881 = vst [vmem:[%s2851 + $0x70] sm:$0xff] %v2880
                  %v2882 = vld [vmem:[%s2850 + $0x78] sm:$0xff]
                  %2883 = vst [vmem:[%s2851 + $0x78] sm:$0xff] %v2882
                  %v2884 = vld [vmem:[%s2850 + $0x80] sm:$0xff]
                  %2885 = vst [vmem:[%s2851 + $0x100] sm:$0xff] %v2884
                  %v2886 = vld [vmem:[%s2850 + $0x88] sm:$0xff]
                  %2887 = vst [vmem:[%s2851 + $0x108] sm:$0xff] %v2886
                  %v2888 = vld [vmem:[%s2850 + $0x90] sm:$0xff]
                  %2889 = vst [vmem:[%s2851 + $0x110] sm:$0xff] %v2888
                  %v2890 = vld [vmem:[%s2850 + $0x98] sm:$0xff]
                  %2891 = vst [vmem:[%s2851 + $0x118] sm:$0xff] %v2890
                  %v2892 = vld [vmem:[%s2850 + $0xa0] sm:$0xff]
                  %2893 = vst [vmem:[%s2851 + $0x120] sm:$0xff] %v2892
                  %v2894 = vld [vmem:[%s2850 + $0xa8] sm:$0xff]
                  %2895 = vst [vmem:[%s2851 + $0x128] sm:$0xff] %v2894
                  %v2896 = vld [vmem:[%s2850 + $0xb0] sm:$0xff]
                  %2897 = vst [vmem:[%s2851 + $0x130] sm:$0xff] %v2896
                  %v2898 = vld [vmem:[%s2850 + $0xb8] sm:$0xff]
                  %2899 = vst [vmem:[%s2851 + $0x138] sm:$0xff] %v2898
                  %v2900 = vld [vmem:[%s2850 + $0xc0] sm:$0xff]
                  %2901 = vst [vmem:[%s2851 + $0x140] sm:$0xff] %v2900
                  %v2902 = vld [vmem:[%s2850 + $0xc8] sm:$0xff]
                  %2903 = vst [vmem:[%s2851 + $0x148] sm:$0xff] %v2902
                  %v2904 = vld [vmem:[%s2850 + $0xd0] sm:$0xff]
                  %2905 = vst [vmem:[%s2851 + $0x150] sm:$0xff] %v2904
                  %v2906 = vld [vmem:[%s2850 + $0xd8] sm:$0xff]
                  %2907 = vst [vmem:[%s2851 + $0x158] sm:$0xff] %v2906
                  %v2908 = vld [vmem:[%s2850 + $0xe0] sm:$0xff]
                  %2909 = vst [vmem:[%s2851 + $0x160] sm:$0xff] %v2908
                  %v2910 = vld [vmem:[%s2850 + $0xe8] sm:$0xff]
                  %2911 = vst [vmem:[%s2851 + $0x168] sm:$0xff] %v2910
                  %v2912 = vld [vmem:[%s2850 + $0xf0] sm:$0xff]
                  %2913 = vst [vmem:[%s2851 + $0x170] sm:$0xff] %v2912
                  %v2914 = vld [vmem:[%s2850 + $0xf8] sm:$0xff]
                  %2915 = vst [vmem:[%s2851 + $0x178] sm:$0xff] %v2914
                  %v2916 = vld [vmem:[%s2850 + $0x100] sm:$0xff]
                  %2917 = vst [vmem:[%s2851 + $0x200] sm:$0xff] %v2916
                  %v2918 = vld [vmem:[%s2850 + $0x108] sm:$0xff]
                  %2919 = vst [vmem:[%s2851 + $0x208] sm:$0xff] %v2918
                  %v2920 = vld [vmem:[%s2850 + $0x110] sm:$0xff]
                  %2921 = vst [vmem:[%s2851 + $0x210] sm:$0xff] %v2920
                  %v2922 = vld [vmem:[%s2850 + $0x118] sm:$0xff]
                  %2923 = vst [vmem:[%s2851 + $0x218] sm:$0xff] %v2922
                  %v2924 = vld [vmem:[%s2850 + $0x120] sm:$0xff]
                  %2925 = vst [vmem:[%s2851 + $0x220] sm:$0xff] %v2924
                  %v2926 = vld [vmem:[%s2850 + $0x128] sm:$0xff]
                  %2927 = vst [vmem:[%s2851 + $0x228] sm:$0xff] %v2926
                  %v2928 = vld [vmem:[%s2850 + $0x130] sm:$0xff]
                  %2929 = vst [vmem:[%s2851 + $0x230] sm:$0xff] %v2928
                  %v2930 = vld [vmem:[%s2850 + $0x138] sm:$0xff]
                  %2931 = vst [vmem:[%s2851 + $0x238] sm:$0xff] %v2930
                  %v2932 = vld [vmem:[%s2850 + $0x140] sm:$0xff]
                  %2933 = vst [vmem:[%s2851 + $0x240] sm:$0xff] %v2932
                  %v2934 = vld [vmem:[%s2850 + $0x148] sm:$0xff]
                  %2935 = vst [vmem:[%s2851 + $0x248] sm:$0xff] %v2934
                  %v2936 = vld [vmem:[%s2850 + $0x150] sm:$0xff]
                  %2937 = vst [vmem:[%s2851 + $0x250] sm:$0xff] %v2936
                  %v2938 = vld [vmem:[%s2850 + $0x158] sm:$0xff]
                  %2939 = vst [vmem:[%s2851 + $0x258] sm:$0xff] %v2938
                  %v2940 = vld [vmem:[%s2850 + $0x160] sm:$0xff]
                  %2941 = vst [vmem:[%s2851 + $0x260] sm:$0xff] %v2940
                  %v2942 = vld [vmem:[%s2850 + $0x168] sm:$0xff]
                  %2943 = vst [vmem:[%s2851 + $0x268] sm:$0xff] %v2942
                  %v2944 = vld [vmem:[%s2850 + $0x170] sm:$0xff]
                  %2945 = vst [vmem:[%s2851 + $0x270] sm:$0xff] %v2944
                  %v2946 = vld [vmem:[%s2850 + $0x178] sm:$0xff]
                  %2947 = vst [vmem:[%s2851 + $0x278] sm:$0xff] %v2946
                  %v2948 = vld [vmem:[%s2850 + $0x180] sm:$0xff]
                  %2949 = vst [vmem:[%s2851 + $0x300] sm:$0xff] %v2948
                  %v2950 = vld [vmem:[%s2850 + $0x188] sm:$0xff]
                  %2951 = vst [vmem:[%s2851 + $0x308] sm:$0xff] %v2950
                  %v2952 = vld [vmem:[%s2850 + $0x190] sm:$0xff]
                  %2953 = vst [vmem:[%s2851 + $0x310] sm:$0xff] %v2952
                  %v2954 = vld [vmem:[%s2850 + $0x198] sm:$0xff]
                  %2955 = vst [vmem:[%s2851 + $0x318] sm:$0xff] %v2954
                  %v2956 = vld [vmem:[%s2850 + $0x1a0] sm:$0xff]
                  %2957 = vst [vmem:[%s2851 + $0x320] sm:$0xff] %v2956
                  %v2958 = vld [vmem:[%s2850 + $0x1a8] sm:$0xff]
                  %2959 = vst [vmem:[%s2851 + $0x328] sm:$0xff] %v2958
                  %v2960 = vld [vmem:[%s2850 + $0x1b0] sm:$0xff]
                  %2961 = vst [vmem:[%s2851 + $0x330] sm:$0xff] %v2960
                  %v2962 = vld [vmem:[%s2850 + $0x1b8] sm:$0xff]
                  %2963 = vst [vmem:[%s2851 + $0x338] sm:$0xff] %v2962
                  %v2964 = vld [vmem:[%s2850 + $0x1c0] sm:$0xff]
                  %2965 = vst [vmem:[%s2851 + $0x340] sm:$0xff] %v2964
                  %v2966 = vld [vmem:[%s2850 + $0x1c8] sm:$0xff]
                  %2967 = vst [vmem:[%s2851 + $0x348] sm:$0xff] %v2966
                  %v2968 = vld [vmem:[%s2850 + $0x1d0] sm:$0xff]
                  %2969 = vst [vmem:[%s2851 + $0x350] sm:$0xff] %v2968
                  %v2970 = vld [vmem:[%s2850 + $0x1d8] sm:$0xff]
                  %2971 = vst [vmem:[%s2851 + $0x358] sm:$0xff] %v2970
                  %v2972 = vld [vmem:[%s2850 + $0x1e0] sm:$0xff]
                  %2973 = vst [vmem:[%s2851 + $0x360] sm:$0xff] %v2972
                  %v2974 = vld [vmem:[%s2850 + $0x1e8] sm:$0xff]
                  %2975 = vst [vmem:[%s2851 + $0x368] sm:$0xff] %v2974
                  %v2976 = vld [vmem:[%s2850 + $0x1f0] sm:$0xff]
                  %2977 = vst [vmem:[%s2851 + $0x370] sm:$0xff] %v2976
                  %v2978 = vld [vmem:[%s2850 + $0x1f8] sm:$0xff]
                  %2979 = vst [vmem:[%s2851 + $0x378] sm:$0xff] %v2978
                  %v2980 = vld [vmem:[%s2850 + $0x200] sm:$0xff]
                  %2981 = vst [vmem:[%s2851 + $0x400] sm:$0xff] %v2980
                  %v2982 = vld [vmem:[%s2850 + $0x208] sm:$0xff]
                  %2983 = vst [vmem:[%s2851 + $0x408] sm:$0xff] %v2982
                  %v2984 = vld [vmem:[%s2850 + $0x210] sm:$0xff]
                  %2985 = vst [vmem:[%s2851 + $0x410] sm:$0xff] %v2984
                  %v2986 = vld [vmem:[%s2850 + $0x218] sm:$0xff]
                  %2987 = vst [vmem:[%s2851 + $0x418] sm:$0xff] %v2986
                  %v2988 = vld [vmem:[%s2850 + $0x220] sm:$0xff]
                  %2989 = vst [vmem:[%s2851 + $0x420] sm:$0xff] %v2988
                  %v2990 = vld [vmem:[%s2850 + $0x228] sm:$0xff]
                  %2991 = vst [vmem:[%s2851 + $0x428] sm:$0xff] %v2990
                  %v2992 = vld [vmem:[%s2850 + $0x230] sm:$0xff]
                  %2993 = vst [vmem:[%s2851 + $0x430] sm:$0xff] %v2992
                  %v2994 = vld [vmem:[%s2850 + $0x238] sm:$0xff]
                  %2995 = vst [vmem:[%s2851 + $0x438] sm:$0xff] %v2994
                  %v2996 = vld [vmem:[%s2850 + $0x240] sm:$0xff]
                  %2997 = vst [vmem:[%s2851 + $0x440] sm:$0xff] %v2996
                  %v2998 = vld [vmem:[%s2850 + $0x248] sm:$0xff]
                  %2999 = vst [vmem:[%s2851 + $0x448] sm:$0xff] %v2998
                  %v3000 = vld [vmem:[%s2850 + $0x250] sm:$0xff]
                  %3001 = vst [vmem:[%s2851 + $0x450] sm:$0xff] %v3000
                  %v3002 = vld [vmem:[%s2850 + $0x258] sm:$0xff]
                  %3003 = vst [vmem:[%s2851 + $0x458] sm:$0xff] %v3002
                  %v3004 = vld [vmem:[%s2850 + $0x260] sm:$0xff]
                  %3005 = vst [vmem:[%s2851 + $0x460] sm:$0xff] %v3004
                  %v3006 = vld [vmem:[%s2850 + $0x268] sm:$0xff]
                  %3007 = vst [vmem:[%s2851 + $0x468] sm:$0xff] %v3006
                  %v3008 = vld [vmem:[%s2850 + $0x270] sm:$0xff]
                  %3009 = vst [vmem:[%s2851 + $0x470] sm:$0xff] %v3008
                  %v3010 = vld [vmem:[%s2850 + $0x278] sm:$0xff]
                  %3011 = vst [vmem:[%s2851 + $0x478] sm:$0xff] %v3010
                  %v3012 = vld [vmem:[%s2850 + $0x280] sm:$0xff]
                  %3013 = vst [vmem:[%s2851 + $0x500] sm:$0xff] %v3012
                  %v3014 = vld [vmem:[%s2850 + $0x288] sm:$0xff]
                  %3015 = vst [vmem:[%s2851 + $0x508] sm:$0xff] %v3014
                  %v3016 = vld [vmem:[%s2850 + $0x290] sm:$0xff]
                  %3017 = vst [vmem:[%s2851 + $0x510] sm:$0xff] %v3016
                  %v3018 = vld [vmem:[%s2850 + $0x298] sm:$0xff]
                  %3019 = vst [vmem:[%s2851 + $0x518] sm:$0xff] %v3018
                  %v3020 = vld [vmem:[%s2850 + $0x2a0] sm:$0xff]
                  %3021 = vst [vmem:[%s2851 + $0x520] sm:$0xff] %v3020
                  %v3022 = vld [vmem:[%s2850 + $0x2a8] sm:$0xff]
                  %3023 = vst [vmem:[%s2851 + $0x528] sm:$0xff] %v3022
                  %v3024 = vld [vmem:[%s2850 + $0x2b0] sm:$0xff]
                  %3025 = vst [vmem:[%s2851 + $0x530] sm:$0xff] %v3024
                  %v3026 = vld [vmem:[%s2850 + $0x2b8] sm:$0xff]
                  %3027 = vst [vmem:[%s2851 + $0x538] sm:$0xff] %v3026
                  %v3028 = vld [vmem:[%s2850 + $0x2c0] sm:$0xff]
                  %3029 = vst [vmem:[%s2851 + $0x540] sm:$0xff] %v3028
                  %v3030 = vld [vmem:[%s2850 + $0x2c8] sm:$0xff]
                  %3031 = vst [vmem:[%s2851 + $0x548] sm:$0xff] %v3030
                  %v3032 = vld [vmem:[%s2850 + $0x2d0] sm:$0xff]
                  %3033 = vst [vmem:[%s2851 + $0x550] sm:$0xff] %v3032
                  %v3034 = vld [vmem:[%s2850 + $0x2d8] sm:$0xff]
                  %3035 = vst [vmem:[%s2851 + $0x558] sm:$0xff] %v3034
                  %v3036 = vld [vmem:[%s2850 + $0x2e0] sm:$0xff]
                  %3037 = vst [vmem:[%s2851 + $0x560] sm:$0xff] %v3036
                  %v3038 = vld [vmem:[%s2850 + $0x2e8] sm:$0xff]
                  %3039 = vst [vmem:[%s2851 + $0x568] sm:$0xff] %v3038
                  %v3040 = vld [vmem:[%s2850 + $0x2f0] sm:$0xff]
                  %3041 = vst [vmem:[%s2851 + $0x570] sm:$0xff] %v3040
                  %v3042 = vld [vmem:[%s2850 + $0x2f8] sm:$0xff]
                  %3043 = vst [vmem:[%s2851 + $0x578] sm:$0xff] %v3042
                  %v3044 = vld [vmem:[%s2850 + $0x300] sm:$0xff]
                  %3045 = vst [vmem:[%s2851 + $0x600] sm:$0xff] %v3044
                  %v3046 = vld [vmem:[%s2850 + $0x308] sm:$0xff]
                  %3047 = vst [vmem:[%s2851 + $0x608] sm:$0xff] %v3046
                  %v3048 = vld [vmem:[%s2850 + $0x310] sm:$0xff]
                  %3049 = vst [vmem:[%s2851 + $0x610] sm:$0xff] %v3048
                  %v3050 = vld [vmem:[%s2850 + $0x318] sm:$0xff]
                  %3051 = vst [vmem:[%s2851 + $0x618] sm:$0xff] %v3050
                  %v3052 = vld [vmem:[%s2850 + $0x320] sm:$0xff]
                  %3053 = vst [vmem:[%s2851 + $0x620] sm:$0xff] %v3052
                  %v3054 = vld [vmem:[%s2850 + $0x328] sm:$0xff]
                  %3055 = vst [vmem:[%s2851 + $0x628] sm:$0xff] %v3054
                  %v3056 = vld [vmem:[%s2850 + $0x330] sm:$0xff]
                  %3057 = vst [vmem:[%s2851 + $0x630] sm:$0xff] %v3056
                  %v3058 = vld [vmem:[%s2850 + $0x338] sm:$0xff]
                  %3059 = vst [vmem:[%s2851 + $0x638] sm:$0xff] %v3058
                  %v3060 = vld [vmem:[%s2850 + $0x340] sm:$0xff]
                  %3061 = vst [vmem:[%s2851 + $0x640] sm:$0xff] %v3060
                  %v3062 = vld [vmem:[%s2850 + $0x348] sm:$0xff]
                  %3063 = vst [vmem:[%s2851 + $0x648] sm:$0xff] %v3062
                  %v3064 = vld [vmem:[%s2850 + $0x350] sm:$0xff]
                  %3065 = vst [vmem:[%s2851 + $0x650] sm:$0xff] %v3064
                  %v3066 = vld [vmem:[%s2850 + $0x358] sm:$0xff]
                  %3067 = vst [vmem:[%s2851 + $0x658] sm:$0xff] %v3066
                  %v3068 = vld [vmem:[%s2850 + $0x360] sm:$0xff]
                  %3069 = vst [vmem:[%s2851 + $0x660] sm:$0xff] %v3068
                  %v3070 = vld [vmem:[%s2850 + $0x368] sm:$0xff]
                  %3071 = vst [vmem:[%s2851 + $0x668] sm:$0xff] %v3070
                  %v3072 = vld [vmem:[%s2850 + $0x370] sm:$0xff]
                  %3073 = vst [vmem:[%s2851 + $0x670] sm:$0xff] %v3072
                  %v3074 = vld [vmem:[%s2850 + $0x378] sm:$0xff]
                  %3075 = vst [vmem:[%s2851 + $0x678] sm:$0xff] %v3074
                  %v3076 = vld [vmem:[%s2850 + $0x380] sm:$0xff]
                  %3077 = vst [vmem:[%s2851 + $0x700] sm:$0xff] %v3076
                  %v3078 = vld [vmem:[%s2850 + $0x388] sm:$0xff]
                  %3079 = vst [vmem:[%s2851 + $0x708] sm:$0xff] %v3078
                  %v3080 = vld [vmem:[%s2850 + $0x390] sm:$0xff]
                  %3081 = vst [vmem:[%s2851 + $0x710] sm:$0xff] %v3080
                  %v3082 = vld [vmem:[%s2850 + $0x398] sm:$0xff]
                  %3083 = vst [vmem:[%s2851 + $0x718] sm:$0xff] %v3082
                  %v3084 = vld [vmem:[%s2850 + $0x3a0] sm:$0xff]
                  %3085 = vst [vmem:[%s2851 + $0x720] sm:$0xff] %v3084
                  %v3086 = vld [vmem:[%s2850 + $0x3a8] sm:$0xff]
                  %3087 = vst [vmem:[%s2851 + $0x728] sm:$0xff] %v3086
                  %v3088 = vld [vmem:[%s2850 + $0x3b0] sm:$0xff]
                  %3089 = vst [vmem:[%s2851 + $0x730] sm:$0xff] %v3088
                  %v3090 = vld [vmem:[%s2850 + $0x3b8] sm:$0xff]
                  %3091 = vst [vmem:[%s2851 + $0x738] sm:$0xff] %v3090
                  %v3092 = vld [vmem:[%s2850 + $0x3c0] sm:$0xff]
                  %3093 = vst [vmem:[%s2851 + $0x740] sm:$0xff] %v3092
                  %v3094 = vld [vmem:[%s2850 + $0x3c8] sm:$0xff]
                  %3095 = vst [vmem:[%s2851 + $0x748] sm:$0xff] %v3094
                  %v3096 = vld [vmem:[%s2850 + $0x3d0] sm:$0xff]
                  %3097 = vst [vmem:[%s2851 + $0x750] sm:$0xff] %v3096
                  %v3098 = vld [vmem:[%s2850 + $0x3d8] sm:$0xff]
                  %3099 = vst [vmem:[%s2851 + $0x758] sm:$0xff] %v3098
                  %v3100 = vld [vmem:[%s2850 + $0x3e0] sm:$0xff]
                  %3101 = vst [vmem:[%s2851 + $0x760] sm:$0xff] %v3100
                  %v3102 = vld [vmem:[%s2850 + $0x3e8] sm:$0xff]
                  %3103 = vst [vmem:[%s2851 + $0x768] sm:$0xff] %v3102
                  %v3104 = vld [vmem:[%s2850 + $0x3f0] sm:$0xff]
                  %3105 = vst [vmem:[%s2851 + $0x770] sm:$0xff] %v3104
                  %v3106 = vld [vmem:[%s2850 + $0x3f8] sm:$0xff]
                  %3107 = vst [vmem:[%s2851 + $0x778] sm:$0xff] %v3106
                $region96: #{tpu_custom_call.1} parent=90 // loop_footer
                  %s2849 = sadd.s32 1, %s2845
                $region97: #{tpu_custom_call.1} parent=90 // loop_footer_branch
                  %2844 = sbr.rel target = $region93
                $region98: #{tpu_custom_call.1} parent=90 // loop_exit
                  _
              $region91: #{tpu_custom_call.1} parent=75 // pred_fallthru
                _
              // Predicated region
              $region99: #{tpu_custom_call.1} parent=75 // pred_check
                _
              $region100: #{tpu_custom_call.1} parent=75 // pred_check_branch
                %3109 = sbr.rel target = $region102
              $region101: #{tpu_custom_call.1} parent=75 // pred_region
                _
              $region102: #{tpu_custom_call.1} parent=75 // pred_fallthru
                _
            $region76: #{tpu_custom_call.1} parent=71 // pred_fallthru
              _
            // Predicated region
            $region77: #{tpu_custom_call.1} parent=71 // pred_check
              _
            $region78: #{tpu_custom_call.1} parent=71 // pred_check_branch
              %2575 = sbr.rel target = $region80
            $region79: #{tpu_custom_call.1} parent=71 // pred_region
              %s2577 = ssub.s32 256, 1
              loop: start=0, step=1, limit=1
              $region81: #{tpu_custom_call.1} parent=79 // loop_pre_header
                _
              $region82: #{tpu_custom_call.1} parent=79 // loop_header
                %s2579 = sphi 0, %s2583
                %p2580 = scmp.ge.s32.totalorder %s2579, 1
                %s2584 = sphi %s2548, %s2548
                %s2585 = sphi %s2569, %s2569
              $region83: #{tpu_custom_call.1} parent=79 // loop_header_branch
                %2582 = sbr.rel (%p2580) target = $region87
              $region84: #{tpu_custom_call.1} parent=79 // loop_body
                %v2586 = vld [vmem:[%s2584] sm:%s2577]
                %2587 = vst [vmem:[%s2585] sm:%s2577] %v2586
                %v2588 = vld [vmem:[%s2584 + $0x8] sm:%s2577]
                %2589 = vst [vmem:[%s2585 + $0x8] sm:%s2577] %v2588
                %v2590 = vld [vmem:[%s2584 + $0x10] sm:%s2577]
                %2591 = vst [vmem:[%s2585 + $0x10] sm:%s2577] %v2590
                %v2592 = vld [vmem:[%s2584 + $0x18] sm:%s2577]
                %2593 = vst [vmem:[%s2585 + $0x18] sm:%s2577] %v2592
                %v2594 = vld [vmem:[%s2584 + $0x20] sm:%s2577]
                %2595 = vst [vmem:[%s2585 + $0x20] sm:%s2577] %v2594
                %v2596 = vld [vmem:[%s2584 + $0x28] sm:%s2577]
                %2597 = vst [vmem:[%s2585 + $0x28] sm:%s2577] %v2596
                %v2598 = vld [vmem:[%s2584 + $0x30] sm:%s2577]
                %2599 = vst [vmem:[%s2585 + $0x30] sm:%s2577] %v2598
                %v2600 = vld [vmem:[%s2584 + $0x38] sm:%s2577]
                %2601 = vst [vmem:[%s2585 + $0x38] sm:%s2577] %v2600
                %v2602 = vld [vmem:[%s2584 + $0x40] sm:%s2577]
                %2603 = vst [vmem:[%s2585 + $0x40] sm:%s2577] %v2602
                %v2604 = vld [vmem:[%s2584 + $0x48] sm:%s2577]
                %2605 = vst [vmem:[%s2585 + $0x48] sm:%s2577] %v2604
                %v2606 = vld [vmem:[%s2584 + $0x50] sm:%s2577]
                %2607 = vst [vmem:[%s2585 + $0x50] sm:%s2577] %v2606
                %v2608 = vld [vmem:[%s2584 + $0x58] sm:%s2577]
                %2609 = vst [vmem:[%s2585 + $0x58] sm:%s2577] %v2608
                %v2610 = vld [vmem:[%s2584 + $0x60] sm:%s2577]
                %2611 = vst [vmem:[%s2585 + $0x60] sm:%s2577] %v2610
                %v2612 = vld [vmem:[%s2584 + $0x68] sm:%s2577]
                %2613 = vst [vmem:[%s2585 + $0x68] sm:%s2577] %v2612
                %v2614 = vld [vmem:[%s2584 + $0x70] sm:%s2577]
                %2615 = vst [vmem:[%s2585 + $0x70] sm:%s2577] %v2614
                %v2616 = vld [vmem:[%s2584 + $0x78] sm:%s2577]
                %2617 = vst [vmem:[%s2585 + $0x78] sm:%s2577] %v2616
                %v2618 = vld [vmem:[%s2584 + $0x80] sm:%s2577]
                %2619 = vst [vmem:[%s2585 + $0x100] sm:%s2577] %v2618
                %v2620 = vld [vmem:[%s2584 + $0x88] sm:%s2577]
                %2621 = vst [vmem:[%s2585 + $0x108] sm:%s2577] %v2620
                %v2622 = vld [vmem:[%s2584 + $0x90] sm:%s2577]
                %2623 = vst [vmem:[%s2585 + $0x110] sm:%s2577] %v2622
                %v2624 = vld [vmem:[%s2584 + $0x98] sm:%s2577]
                %2625 = vst [vmem:[%s2585 + $0x118] sm:%s2577] %v2624
                %v2626 = vld [vmem:[%s2584 + $0xa0] sm:%s2577]
                %2627 = vst [vmem:[%s2585 + $0x120] sm:%s2577] %v2626
                %v2628 = vld [vmem:[%s2584 + $0xa8] sm:%s2577]
                %2629 = vst [vmem:[%s2585 + $0x128] sm:%s2577] %v2628
                %v2630 = vld [vmem:[%s2584 + $0xb0] sm:%s2577]
                %2631 = vst [vmem:[%s2585 + $0x130] sm:%s2577] %v2630
                %v2632 = vld [vmem:[%s2584 + $0xb8] sm:%s2577]
                %2633 = vst [vmem:[%s2585 + $0x138] sm:%s2577] %v2632
                %v2634 = vld [vmem:[%s2584 + $0xc0] sm:%s2577]
                %2635 = vst [vmem:[%s2585 + $0x140] sm:%s2577] %v2634
                %v2636 = vld [vmem:[%s2584 + $0xc8] sm:%s2577]
                %2637 = vst [vmem:[%s2585 + $0x148] sm:%s2577] %v2636
                %v2638 = vld [vmem:[%s2584 + $0xd0] sm:%s2577]
                %2639 = vst [vmem:[%s2585 + $0x150] sm:%s2577] %v2638
                %v2640 = vld [vmem:[%s2584 + $0xd8] sm:%s2577]
                %2641 = vst [vmem:[%s2585 + $0x158] sm:%s2577] %v2640
                %v2642 = vld [vmem:[%s2584 + $0xe0] sm:%s2577]
                %2643 = vst [vmem:[%s2585 + $0x160] sm:%s2577] %v2642
                %v2644 = vld [vmem:[%s2584 + $0xe8] sm:%s2577]
                %2645 = vst [vmem:[%s2585 + $0x168] sm:%s2577] %v2644
                %v2646 = vld [vmem:[%s2584 + $0xf0] sm:%s2577]
                %2647 = vst [vmem:[%s2585 + $0x170] sm:%s2577] %v2646
                %v2648 = vld [vmem:[%s2584 + $0xf8] sm:%s2577]
                %2649 = vst [vmem:[%s2585 + $0x178] sm:%s2577] %v2648
                %v2650 = vld [vmem:[%s2584 + $0x100] sm:%s2577]
                %2651 = vst [vmem:[%s2585 + $0x200] sm:%s2577] %v2650
                %v2652 = vld [vmem:[%s2584 + $0x108] sm:%s2577]
                %2653 = vst [vmem:[%s2585 + $0x208] sm:%s2577] %v2652
                %v2654 = vld [vmem:[%s2584 + $0x110] sm:%s2577]
                %2655 = vst [vmem:[%s2585 + $0x210] sm:%s2577] %v2654
                %v2656 = vld [vmem:[%s2584 + $0x118] sm:%s2577]
                %2657 = vst [vmem:[%s2585 + $0x218] sm:%s2577] %v2656
                %v2658 = vld [vmem:[%s2584 + $0x120] sm:%s2577]
                %2659 = vst [vmem:[%s2585 + $0x220] sm:%s2577] %v2658
                %v2660 = vld [vmem:[%s2584 + $0x128] sm:%s2577]
                %2661 = vst [vmem:[%s2585 + $0x228] sm:%s2577] %v2660
                %v2662 = vld [vmem:[%s2584 + $0x130] sm:%s2577]
                %2663 = vst [vmem:[%s2585 + $0x230] sm:%s2577] %v2662
                %v2664 = vld [vmem:[%s2584 + $0x138] sm:%s2577]
                %2665 = vst [vmem:[%s2585 + $0x238] sm:%s2577] %v2664
                %v2666 = vld [vmem:[%s2584 + $0x140] sm:%s2577]
                %2667 = vst [vmem:[%s2585 + $0x240] sm:%s2577] %v2666
                %v2668 = vld [vmem:[%s2584 + $0x148] sm:%s2577]
                %2669 = vst [vmem:[%s2585 + $0x248] sm:%s2577] %v2668
                %v2670 = vld [vmem:[%s2584 + $0x150] sm:%s2577]
                %2671 = vst [vmem:[%s2585 + $0x250] sm:%s2577] %v2670
                %v2672 = vld [vmem:[%s2584 + $0x158] sm:%s2577]
                %2673 = vst [vmem:[%s2585 + $0x258] sm:%s2577] %v2672
                %v2674 = vld [vmem:[%s2584 + $0x160] sm:%s2577]
                %2675 = vst [vmem:[%s2585 + $0x260] sm:%s2577] %v2674
                %v2676 = vld [vmem:[%s2584 + $0x168] sm:%s2577]
                %2677 = vst [vmem:[%s2585 + $0x268] sm:%s2577] %v2676
                %v2678 = vld [vmem:[%s2584 + $0x170] sm:%s2577]
                %2679 = vst [vmem:[%s2585 + $0x270] sm:%s2577] %v2678
                %v2680 = vld [vmem:[%s2584 + $0x178] sm:%s2577]
                %2681 = vst [vmem:[%s2585 + $0x278] sm:%s2577] %v2680
                %v2682 = vld [vmem:[%s2584 + $0x180] sm:%s2577]
                %2683 = vst [vmem:[%s2585 + $0x300] sm:%s2577] %v2682
                %v2684 = vld [vmem:[%s2584 + $0x188] sm:%s2577]
                %2685 = vst [vmem:[%s2585 + $0x308] sm:%s2577] %v2684
                %v2686 = vld [vmem:[%s2584 + $0x190] sm:%s2577]
                %2687 = vst [vmem:[%s2585 + $0x310] sm:%s2577] %v2686
                %v2688 = vld [vmem:[%s2584 + $0x198] sm:%s2577]
                %2689 = vst [vmem:[%s2585 + $0x318] sm:%s2577] %v2688
                %v2690 = vld [vmem:[%s2584 + $0x1a0] sm:%s2577]
                %2691 = vst [vmem:[%s2585 + $0x320] sm:%s2577] %v2690
                %v2692 = vld [vmem:[%s2584 + $0x1a8] sm:%s2577]
                %2693 = vst [vmem:[%s2585 + $0x328] sm:%s2577] %v2692
                %v2694 = vld [vmem:[%s2584 + $0x1b0] sm:%s2577]
                %2695 = vst [vmem:[%s2585 + $0x330] sm:%s2577] %v2694
                %v2696 = vld [vmem:[%s2584 + $0x1b8] sm:%s2577]
                %2697 = vst [vmem:[%s2585 + $0x338] sm:%s2577] %v2696
                %v2698 = vld [vmem:[%s2584 + $0x1c0] sm:%s2577]
                %2699 = vst [vmem:[%s2585 + $0x340] sm:%s2577] %v2698
                %v2700 = vld [vmem:[%s2584 + $0x1c8] sm:%s2577]
                %2701 = vst [vmem:[%s2585 + $0x348] sm:%s2577] %v2700
                %v2702 = vld [vmem:[%s2584 + $0x1d0] sm:%s2577]
                %2703 = vst [vmem:[%s2585 + $0x350] sm:%s2577] %v2702
                %v2704 = vld [vmem:[%s2584 + $0x1d8] sm:%s2577]
                %2705 = vst [vmem:[%s2585 + $0x358] sm:%s2577] %v2704
                %v2706 = vld [vmem:[%s2584 + $0x1e0] sm:%s2577]
                %2707 = vst [vmem:[%s2585 + $0x360] sm:%s2577] %v2706
                %v2708 = vld [vmem:[%s2584 + $0x1e8] sm:%s2577]
                %2709 = vst [vmem:[%s2585 + $0x368] sm:%s2577] %v2708
                %v2710 = vld [vmem:[%s2584 + $0x1f0] sm:%s2577]
                %2711 = vst [vmem:[%s2585 + $0x370] sm:%s2577] %v2710
                %v2712 = vld [vmem:[%s2584 + $0x1f8] sm:%s2577]
                %2713 = vst [vmem:[%s2585 + $0x378] sm:%s2577] %v2712
                %v2714 = vld [vmem:[%s2584 + $0x200] sm:%s2577]
                %2715 = vst [vmem:[%s2585 + $0x400] sm:%s2577] %v2714
                %v2716 = vld [vmem:[%s2584 + $0x208] sm:%s2577]
                %2717 = vst [vmem:[%s2585 + $0x408] sm:%s2577] %v2716
                %v2718 = vld [vmem:[%s2584 + $0x210] sm:%s2577]
                %2719 = vst [vmem:[%s2585 + $0x410] sm:%s2577] %v2718
                %v2720 = vld [vmem:[%s2584 + $0x218] sm:%s2577]
                %2721 = vst [vmem:[%s2585 + $0x418] sm:%s2577] %v2720
                %v2722 = vld [vmem:[%s2584 + $0x220] sm:%s2577]
                %2723 = vst [vmem:[%s2585 + $0x420] sm:%s2577] %v2722
                %v2724 = vld [vmem:[%s2584 + $0x228] sm:%s2577]
                %2725 = vst [vmem:[%s2585 + $0x428] sm:%s2577] %v2724
                %v2726 = vld [vmem:[%s2584 + $0x230] sm:%s2577]
                %2727 = vst [vmem:[%s2585 + $0x430] sm:%s2577] %v2726
                %v2728 = vld [vmem:[%s2584 + $0x238] sm:%s2577]
                %2729 = vst [vmem:[%s2585 + $0x438] sm:%s2577] %v2728
                %v2730 = vld [vmem:[%s2584 + $0x240] sm:%s2577]
                %2731 = vst [vmem:[%s2585 + $0x440] sm:%s2577] %v2730
                %v2732 = vld [vmem:[%s2584 + $0x248] sm:%s2577]
                %2733 = vst [vmem:[%s2585 + $0x448] sm:%s2577] %v2732
                %v2734 = vld [vmem:[%s2584 + $0x250] sm:%s2577]
                %2735 = vst [vmem:[%s2585 + $0x450] sm:%s2577] %v2734
                %v2736 = vld [vmem:[%s2584 + $0x258] sm:%s2577]
                %2737 = vst [vmem:[%s2585 + $0x458] sm:%s2577] %v2736
                %v2738 = vld [vmem:[%s2584 + $0x260] sm:%s2577]
                %2739 = vst [vmem:[%s2585 + $0x460] sm:%s2577] %v2738
                %v2740 = vld [vmem:[%s2584 + $0x268] sm:%s2577]
                %2741 = vst [vmem:[%s2585 + $0x468] sm:%s2577] %v2740
                %v2742 = vld [vmem:[%s2584 + $0x270] sm:%s2577]
                %2743 = vst [vmem:[%s2585 + $0x470] sm:%s2577] %v2742
                %v2744 = vld [vmem:[%s2584 + $0x278] sm:%s2577]
                %2745 = vst [vmem:[%s2585 + $0x478] sm:%s2577] %v2744
                %v2746 = vld [vmem:[%s2584 + $0x280] sm:%s2577]
                %2747 = vst [vmem:[%s2585 + $0x500] sm:%s2577] %v2746
                %v2748 = vld [vmem:[%s2584 + $0x288] sm:%s2577]
                %2749 = vst [vmem:[%s2585 + $0x508] sm:%s2577] %v2748
                %v2750 = vld [vmem:[%s2584 + $0x290] sm:%s2577]
                %2751 = vst [vmem:[%s2585 + $0x510] sm:%s2577] %v2750
                %v2752 = vld [vmem:[%s2584 + $0x298] sm:%s2577]
                %2753 = vst [vmem:[%s2585 + $0x518] sm:%s2577] %v2752
                %v2754 = vld [vmem:[%s2584 + $0x2a0] sm:%s2577]
                %2755 = vst [vmem:[%s2585 + $0x520] sm:%s2577] %v2754
                %v2756 = vld [vmem:[%s2584 + $0x2a8] sm:%s2577]
                %2757 = vst [vmem:[%s2585 + $0x528] sm:%s2577] %v2756
                %v2758 = vld [vmem:[%s2584 + $0x2b0] sm:%s2577]
                %2759 = vst [vmem:[%s2585 + $0x530] sm:%s2577] %v2758
                %v2760 = vld [vmem:[%s2584 + $0x2b8] sm:%s2577]
                %2761 = vst [vmem:[%s2585 + $0x538] sm:%s2577] %v2760
                %v2762 = vld [vmem:[%s2584 + $0x2c0] sm:%s2577]
                %2763 = vst [vmem:[%s2585 + $0x540] sm:%s2577] %v2762
                %v2764 = vld [vmem:[%s2584 + $0x2c8] sm:%s2577]
                %2765 = vst [vmem:[%s2585 + $0x548] sm:%s2577] %v2764
                %v2766 = vld [vmem:[%s2584 + $0x2d0] sm:%s2577]
                %2767 = vst [vmem:[%s2585 + $0x550] sm:%s2577] %v2766
                %v2768 = vld [vmem:[%s2584 + $0x2d8] sm:%s2577]
                %2769 = vst [vmem:[%s2585 + $0x558] sm:%s2577] %v2768
                %v2770 = vld [vmem:[%s2584 + $0x2e0] sm:%s2577]
                %2771 = vst [vmem:[%s2585 + $0x560] sm:%s2577] %v2770
                %v2772 = vld [vmem:[%s2584 + $0x2e8] sm:%s2577]
                %2773 = vst [vmem:[%s2585 + $0x568] sm:%s2577] %v2772
                %v2774 = vld [vmem:[%s2584 + $0x2f0] sm:%s2577]
                %2775 = vst [vmem:[%s2585 + $0x570] sm:%s2577] %v2774
                %v2776 = vld [vmem:[%s2584 + $0x2f8] sm:%s2577]
                %2777 = vst [vmem:[%s2585 + $0x578] sm:%s2577] %v2776
                %v2778 = vld [vmem:[%s2584 + $0x300] sm:%s2577]
                %2779 = vst [vmem:[%s2585 + $0x600] sm:%s2577] %v2778
                %v2780 = vld [vmem:[%s2584 + $0x308] sm:%s2577]
                %2781 = vst [vmem:[%s2585 + $0x608] sm:%s2577] %v2780
                %v2782 = vld [vmem:[%s2584 + $0x310] sm:%s2577]
                %2783 = vst [vmem:[%s2585 + $0x610] sm:%s2577] %v2782
                %v2784 = vld [vmem:[%s2584 + $0x318] sm:%s2577]
                %2785 = vst [vmem:[%s2585 + $0x618] sm:%s2577] %v2784
                %v2786 = vld [vmem:[%s2584 + $0x320] sm:%s2577]
                %2787 = vst [vmem:[%s2585 + $0x620] sm:%s2577] %v2786
                %v2788 = vld [vmem:[%s2584 + $0x328] sm:%s2577]
                %2789 = vst [vmem:[%s2585 + $0x628] sm:%s2577] %v2788
                %v2790 = vld [vmem:[%s2584 + $0x330] sm:%s2577]
                %2791 = vst [vmem:[%s2585 + $0x630] sm:%s2577] %v2790
                %v2792 = vld [vmem:[%s2584 + $0x338] sm:%s2577]
                %2793 = vst [vmem:[%s2585 + $0x638] sm:%s2577] %v2792
                %v2794 = vld [vmem:[%s2584 + $0x340] sm:%s2577]
                %2795 = vst [vmem:[%s2585 + $0x640] sm:%s2577] %v2794
                %v2796 = vld [vmem:[%s2584 + $0x348] sm:%s2577]
                %2797 = vst [vmem:[%s2585 + $0x648] sm:%s2577] %v2796
                %v2798 = vld [vmem:[%s2584 + $0x350] sm:%s2577]
                %2799 = vst [vmem:[%s2585 + $0x650] sm:%s2577] %v2798
                %v2800 = vld [vmem:[%s2584 + $0x358] sm:%s2577]
                %2801 = vst [vmem:[%s2585 + $0x658] sm:%s2577] %v2800
                %v2802 = vld [vmem:[%s2584 + $0x360] sm:%s2577]
                %2803 = vst [vmem:[%s2585 + $0x660] sm:%s2577] %v2802
                %v2804 = vld [vmem:[%s2584 + $0x368] sm:%s2577]
                %2805 = vst [vmem:[%s2585 + $0x668] sm:%s2577] %v2804
                %v2806 = vld [vmem:[%s2584 + $0x370] sm:%s2577]
                %2807 = vst [vmem:[%s2585 + $0x670] sm:%s2577] %v2806
                %v2808 = vld [vmem:[%s2584 + $0x378] sm:%s2577]
                %2809 = vst [vmem:[%s2585 + $0x678] sm:%s2577] %v2808
                %v2810 = vld [vmem:[%s2584 + $0x380] sm:%s2577]
                %2811 = vst [vmem:[%s2585 + $0x700] sm:%s2577] %v2810
                %v2812 = vld [vmem:[%s2584 + $0x388] sm:%s2577]
                %2813 = vst [vmem:[%s2585 + $0x708] sm:%s2577] %v2812
                %v2814 = vld [vmem:[%s2584 + $0x390] sm:%s2577]
                %2815 = vst [vmem:[%s2585 + $0x710] sm:%s2577] %v2814
                %v2816 = vld [vmem:[%s2584 + $0x398] sm:%s2577]
                %2817 = vst [vmem:[%s2585 + $0x718] sm:%s2577] %v2816
                %v2818 = vld [vmem:[%s2584 + $0x3a0] sm:%s2577]
                %2819 = vst [vmem:[%s2585 + $0x720] sm:%s2577] %v2818
                %v2820 = vld [vmem:[%s2584 + $0x3a8] sm:%s2577]
                %2821 = vst [vmem:[%s2585 + $0x728] sm:%s2577] %v2820
                %v2822 = vld [vmem:[%s2584 + $0x3b0] sm:%s2577]
                %2823 = vst [vmem:[%s2585 + $0x730] sm:%s2577] %v2822
                %v2824 = vld [vmem:[%s2584 + $0x3b8] sm:%s2577]
                %2825 = vst [vmem:[%s2585 + $0x738] sm:%s2577] %v2824
                %v2826 = vld [vmem:[%s2584 + $0x3c0] sm:%s2577]
                %2827 = vst [vmem:[%s2585 + $0x740] sm:%s2577] %v2826
                %v2828 = vld [vmem:[%s2584 + $0x3c8] sm:%s2577]
                %2829 = vst [vmem:[%s2585 + $0x748] sm:%s2577] %v2828
                %v2830 = vld [vmem:[%s2584 + $0x3d0] sm:%s2577]
                %2831 = vst [vmem:[%s2585 + $0x750] sm:%s2577] %v2830
                %v2832 = vld [vmem:[%s2584 + $0x3d8] sm:%s2577]
                %2833 = vst [vmem:[%s2585 + $0x758] sm:%s2577] %v2832
                %v2834 = vld [vmem:[%s2584 + $0x3e0] sm:%s2577]
                %2835 = vst [vmem:[%s2585 + $0x760] sm:%s2577] %v2834
                %v2836 = vld [vmem:[%s2584 + $0x3e8] sm:%s2577]
                %2837 = vst [vmem:[%s2585 + $0x768] sm:%s2577] %v2836
                %v2838 = vld [vmem:[%s2584 + $0x3f0] sm:%s2577]
                %2839 = vst [vmem:[%s2585 + $0x770] sm:%s2577] %v2838
                %v2840 = vld [vmem:[%s2584 + $0x3f8] sm:%s2577]
                %2841 = vst [vmem:[%s2585 + $0x778] sm:%s2577] %v2840
              $region85: #{tpu_custom_call.1} parent=79 // loop_footer
                %s2583 = sadd.s32 1, %s2579
              $region86: #{tpu_custom_call.1} parent=79 // loop_footer_branch
                %2578 = sbr.rel target = $region82
              $region87: #{tpu_custom_call.1} parent=79 // loop_exit
                _
            $region80: #{tpu_custom_call.1} parent=71 // pred_fallthru
              _
          $region72: #{tpu_custom_call.1} parent=67 // pred_fallthru
            _
          %3110 = vnop
        $region68: #{tpu_custom_call.1} parent=43 // pred_fallthru
          _
        // Predicated region
        $region103: #{tpu_custom_call.1} parent=43 // pred_check
          %p3111 = pneg %p214
        $region104: #{tpu_custom_call.1} parent=43 // pred_check_branch
          %3113 = sbr.rel (%p3111) target = $region106
        $region105: #{tpu_custom_call.1} parent=43 // pred_region
          %3115 = vsyncadd %s2550, 0
          %s3116 = smul.addr %s34, 8
          %s3117 = scalar_lea.hbm %s7, %s3116
          %s3118 = sshll.u32 %s2553, 4
          %s3119 = int_to_ptr.vmem [resolvable:$true] %s3118
          %s3120 = sshll.u32 %s3117, 4
          %s3121 = int_to_ptr.hbm [resolvable:$true] %s3120
          %3126 = dma.vmem_to_hbm [thread:$0]  %s3119, 2048, %s3121, %s2550, 128, 256, 8
        $region106: #{tpu_custom_call.1} parent=43 // pred_fallthru
          _
        // Predicated region
        $region107: #{tpu_custom_call.1} parent=43 // pred_check
          %p3127 = pneg %p240
        $region108: #{tpu_custom_call.1} parent=43 // pred_check_branch
          %3129 = sbr.rel (%p3127) target = $region110
        $region109: #{tpu_custom_call.1} parent=43 // pred_region
          %3131 = vsyncadd %s2555, 0
          %s3132 = smul.addr %s34, 8
          %s3133 = scalar_lea.hbm %s8, %s3132
          %s3134 = sshll.u32 %s2558, 4
          %s3135 = int_to_ptr.vmem [resolvable:$true] %s3134
          %s3136 = sshll.u32 %s3133, 4
          %s3137 = int_to_ptr.hbm [resolvable:$true] %s3136
          %3142 = dma.vmem_to_hbm [thread:$0]  %s3135, 2048, %s3137, %s2555, 128, 256, 8
        $region110: #{tpu_custom_call.1} parent=43 // pred_fallthru
          _
        // Predicated region
        $region111: #{tpu_custom_call.1} parent=43 // pred_check
          %p3143 = pneg %p266
        $region112: #{tpu_custom_call.1} parent=43 // pred_check_branch
          %3145 = sbr.rel (%p3143) target = $region114
        $region113: #{tpu_custom_call.1} parent=43 // pred_region
          %s3146 = smul.u32 16, %s34
          %3148 = vsyncadd %s2560, 0
          %s3149 = smul.addr %s3146, 4
          %s3150 = smul.addr %s3149, 8
          %s3151 = scalar_lea.hbm %s9, %s3150
          %s3152 = sshll.u32 %s2563, 4
          %s3153 = int_to_ptr.vmem [resolvable:$true] %s3152
          %s3154 = sshll.u32 %s3151, 4
          %s3155 = int_to_ptr.hbm [resolvable:$true] %s3154
          %3160 = dma.vmem_to_hbm [thread:$0]  %s3153, 8192, %s3155, %s2560, 512, 512, 32
        $region114: #{tpu_custom_call.1} parent=43 // pred_fallthru
          _
      $region44: #{tpu_custom_call.1} parent=5 // pred_fallthru
        _
      %p3161 = scmp.le.s32.totalorder 2, %s29
      // Predicated region
      $region115: #{tpu_custom_call.1} parent=5 // pred_check
        %p3162 = pneg %p3161
      $region116: #{tpu_custom_call.1} parent=5 // pred_check_branch
        %3164 = sbr.rel (%p3162) target = $region118
      $region117: #{tpu_custom_call.1} parent=5 // pred_region
        %s3165 = ssub.s32 %s29, 2
        // Predicated region
        $region119: #{tpu_custom_call.1} parent=117 // pred_check
          %p3166 = pneg %p194
        $region120: #{tpu_custom_call.1} parent=117 // pred_check_branch
          %3168 = sbr.rel (%p3166) target = $region122
        $region121: #{tpu_custom_call.1} parent=117 // pred_region
          %s3169 = sand.u32 %s179, 1
          %s3170 = sand.u32 %s179, 1
          %s3171 = smul.addr %s3170, 1024
          %s3172 = scalar_lea.vmem [#allocation11], %s3171
        $region122: #{tpu_custom_call.1} parent=117 // pred_fallthru
          _
        // Predicated region
        $region123: #{tpu_custom_call.1} parent=117 // pred_check
          %p3173 = pneg %p220
        $region124: #{tpu_custom_call.1} parent=117 // pred_check_branch
          %3175 = sbr.rel (%p3173) target = $region126
        $region125: #{tpu_custom_call.1} parent=117 // pred_region
          %s3176 = sand.u32 %s205, 1
          %s3177 = scalar_lea.sflag [#allocation4], %s3176
          %s3178 = sand.u32 %s205, 1
          %s3179 = smul.addr %s3178, 128
          %s3180 = scalar_lea.vmem [#allocation12], %s3179
          %3182 = dma.done %s3177, 2048
        $region126: #{tpu_custom_call.1} parent=117 // pred_fallthru
          _
        // Predicated region
        $region127: #{tpu_custom_call.1} parent=117 // pred_check
          %p3183 = pneg %p246
        $region128: #{tpu_custom_call.1} parent=117 // pred_check_branch
          %3185 = sbr.rel (%p3183) target = $region130
        $region129: #{tpu_custom_call.1} parent=117 // pred_region
          %s3186 = sand.u32 %s35, 1
          %s3187 = scalar_lea.sflag [#allocation14], %s3186
          %s3188 = sand.u32 %s231, 1
          %s3189 = smul.addr %s3188, 128
          %s3190 = scalar_lea.vmem [#allocation13], %s3189
          %3192 = dma.done %s3187, 2048
        $region130: #{tpu_custom_call.1} parent=117 // pred_fallthru
          _
        // Predicated region
        $region131: #{tpu_custom_call.1} parent=117 // pred_check
          %p3193 = pneg %p272
        $region132: #{tpu_custom_call.1} parent=117 // pred_check_branch
          %3195 = sbr.rel (%p3193) target = $region134
        $region133: #{tpu_custom_call.1} parent=117 // pred_region
          %s3196 = sand.u32 %s35, 1
          %s3197 = scalar_lea.sflag [#allocation14], %s3196
          %s3198 = sand.u32 %s257, 1
          %s3199 = smul.addr %s3198, 512
          %s3200 = scalar_lea.vmem [#allocation15], %s3199
          %3202 = dma.done %s3197, 8192
        $region134: #{tpu_custom_call.1} parent=117 // pred_fallthru
          _
      $region118: #{tpu_custom_call.1} parent=5 // pred_fallthru
        _
    $region6: #{tpu_custom_call.1} parent=1 // loop_footer
      %s33 = sadd.s32 1, %s29
    $region7: #{tpu_custom_call.1} parent=1 // loop_footer_branch
      %28 = sbr.rel target = $region3
    $region8: #{tpu_custom_call.1} parent=1 // loop_exit
      _
    %3203 = vsyncpa [#allocation3], 1
    %s3204 = scalar_lea.sflag [#allocation3], 1
    %3205 = vsyncpa %s3204, 1
    %3206 = vsyncpa [#allocation6], 1
    %s3207 = scalar_lea.sflag [#allocation6], 1
    %3208 = vsyncpa %s3207, 1
    %3209 = vsyncpa [#allocation9], 1
    %3210 = vsyncpa [#allocation4], 1
    %s3211 = scalar_lea.sflag [#allocation4], 1
    %3212 = vsyncpa %s3211, 1
    %3213 = vsyncpa [#allocation14], 1
    %s3214 = scalar_lea.sflag [#allocation14], 1
    %3215 = vsyncpa %s3214, 1

</llo_original>
